<compile_context>
chip_gen: v7x
topology: tpu7x:2x2x1
jax: 0.10.0
libtpu: 0.0.40
codegen_flags: <defaults>
</compile_context>

<pallas_src>
import functools

import jax
import jax.numpy as jnp
from jax import lax
from jax.experimental import pallas as pl
from jax.experimental.pallas import tpu as pltpu


def _fused_conv_kernel(xq_ref, w_ref, b_ref, o_ref, *, kh, kw, oh, ow, other):
    # xq_ref: (2, 2, HP//2, WP//2, C)  parity-split, zero-padded NHWC input
    # w_ref:  (KH, KW, OutC, C)        per-tap weights, lane-dense over C
    # b_ref:  (OutC, 1)                bias
    # o_ref:  (OutC, OH*OW)            lane-dense output (already NCHW order)
    out_c = o_ref.shape[0]
    c = xq_ref.shape[-1]
    acc = jnp.zeros((out_c, oh * ow), jnp.float32)
    for dh in range(kh):
        ph, rh = dh % 2, dh // 2
        for dw in range(kw):
            pw, rw = dw % 2, dw // 2
            # xq[ph, pw, rh+i, rw+j, :] == x_padded[2*i + dh, 2*j + dw, :]
            slab = xq_ref[ph, pw, pl.ds(rh, oh), pl.ds(rw, ow), :]   # (OH, OW, C)
            slab = slab.reshape(oh * ow, c)                          # (M, C)
            w_tap = w_ref[dh, dw]                                    # (OutC, C)
            # (OutC, C) @ (M, C)^T -> (OutC, M): contraction over channels.
            acc = acc + lax.dot_general(
                w_tap, slab,
                dimension_numbers=(((1,), (1,)), ((), ())),
                preferred_element_type=jnp.float32,
            )
    o_ref[...] = (acc + b_ref[...] + other).astype(o_ref.dtype)


@functools.partial(jax.jit, static_argnames=("stride", "pad", "other"))
def conv2d_plus(x_nchw, weight, bias, *, stride=2, pad=2, other=3.0):
    """x_nchw: (1, C, H, W) f32; weight: (OutC, InC, KH, KW); bias: (OutC,)."""
    n, c, h, w = x_nchw.shape
    out_c, in_c, kh, kw = weight.shape
    assert n == 1 and c == in_c and stride == 2
    oh = (h + 2 * pad - kh) // stride + 1
    ow = (w + 2 * pad - kw) // stride + 1

    # ---- light glue (no im2col): NCHW -> HWC, pad, parity-split over stride --
    x = jnp.transpose(x_nchw[0], (1, 2, 0))                 # (H, W, C)
    xp = jnp.pad(x, ((pad, pad), (pad, pad), (0, 0)))       # (HP, WP, C)
    hp, wp = xp.shape[0], xp.shape[1]
    assert hp % 2 == 0 and wp % 2 == 0
    # xq[ph, pw, i, j, :] == xp[2*i + ph, 2*j + pw, :]
    xq = xp.reshape(hp // 2, 2, wp // 2, 2, c)
    xq = jnp.transpose(xq, (1, 3, 0, 2, 4))                 # (2, 2, HP/2, WP/2, C)

    # weight (OutC, InC, KH, KW) -> (KH, KW, OutC, InC): lane-dense over InC.
    w_t = jnp.transpose(weight, (2, 3, 0, 1))
    b_mat = bias.reshape(out_c, 1)

    kernel = functools.partial(
        _fused_conv_kernel, kh=kh, kw=kw, oh=oh, ow=ow, other=float(other)
    )
    out_t = pl.pallas_call(
        kernel,
        out_shape=jax.ShapeDtypeStruct((out_c, oh * ow), jnp.float32),
        grid=(1,),
        in_specs=[
            pl.BlockSpec(xq.shape, lambda i: (0, 0, 0, 0, 0)),
            pl.BlockSpec(w_t.shape, lambda i: (0, 0, 0, 0)),
            pl.BlockSpec(b_mat.shape, lambda i: (0, 0)),
        ],
        out_specs=pl.BlockSpec((out_c, oh * ow), lambda i: (0, 0)),
        compiler_params=pltpu.CompilerParams(
            dimension_semantics=("arbitrary",)
        ),
    )(xq, w_t, b_mat)

    # (OutC, OH*OW) is already channel-major: NCHW via pure reshape.
    return out_t.reshape(1, out_c, oh, ow)


def reference(x_nchw, weight, bias, *, stride=2, pad=2, other=3.0):
    y = lax.conv_general_dilated(
        x_nchw, weight,
        window_strides=(stride, stride),
        padding=((pad, pad), (pad, pad)),
        dimension_numbers=("NCHW", "OIHW", "NCHW"),
    )
    return y + bias[None, :, None, None] + other


if __name__ == "__main__":
    key = jax.random.PRNGKey(0)
    kx, kw_key, kb_key = jax.random.split(key, 3)

    # Shapes implied by the module's forward: x1 = (1, 128, 32, 32)
    x1 = jax.random.normal(kx, (1, 128, 32, 32), dtype=jnp.float32)

    # Deterministic Conv2d(128, 32, 5) parameters (synthetic PyTorch-like init).
    fan_in = 128 * 5 * 5
    bound = 1.0 / (fan_in ** 0.5)
    weight = jax.random.uniform(kw_key, (32, 128, 5, 5), jnp.float32, -bound, bound)
    bias = jax.random.uniform(kb_key, (32,), jnp.float32, -bound, bound)

    # `padding1` in the PyTorch forward is created but never used -> ignored.
    out = conv2d_plus(x1, weight, bias, other=3.0)
    out = jax.block_until_ready(out)

    ref = jax.block_until_ready(reference(x1, weight, bias, other=3.0))
    assert out.shape == (1, 32, 16, 16), out.shape
    assert jnp.allclose(out, ref, atol=1e-3, rtol=1e-3), float(
        jnp.max(jnp.abs(out - ref))
    )
    print("KERNEL_OK")
</pallas_src>

<mosaic_0001>
module attributes {stable_mosaic.version = 11 : i64} {
  func.func @_fused_conv_kernel(%arg0: i32, %arg1: memref<2x2x18x18x128xf32, #tpu.memory_space<vmem>>, %arg2: memref<5x5x32x128xf32, #tpu.memory_space<vmem>>, %arg3: memref<32x1xf32, #tpu.memory_space<vmem>>, %arg4: memref<32x256xf32, #tpu.memory_space<vmem>>) attributes {dimension_semantics = [#tpu.dimension_semantics<arbitrary>], iteration_bounds = array<i64: 1>, scalar_prefetch = 0 : i64, scratch_operands = 0 : i64, tpu.core_type = #tpu.core_type<tc>, window_params = [{pipeline_mode = #tpu.pipeline_mode<synchronous>, transform_indices = @transform_0, window_bounds = array<i64: 2, 2, 18, 18, 128>}, {pipeline_mode = #tpu.pipeline_mode<synchronous>, transform_indices = @transform_1, window_bounds = array<i64: 5, 5, 32, 128>}, {pipeline_mode = #tpu.pipeline_mode<synchronous>, transform_indices = @transform_2, window_bounds = array<i64: 32, 1>}, {pipeline_mode = #tpu.pipeline_mode<synchronous>, transform_indices = @transform_3, window_bounds = array<i64: 32, 256>}]} {
    %cst = arith.constant 0.000000e+00 : f32
    %0 = vector.broadcast %cst : f32 to vector<32x256xf32>
    %c0 = arith.constant 0 : index
    %c0_0 = arith.constant 0 : index
    %c0_1 = arith.constant 0 : index
    %c0_2 = arith.constant 0 : index
    %c0_3 = arith.constant 0 : index
    %1 = vector.load %arg1[%c0, %c0_0, %c0_1, %c0_2, %c0_3] : memref<2x2x18x18x128xf32, #tpu.memory_space<vmem>>, vector<1x1x16x16x128xf32>
    %2 = vector.shape_cast %1 : vector<1x1x16x16x128xf32> to vector<16x16x128xf32>
    %3 = vector.shape_cast %2 : vector<16x16x128xf32> to vector<256x128xf32>
    %c0_4 = arith.constant 0 : index
    %c0_5 = arith.constant 0 : index
    %c0_6 = arith.constant 0 : index
    %c0_7 = arith.constant 0 : index
    %4 = vector.load %arg2[%c0_4, %c0_5, %c0_6, %c0_7] : memref<5x5x32x128xf32, #tpu.memory_space<vmem>>, vector<1x1x32x128xf32>
    %5 = vector.shape_cast %4 : vector<1x1x32x128xf32> to vector<32x128xf32>
    %cst_8 = arith.constant dense<0.000000e+00> : vector<32x256xf32>
    %6 = tpu.matmul %5, %3, %cst_8 {dimension_numbers = #tpu.dot_dimension_numbers<[1], [1], [0], [0], [0, 0, 1, 0], [], []>} : vector<32x128xf32>, vector<256x128xf32>, vector<32x256xf32> -> vector<32x256xf32>
    %7 = arith.addf %0, %6 : vector<32x256xf32>
    %c0_9 = arith.constant 0 : index
    %c1 = arith.constant 1 : index
    %c0_10 = arith.constant 0 : index
    %c0_11 = arith.constant 0 : index
    %c0_12 = arith.constant 0 : index
    %8 = vector.load %arg1[%c0_9, %c1, %c0_10, %c0_11, %c0_12] : memref<2x2x18x18x128xf32, #tpu.memory_space<vmem>>, vector<1x1x16x16x128xf32>
    %9 = vector.shape_cast %8 : vector<1x1x16x16x128xf32> to vector<16x16x128xf32>
    %10 = vector.shape_cast %9 : vector<16x16x128xf32> to vector<256x128xf32>
    %c0_13 = arith.constant 0 : index
    %c1_14 = arith.constant 1 : index
    %c0_15 = arith.constant 0 : index
    %c0_16 = arith.constant 0 : index
    %11 = vector.load %arg2[%c0_13, %c1_14, %c0_15, %c0_16] : memref<5x5x32x128xf32, #tpu.memory_space<vmem>>, vector<1x1x32x128xf32>
    %12 = vector.shape_cast %11 : vector<1x1x32x128xf32> to vector<32x128xf32>
    %cst_17 = arith.constant dense<0.000000e+00> : vector<32x256xf32>
    %13 = tpu.matmul %12, %10, %cst_17 {dimension_numbers = #tpu.dot_dimension_numbers<[1], [1], [0], [0], [0, 0, 1, 0], [], []>} : vector<32x128xf32>, vector<256x128xf32>, vector<32x256xf32> -> vector<32x256xf32>
    %14 = arith.addf %7, %13 : vector<32x256xf32>
    %c0_18 = arith.constant 0 : index
    %c0_19 = arith.constant 0 : index
    %c0_20 = arith.constant 0 : index
    %c1_21 = arith.constant 1 : index
    %c0_22 = arith.constant 0 : index
    %15 = vector.load %arg1[%c0_18, %c0_19, %c0_20, %c1_21, %c0_22] : memref<2x2x18x18x128xf32, #tpu.memory_space<vmem>>, vector<1x1x16x16x128xf32>
    %16 = vector.shape_cast %15 : vector<1x1x16x16x128xf32> to vector<16x16x128xf32>
    %17 = vector.shape_cast %16 : vector<16x16x128xf32> to vector<256x128xf32>
    %c0_23 = arith.constant 0 : index
    %c2 = arith.constant 2 : index
    %c0_24 = arith.constant 0 : index
    %c0_25 = arith.constant 0 : index
    %18 = vector.load %arg2[%c0_23, %c2, %c0_24, %c0_25] : memref<5x5x32x128xf32, #tpu.memory_space<vmem>>, vector<1x1x32x128xf32>
    %19 = vector.shape_cast %18 : vector<1x1x32x128xf32> to vector<32x128xf32>
    %cst_26 = arith.constant dense<0.000000e+00> : vector<32x256xf32>
    %20 = tpu.matmul %19, %17, %cst_26 {dimension_numbers = #tpu.dot_dimension_numbers<[1], [1], [0], [0], [0, 0, 1, 0], [], []>} : vector<32x128xf32>, vector<256x128xf32>, vector<32x256xf32> -> vector<32x256xf32>
    %21 = arith.addf %14, %20 : vector<32x256xf32>
    %c0_27 = arith.constant 0 : index
    %c1_28 = arith.constant 1 : index
    %c0_29 = arith.constant 0 : index
    %c1_30 = arith.constant 1 : index
    %c0_31 = arith.constant 0 : index
    %22 = vector.load %arg1[%c0_27, %c1_28, %c0_29, %c1_30, %c0_31] : memref<2x2x18x18x128xf32, #tpu.memory_space<vmem>>, vector<1x1x16x16x128xf32>
    %23 = vector.shape_cast %22 : vector<1x1x16x16x128xf32> to vector<16x16x128xf32>
    %24 = vector.shape_cast %23 : vector<16x16x128xf32> to vector<256x128xf32>
    %c0_32 = arith.constant 0 : index
    %c3 = arith.constant 3 : index
    %c0_33 = arith.constant 0 : index
    %c0_34 = arith.constant 0 : index
    %25 = vector.load %arg2[%c0_32, %c3, %c0_33, %c0_34] : memref<5x5x32x128xf32, #tpu.memory_space<vmem>>, vector<1x1x32x128xf32>
    %26 = vector.shape_cast %25 : vector<1x1x32x128xf32> to vector<32x128xf32>
    %cst_35 = arith.constant dense<0.000000e+00> : vector<32x256xf32>
    %27 = tpu.matmul %26, %24, %cst_35 {dimension_numbers = #tpu.dot_dimension_numbers<[1], [1], [0], [0], [0, 0, 1, 0], [], []>} : vector<32x128xf32>, vector<256x128xf32>, vector<32x256xf32> -> vector<32x256xf32>
    %28 = arith.addf %21, %27 : vector<32x256xf32>
    %c0_36 = arith.constant 0 : index
    %c0_37 = arith.constant 0 : index
    %c0_38 = arith.constant 0 : index
    %c2_39 = arith.constant 2 : index
    %c0_40 = arith.constant 0 : index
    %29 = vector.load %arg1[%c0_36, %c0_37, %c0_38, %c2_39, %c0_40] : memref<2x2x18x18x128xf32, #tpu.memory_space<vmem>>, vector<1x1x16x16x128xf32>
    %30 = vector.shape_cast %29 : vector<1x1x16x16x128xf32> to vector<16x16x128xf32>
    %31 = vector.shape_cast %30 : vector<16x16x128xf32> to vector<256x128xf32>
    %c0_41 = arith.constant 0 : index
    %c4 = arith.constant 4 : index
    %c0_42 = arith.constant 0 : index
    %c0_43 = arith.constant 0 : index
    %32 = vector.load %arg2[%c0_41, %c4, %c0_42, %c0_43] : memref<5x5x32x128xf32, #tpu.memory_space<vmem>>, vector<1x1x32x128xf32>
    %33 = vector.shape_cast %32 : vector<1x1x32x128xf32> to vector<32x128xf32>
    %cst_44 = arith.constant dense<0.000000e+00> : vector<32x256xf32>
    %34 = tpu.matmul %33, %31, %cst_44 {dimension_numbers = #tpu.dot_dimension_numbers<[1], [1], [0], [0], [0, 0, 1, 0], [], []>} : vector<32x128xf32>, vector<256x128xf32>, vector<32x256xf32> -> vector<32x256xf32>
    %35 = arith.addf %28, %34 : vector<32x256xf32>
    %c1_45 = arith.constant 1 : index
    %c0_46 = arith.constant 0 : index
    %c0_47 = arith.constant 0 : index
    %c0_48 = arith.constant 0 : index
    %c0_49 = arith.constant 0 : index
    %36 = vector.load %arg1[%c1_45, %c0_46, %c0_47, %c0_48, %c0_49] : memref<2x2x18x18x128xf32, #tpu.memory_space<vmem>>, vector<1x1x16x16x128xf32>
    %37 = vector.shape_cast %36 : vector<1x1x16x16x128xf32> to vector<16x16x128xf32>
    %38 = vector.shape_cast %37 : vector<16x16x128xf32> to vector<256x128xf32>
    %c1_50 = arith.constant 1 : index
    %c0_51 = arith.constant 0 : index
    %c0_52 = arith.constant 0 : index
    %c0_53 = arith.constant 0 : index
    %39 = vector.load %arg2[%c1_50, %c0_51, %c0_52, %c0_53] : memref<5x5x32x128xf32, #tpu.memory_space<vmem>>, vector<1x1x32x128xf32>
    %40 = vector.shape_cast %39 : vector<1x1x32x128xf32> to vector<32x128xf32>
    %cst_54 = arith.constant dense<0.000000e+00> : vector<32x256xf32>
    %41 = tpu.matmul %40, %38, %cst_54 {dimension_numbers = #tpu.dot_dimension_numbers<[1], [1], [0], [0], [0, 0, 1, 0], [], []>} : vector<32x128xf32>, vector<256x128xf32>, vector<32x256xf32> -> vector<32x256xf32>
    %42 = arith.addf %35, %41 : vector<32x256xf32>
    %c1_55 = arith.constant 1 : index
    %c1_56 = arith.constant 1 : index
    %c0_57 = arith.constant 0 : index
    %c0_58 = arith.constant 0 : index
    %c0_59 = arith.constant 0 : index
    %43 = vector.load %arg1[%c1_55, %c1_56, %c0_57, %c0_58, %c0_59] : memref<2x2x18x18x128xf32, #tpu.memory_space<vmem>>, vector<1x1x16x16x128xf32>
    %44 = vector.shape_cast %43 : vector<1x1x16x16x128xf32> to vector<16x16x128xf32>
    %45 = vector.shape_cast %44 : vector<16x16x128xf32> to vector<256x128xf32>
    %c1_60 = arith.constant 1 : index
    %c1_61 = arith.constant 1 : index
    %c0_62 = arith.constant 0 : index
    %c0_63 = arith.constant 0 : index
    %46 = vector.load %arg2[%c1_60, %c1_61, %c0_62, %c0_63] : memref<5x5x32x128xf32, #tpu.memory_space<vmem>>, vector<1x1x32x128xf32>
    %47 = vector.shape_cast %46 : vector<1x1x32x128xf32> to vector<32x128xf32>
    %cst_64 = arith.constant dense<0.000000e+00> : vector<32x256xf32>
    %48 = tpu.matmul %47, %45, %cst_64 {dimension_numbers = #tpu.dot_dimension_numbers<[1], [1], [0], [0], [0, 0, 1, 0], [], []>} : vector<32x128xf32>, vector<256x128xf32>, vector<32x256xf32> -> vector<32x256xf32>
    %49 = arith.addf %42, %48 : vector<32x256xf32>
    %c1_65 = arith.constant 1 : index
    %c0_66 = arith.constant 0 : index
    %c0_67 = arith.constant 0 : index
    %c1_68 = arith.constant 1 : index
    %c0_69 = arith.constant 0 : index
    %50 = vector.load %arg1[%c1_65, %c0_66, %c0_67, %c1_68, %c0_69] : memref<2x2x18x18x128xf32, #tpu.memory_space<vmem>>, vector<1x1x16x16x128xf32>
    %51 = vector.shape_cast %50 : vector<1x1x16x16x128xf32> to vector<16x16x128xf32>
    %52 = vector.shape_cast %51 : vector<16x16x128xf32> to vector<256x128xf32>
    %c1_70 = arith.constant 1 : index
    %c2_71 = arith.constant 2 : index
    %c0_72 = arith.constant 0 : index
    %c0_73 = arith.constant 0 : index
    %53 = vector.load %arg2[%c1_70, %c2_71, %c0_72, %c0_73] : memref<5x5x32x128xf32, #tpu.memory_space<vmem>>, vector<1x1x32x128xf32>
    %54 = vector.shape_cast %53 : vector<1x1x32x128xf32> to vector<32x128xf32>
    %cst_74 = arith.constant dense<0.000000e+00> : vector<32x256xf32>
    %55 = tpu.matmul %54, %52, %cst_74 {dimension_numbers = #tpu.dot_dimension_numbers<[1], [1], [0], [0], [0, 0, 1, 0], [], []>} : vector<32x128xf32>, vector<256x128xf32>, vector<32x256xf32> -> vector<32x256xf32>
    %56 = arith.addf %49, %55 : vector<32x256xf32>
    %c1_75 = arith.constant 1 : index
    %c1_76 = arith.constant 1 : index
    %c0_77 = arith.constant 0 : index
    %c1_78 = arith.constant 1 : index
    %c0_79 = arith.constant 0 : index
    %57 = vector.load %arg1[%c1_75, %c1_76, %c0_77, %c1_78, %c0_79] : memref<2x2x18x18x128xf32, #tpu.memory_space<vmem>>, vector<1x1x16x16x128xf32>
    %58 = vector.shape_cast %57 : vector<1x1x16x16x128xf32> to vector<16x16x128xf32>
    %59 = vector.shape_cast %58 : vector<16x16x128xf32> to vector<256x128xf32>
    %c1_80 = arith.constant 1 : index
    %c3_81 = arith.constant 3 : index
    %c0_82 = arith.constant 0 : index
    %c0_83 = arith.constant 0 : index
    %60 = vector.load %arg2[%c1_80, %c3_81, %c0_82, %c0_83] : memref<5x5x32x128xf32, #tpu.memory_space<vmem>>, vector<1x1x32x128xf32>
    %61 = vector.shape_cast %60 : vector<1x1x32x128xf32> to vector<32x128xf32>
    %cst_84 = arith.constant dense<0.000000e+00> : vector<32x256xf32>
    %62 = tpu.matmul %61, %59, %cst_84 {dimension_numbers = #tpu.dot_dimension_numbers<[1], [1], [0], [0], [0, 0, 1, 0], [], []>} : vector<32x128xf32>, vector<256x128xf32>, vector<32x256xf32> -> vector<32x256xf32>
    %63 = arith.addf %56, %62 : vector<32x256xf32>
    %c1_85 = arith.constant 1 : index
    %c0_86 = arith.constant 0 : index
    %c0_87 = arith.constant 0 : index
    %c2_88 = arith.constant 2 : index
    %c0_89 = arith.constant 0 : index
    %64 = vector.load %arg1[%c1_85, %c0_86, %c0_87, %c2_88, %c0_89] : memref<2x2x18x18x128xf32, #tpu.memory_space<vmem>>, vector<1x1x16x16x128xf32>
    %65 = vector.shape_cast %64 : vector<1x1x16x16x128xf32> to vector<16x16x128xf32>
    %66 = vector.shape_cast %65 : vector<16x16x128xf32> to vector<256x128xf32>
    %c1_90 = arith.constant 1 : index
    %c4_91 = arith.constant 4 : index
    %c0_92 = arith.constant 0 : index
    %c0_93 = arith.constant 0 : index
    %67 = vector.load %arg2[%c1_90, %c4_91, %c0_92, %c0_93] : memref<5x5x32x128xf32, #tpu.memory_space<vmem>>, vector<1x1x32x128xf32>
    %68 = vector.shape_cast %67 : vector<1x1x32x128xf32> to vector<32x128xf32>
    %cst_94 = arith.constant dense<0.000000e+00> : vector<32x256xf32>
    %69 = tpu.matmul %68, %66, %cst_94 {dimension_numbers = #tpu.dot_dimension_numbers<[1], [1], [0], [0], [0, 0, 1, 0], [], []>} : vector<32x128xf32>, vector<256x128xf32>, vector<32x256xf32> -> vector<32x256xf32>
    %70 = arith.addf %63, %69 : vector<32x256xf32>
    %c0_95 = arith.constant 0 : index
    %c0_96 = arith.constant 0 : index
    %c1_97 = arith.constant 1 : index
    %c0_98 = arith.constant 0 : index
    %c0_99 = arith.constant 0 : index
    %71 = vector.load %arg1[%c0_95, %c0_96, %c1_97, %c0_98, %c0_99] : memref<2x2x18x18x128xf32, #tpu.memory_space<vmem>>, vector<1x1x16x16x128xf32>
    %72 = vector.shape_cast %71 : vector<1x1x16x16x128xf32> to vector<16x16x128xf32>
    %73 = vector.shape_cast %72 : vector<16x16x128xf32> to vector<256x128xf32>
    %c2_100 = arith.constant 2 : index
    %c0_101 = arith.constant 0 : index
    %c0_102 = arith.constant 0 : index
    %c0_103 = arith.constant 0 : index
    %74 = vector.load %arg2[%c2_100, %c0_101, %c0_102, %c0_103] : memref<5x5x32x128xf32, #tpu.memory_space<vmem>>, vector<1x1x32x128xf32>
    %75 = vector.shape_cast %74 : vector<1x1x32x128xf32> to vector<32x128xf32>
    %cst_104 = arith.constant dense<0.000000e+00> : vector<32x256xf32>
    %76 = tpu.matmul %75, %73, %cst_104 {dimension_numbers = #tpu.dot_dimension_numbers<[1], [1], [0], [0], [0, 0, 1, 0], [], []>} : vector<32x128xf32>, vector<256x128xf32>, vector<32x256xf32> -> vector<32x256xf32>
    %77 = arith.addf %70, %76 : vector<32x256xf32>
    %c0_105 = arith.constant 0 : index
    %c1_106 = arith.constant 1 : index
    %c1_107 = arith.constant 1 : index
    %c0_108 = arith.constant 0 : index
    %c0_109 = arith.constant 0 : index
    %78 = vector.load %arg1[%c0_105, %c1_106, %c1_107, %c0_108, %c0_109] : memref<2x2x18x18x128xf32, #tpu.memory_space<vmem>>, vector<1x1x16x16x128xf32>
    %79 = vector.shape_cast %78 : vector<1x1x16x16x128xf32> to vector<16x16x128xf32>
    %80 = vector.shape_cast %79 : vector<16x16x128xf32> to vector<256x128xf32>
    %c2_110 = arith.constant 2 : index
    %c1_111 = arith.constant 1 : index
    %c0_112 = arith.constant 0 : index
    %c0_113 = arith.constant 0 : index
    %81 = vector.load %arg2[%c2_110, %c1_111, %c0_112, %c0_113] : memref<5x5x32x128xf32, #tpu.memory_space<vmem>>, vector<1x1x32x128xf32>
    %82 = vector.shape_cast %81 : vector<1x1x32x128xf32> to vector<32x128xf32>
    %cst_114 = arith.constant dense<0.000000e+00> : vector<32x256xf32>
    %83 = tpu.matmul %82, %80, %cst_114 {dimension_numbers = #tpu.dot_dimension_numbers<[1], [1], [0], [0], [0, 0, 1, 0], [], []>} : vector<32x128xf32>, vector<256x128xf32>, vector<32x256xf32> -> vector<32x256xf32>
    %84 = arith.addf %77, %83 : vector<32x256xf32>
    %c0_115 = arith.constant 0 : index
    %c0_116 = arith.constant 0 : index
    %c1_117 = arith.constant 1 : index
    %c1_118 = arith.constant 1 : index
    %c0_119 = arith.constant 0 : index
    %85 = vector.load %arg1[%c0_115, %c0_116, %c1_117, %c1_118, %c0_119] : memref<2x2x18x18x128xf32, #tpu.memory_space<vmem>>, vector<1x1x16x16x128xf32>
    %86 = vector.shape_cast %85 : vector<1x1x16x16x128xf32> to vector<16x16x128xf32>
    %87 = vector.shape_cast %86 : vector<16x16x128xf32> to vector<256x128xf32>
    %c2_120 = arith.constant 2 : index
    %c2_121 = arith.constant 2 : index
    %c0_122 = arith.constant 0 : index
    %c0_123 = arith.constant 0 : index
    %88 = vector.load %arg2[%c2_120, %c2_121, %c0_122, %c0_123] : memref<5x5x32x128xf32, #tpu.memory_space<vmem>>, vector<1x1x32x128xf32>
    %89 = vector.shape_cast %88 : vector<1x1x32x128xf32> to vector<32x128xf32>
    %cst_124 = arith.constant dense<0.000000e+00> : vector<32x256xf32>
    %90 = tpu.matmul %89, %87, %cst_124 {dimension_numbers = #tpu.dot_dimension_numbers<[1], [1], [0], [0], [0, 0, 1, 0], [], []>} : vector<32x128xf32>, vector<256x128xf32>, vector<32x256xf32> -> vector<32x256xf32>
    %91 = arith.addf %84, %90 : vector<32x256xf32>
    %c0_125 = arith.constant 0 : index
    %c1_126 = arith.constant 1 : index
    %c1_127 = arith.constant 1 : index
    %c1_128 = arith.constant 1 : index
    %c0_129 = arith.constant 0 : index
    %92 = vector.load %arg1[%c0_125, %c1_126, %c1_127, %c1_128, %c0_129] : memref<2x2x18x18x128xf32, #tpu.memory_space<vmem>>, vector<1x1x16x16x128xf32>
    %93 = vector.shape_cast %92 : vector<1x1x16x16x128xf32> to vector<16x16x128xf32>
    %94 = vector.shape_cast %93 : vector<16x16x128xf32> to vector<256x128xf32>
    %c2_130 = arith.constant 2 : index
    %c3_131 = arith.constant 3 : index
    %c0_132 = arith.constant 0 : index
    %c0_133 = arith.constant 0 : index
    %95 = vector.load %arg2[%c2_130, %c3_131, %c0_132, %c0_133] : memref<5x5x32x128xf32, #tpu.memory_space<vmem>>, vector<1x1x32x128xf32>
    %96 = vector.shape_cast %95 : vector<1x1x32x128xf32> to vector<32x128xf32>
    %cst_134 = arith.constant dense<0.000000e+00> : vector<32x256xf32>
    %97 = tpu.matmul %96, %94, %cst_134 {dimension_numbers = #tpu.dot_dimension_numbers<[1], [1], [0], [0], [0, 0, 1, 0], [], []>} : vector<32x128xf32>, vector<256x128xf32>, vector<32x256xf32> -> vector<32x256xf32>
    %98 = arith.addf %91, %97 : vector<32x256xf32>
    %c0_135 = arith.constant 0 : index
    %c0_136 = arith.constant 0 : index
    %c1_137 = arith.constant 1 : index
    %c2_138 = arith.constant 2 : index
    %c0_139 = arith.constant 0 : index
    %99 = vector.load %arg1[%c0_135, %c0_136, %c1_137, %c2_138, %c0_139] : memref<2x2x18x18x128xf32, #tpu.memory_space<vmem>>, vector<1x1x16x16x128xf32>
    %100 = vector.shape_cast %99 : vector<1x1x16x16x128xf32> to vector<16x16x128xf32>
    %101 = vector.shape_cast %100 : vector<16x16x128xf32> to vector<256x128xf32>
    %c2_140 = arith.constant 2 : index
    %c4_141 = arith.constant 4 : index
    %c0_142 = arith.constant 0 : index
    %c0_143 = arith.constant 0 : index
    %102 = vector.load %arg2[%c2_140, %c4_141, %c0_142, %c0_143] : memref<5x5x32x128xf32, #tpu.memory_space<vmem>>, vector<1x1x32x128xf32>
    %103 = vector.shape_cast %102 : vector<1x1x32x128xf32> to vector<32x128xf32>
    %cst_144 = arith.constant dense<0.000000e+00> : vector<32x256xf32>
    %104 = tpu.matmul %103, %101, %cst_144 {dimension_numbers = #tpu.dot_dimension_numbers<[1], [1], [0], [0], [0, 0, 1, 0], [], []>} : vector<32x128xf32>, vector<256x128xf32>, vector<32x256xf32> -> vector<32x256xf32>
    %105 = arith.addf %98, %104 : vector<32x256xf32>
    %c1_145 = arith.constant 1 : index
    %c0_146 = arith.constant 0 : index
    %c1_147 = arith.constant 1 : index
    %c0_148 = arith.constant 0 : index
    %c0_149 = arith.constant 0 : index
    %106 = vector.load %arg1[%c1_145, %c0_146, %c1_147, %c0_148, %c0_149] : memref<2x2x18x18x128xf32, #tpu.memory_space<vmem>>, vector<1x1x16x16x128xf32>
    %107 = vector.shape_cast %106 : vector<1x1x16x16x128xf32> to vector<16x16x128xf32>
    %108 = vector.shape_cast %107 : vector<16x16x128xf32> to vector<256x128xf32>
    %c3_150 = arith.constant 3 : index
    %c0_151 = arith.constant 0 : index
    %c0_152 = arith.constant 0 : index
    %c0_153 = arith.constant 0 : index
    %109 = vector.load %arg2[%c3_150, %c0_151, %c0_152, %c0_153] : memref<5x5x32x128xf32, #tpu.memory_space<vmem>>, vector<1x1x32x128xf32>
    %110 = vector.shape_cast %109 : vector<1x1x32x128xf32> to vector<32x128xf32>
    %cst_154 = arith.constant dense<0.000000e+00> : vector<32x256xf32>
    %111 = tpu.matmul %110, %108, %cst_154 {dimension_numbers = #tpu.dot_dimension_numbers<[1], [1], [0], [0], [0, 0, 1, 0], [], []>} : vector<32x128xf32>, vector<256x128xf32>, vector<32x256xf32> -> vector<32x256xf32>
    %112 = arith.addf %105, %111 : vector<32x256xf32>
    %c1_155 = arith.constant 1 : index
    %c1_156 = arith.constant 1 : index
    %c1_157 = arith.constant 1 : index
    %c0_158 = arith.constant 0 : index
    %c0_159 = arith.constant 0 : index
    %113 = vector.load %arg1[%c1_155, %c1_156, %c1_157, %c0_158, %c0_159] : memref<2x2x18x18x128xf32, #tpu.memory_space<vmem>>, vector<1x1x16x16x128xf32>
    %114 = vector.shape_cast %113 : vector<1x1x16x16x128xf32> to vector<16x16x128xf32>
    %115 = vector.shape_cast %114 : vector<16x16x128xf32> to vector<256x128xf32>
    %c3_160 = arith.constant 3 : index
    %c1_161 = arith.constant 1 : index
    %c0_162 = arith.constant 0 : index
    %c0_163 = arith.constant 0 : index
    %116 = vector.load %arg2[%c3_160, %c1_161, %c0_162, %c0_163] : memref<5x5x32x128xf32, #tpu.memory_space<vmem>>, vector<1x1x32x128xf32>
    %117 = vector.shape_cast %116 : vector<1x1x32x128xf32> to vector<32x128xf32>
    %cst_164 = arith.constant dense<0.000000e+00> : vector<32x256xf32>
    %118 = tpu.matmul %117, %115, %cst_164 {dimension_numbers = #tpu.dot_dimension_numbers<[1], [1], [0], [0], [0, 0, 1, 0], [], []>} : vector<32x128xf32>, vector<256x128xf32>, vector<32x256xf32> -> vector<32x256xf32>
    %119 = arith.addf %112, %118 : vector<32x256xf32>
    %c1_165 = arith.constant 1 : index
    %c0_166 = arith.constant 0 : index
    %c1_167 = arith.constant 1 : index
    %c1_168 = arith.constant 1 : index
    %c0_169 = arith.constant 0 : index
    %120 = vector.load %arg1[%c1_165, %c0_166, %c1_167, %c1_168, %c0_169] : memref<2x2x18x18x128xf32, #tpu.memory_space<vmem>>, vector<1x1x16x16x128xf32>
    %121 = vector.shape_cast %120 : vector<1x1x16x16x128xf32> to vector<16x16x128xf32>
    %122 = vector.shape_cast %121 : vector<16x16x128xf32> to vector<256x128xf32>
    %c3_170 = arith.constant 3 : index
    %c2_171 = arith.constant 2 : index
    %c0_172 = arith.constant 0 : index
    %c0_173 = arith.constant 0 : index
    %123 = vector.load %arg2[%c3_170, %c2_171, %c0_172, %c0_173] : memref<5x5x32x128xf32, #tpu.memory_space<vmem>>, vector<1x1x32x128xf32>
    %124 = vector.shape_cast %123 : vector<1x1x32x128xf32> to vector<32x128xf32>
    %cst_174 = arith.constant dense<0.000000e+00> : vector<32x256xf32>
    %125 = tpu.matmul %124, %122, %cst_174 {dimension_numbers = #tpu.dot_dimension_numbers<[1], [1], [0], [0], [0, 0, 1, 0], [], []>} : vector<32x128xf32>, vector<256x128xf32>, vector<32x256xf32> -> vector<32x256xf32>
    %126 = arith.addf %119, %125 : vector<32x256xf32>
    %c1_175 = arith.constant 1 : index
    %c1_176 = arith.constant 1 : index
    %c1_177 = arith.constant 1 : index
    %c1_178 = arith.constant 1 : index
    %c0_179 = arith.constant 0 : index
    %127 = vector.load %arg1[%c1_175, %c1_176, %c1_177, %c1_178, %c0_179] : memref<2x2x18x18x128xf32, #tpu.memory_space<vmem>>, vector<1x1x16x16x128xf32>
    %128 = vector.shape_cast %127 : vector<1x1x16x16x128xf32> to vector<16x16x128xf32>
    %129 = vector.shape_cast %128 : vector<16x16x128xf32> to vector<256x128xf32>
    %c3_180 = arith.constant 3 : index
    %c3_181 = arith.constant 3 : index
    %c0_182 = arith.constant 0 : index
    %c0_183 = arith.constant 0 : index
    %130 = vector.load %arg2[%c3_180, %c3_181, %c0_182, %c0_183] : memref<5x5x32x128xf32, #tpu.memory_space<vmem>>, vector<1x1x32x128xf32>
    %131 = vector.shape_cast %130 : vector<1x1x32x128xf32> to vector<32x128xf32>
    %cst_184 = arith.constant dense<0.000000e+00> : vector<32x256xf32>
    %132 = tpu.matmul %131, %129, %cst_184 {dimension_numbers = #tpu.dot_dimension_numbers<[1], [1], [0], [0], [0, 0, 1, 0], [], []>} : vector<32x128xf32>, vector<256x128xf32>, vector<32x256xf32> -> vector<32x256xf32>
    %133 = arith.addf %126, %132 : vector<32x256xf32>
    %c1_185 = arith.constant 1 : index
    %c0_186 = arith.constant 0 : index
    %c1_187 = arith.constant 1 : index
    %c2_188 = arith.constant 2 : index
    %c0_189 = arith.constant 0 : index
    %134 = vector.load %arg1[%c1_185, %c0_186, %c1_187, %c2_188, %c0_189] : memref<2x2x18x18x128xf32, #tpu.memory_space<vmem>>, vector<1x1x16x16x128xf32>
    %135 = vector.shape_cast %134 : vector<1x1x16x16x128xf32> to vector<16x16x128xf32>
    %136 = vector.shape_cast %135 : vector<16x16x128xf32> to vector<256x128xf32>
    %c3_190 = arith.constant 3 : index
    %c4_191 = arith.constant 4 : index
    %c0_192 = arith.constant 0 : index
    %c0_193 = arith.constant 0 : index
    %137 = vector.load %arg2[%c3_190, %c4_191, %c0_192, %c0_193] : memref<5x5x32x128xf32, #tpu.memory_space<vmem>>, vector<1x1x32x128xf32>
    %138 = vector.shape_cast %137 : vector<1x1x32x128xf32> to vector<32x128xf32>
    %cst_194 = arith.constant dense<0.000000e+00> : vector<32x256xf32>
    %139 = tpu.matmul %138, %136, %cst_194 {dimension_numbers = #tpu.dot_dimension_numbers<[1], [1], [0], [0], [0, 0, 1, 0], [], []>} : vector<32x128xf32>, vector<256x128xf32>, vector<32x256xf32> -> vector<32x256xf32>
    %140 = arith.addf %133, %139 : vector<32x256xf32>
    %c0_195 = arith.constant 0 : index
    %c0_196 = arith.constant 0 : index
    %c2_197 = arith.constant 2 : index
    %c0_198 = arith.constant 0 : index
    %c0_199 = arith.constant 0 : index
    %141 = vector.load %arg1[%c0_195, %c0_196, %c2_197, %c0_198, %c0_199] : memref<2x2x18x18x128xf32, #tpu.memory_space<vmem>>, vector<1x1x16x16x128xf32>
    %142 = vector.shape_cast %141 : vector<1x1x16x16x128xf32> to vector<16x16x128xf32>
    %143 = vector.shape_cast %142 : vector<16x16x128xf32> to vector<256x128xf32>
    %c4_200 = arith.constant 4 : index
    %c0_201 = arith.constant 0 : index
    %c0_202 = arith.constant 0 : index
    %c0_203 = arith.constant 0 : index
    %144 = vector.load %arg2[%c4_200, %c0_201, %c0_202, %c0_203] : memref<5x5x32x128xf32, #tpu.memory_space<vmem>>, vector<1x1x32x128xf32>
    %145 = vector.shape_cast %144 : vector<1x1x32x128xf32> to vector<32x128xf32>
    %cst_204 = arith.constant dense<0.000000e+00> : vector<32x256xf32>
    %146 = tpu.matmul %145, %143, %cst_204 {dimension_numbers = #tpu.dot_dimension_numbers<[1], [1], [0], [0], [0, 0, 1, 0], [], []>} : vector<32x128xf32>, vector<256x128xf32>, vector<32x256xf32> -> vector<32x256xf32>
    %147 = arith.addf %140, %146 : vector<32x256xf32>
    %c0_205 = arith.constant 0 : index
    %c1_206 = arith.constant 1 : index
    %c2_207 = arith.constant 2 : index
    %c0_208 = arith.constant 0 : index
    %c0_209 = arith.constant 0 : index
    %148 = vector.load %arg1[%c0_205, %c1_206, %c2_207, %c0_208, %c0_209] : memref<2x2x18x18x128xf32, #tpu.memory_space<vmem>>, vector<1x1x16x16x128xf32>
    %149 = vector.shape_cast %148 : vector<1x1x16x16x128xf32> to vector<16x16x128xf32>
    %150 = vector.shape_cast %149 : vector<16x16x128xf32> to vector<256x128xf32>
    %c4_210 = arith.constant 4 : index
    %c1_211 = arith.constant 1 : index
    %c0_212 = arith.constant 0 : index
    %c0_213 = arith.constant 0 : index
    %151 = vector.load %arg2[%c4_210, %c1_211, %c0_212, %c0_213] : memref<5x5x32x128xf32, #tpu.memory_space<vmem>>, vector<1x1x32x128xf32>
    %152 = vector.shape_cast %151 : vector<1x1x32x128xf32> to vector<32x128xf32>
    %cst_214 = arith.constant dense<0.000000e+00> : vector<32x256xf32>
    %153 = tpu.matmul %152, %150, %cst_214 {dimension_numbers = #tpu.dot_dimension_numbers<[1], [1], [0], [0], [0, 0, 1, 0], [], []>} : vector<32x128xf32>, vector<256x128xf32>, vector<32x256xf32> -> vector<32x256xf32>
    %154 = arith.addf %147, %153 : vector<32x256xf32>
    %c0_215 = arith.constant 0 : index
    %c0_216 = arith.constant 0 : index
    %c2_217 = arith.constant 2 : index
    %c1_218 = arith.constant 1 : index
    %c0_219 = arith.constant 0 : index
    %155 = vector.load %arg1[%c0_215, %c0_216, %c2_217, %c1_218, %c0_219] : memref<2x2x18x18x128xf32, #tpu.memory_space<vmem>>, vector<1x1x16x16x128xf32>
    %156 = vector.shape_cast %155 : vector<1x1x16x16x128xf32> to vector<16x16x128xf32>
    %157 = vector.shape_cast %156 : vector<16x16x128xf32> to vector<256x128xf32>
    %c4_220 = arith.constant 4 : index
    %c2_221 = arith.constant 2 : index
    %c0_222 = arith.constant 0 : index
    %c0_223 = arith.constant 0 : index
    %158 = vector.load %arg2[%c4_220, %c2_221, %c0_222, %c0_223] : memref<5x5x32x128xf32, #tpu.memory_space<vmem>>, vector<1x1x32x128xf32>
    %159 = vector.shape_cast %158 : vector<1x1x32x128xf32> to vector<32x128xf32>
    %cst_224 = arith.constant dense<0.000000e+00> : vector<32x256xf32>
    %160 = tpu.matmul %159, %157, %cst_224 {dimension_numbers = #tpu.dot_dimension_numbers<[1], [1], [0], [0], [0, 0, 1, 0], [], []>} : vector<32x128xf32>, vector<256x128xf32>, vector<32x256xf32> -> vector<32x256xf32>
    %161 = arith.addf %154, %160 : vector<32x256xf32>
    %c0_225 = arith.constant 0 : index
    %c1_226 = arith.constant 1 : index
    %c2_227 = arith.constant 2 : index
    %c1_228 = arith.constant 1 : index
    %c0_229 = arith.constant 0 : index
    %162 = vector.load %arg1[%c0_225, %c1_226, %c2_227, %c1_228, %c0_229] : memref<2x2x18x18x128xf32, #tpu.memory_space<vmem>>, vector<1x1x16x16x128xf32>
    %163 = vector.shape_cast %162 : vector<1x1x16x16x128xf32> to vector<16x16x128xf32>
    %164 = vector.shape_cast %163 : vector<16x16x128xf32> to vector<256x128xf32>
    %c4_230 = arith.constant 4 : index
    %c3_231 = arith.constant 3 : index
    %c0_232 = arith.constant 0 : index
    %c0_233 = arith.constant 0 : index
    %165 = vector.load %arg2[%c4_230, %c3_231, %c0_232, %c0_233] : memref<5x5x32x128xf32, #tpu.memory_space<vmem>>, vector<1x1x32x128xf32>
    %166 = vector.shape_cast %165 : vector<1x1x32x128xf32> to vector<32x128xf32>
    %cst_234 = arith.constant dense<0.000000e+00> : vector<32x256xf32>
    %167 = tpu.matmul %166, %164, %cst_234 {dimension_numbers = #tpu.dot_dimension_numbers<[1], [1], [0], [0], [0, 0, 1, 0], [], []>} : vector<32x128xf32>, vector<256x128xf32>, vector<32x256xf32> -> vector<32x256xf32>
    %168 = arith.addf %161, %167 : vector<32x256xf32>
    %c0_235 = arith.constant 0 : index
    %c0_236 = arith.constant 0 : index
    %c2_237 = arith.constant 2 : index
    %c2_238 = arith.constant 2 : index
    %c0_239 = arith.constant 0 : index
    %169 = vector.load %arg1[%c0_235, %c0_236, %c2_237, %c2_238, %c0_239] : memref<2x2x18x18x128xf32, #tpu.memory_space<vmem>>, vector<1x1x16x16x128xf32>
    %170 = vector.shape_cast %169 : vector<1x1x16x16x128xf32> to vector<16x16x128xf32>
    %171 = vector.shape_cast %170 : vector<16x16x128xf32> to vector<256x128xf32>
    %c4_240 = arith.constant 4 : index
    %c4_241 = arith.constant 4 : index
    %c0_242 = arith.constant 0 : index
    %c0_243 = arith.constant 0 : index
    %172 = vector.load %arg2[%c4_240, %c4_241, %c0_242, %c0_243] : memref<5x5x32x128xf32, #tpu.memory_space<vmem>>, vector<1x1x32x128xf32>
    %173 = vector.shape_cast %172 : vector<1x1x32x128xf32> to vector<32x128xf32>
    %cst_244 = arith.constant dense<0.000000e+00> : vector<32x256xf32>
    %174 = tpu.matmul %173, %171, %cst_244 {dimension_numbers = #tpu.dot_dimension_numbers<[1], [1], [0], [0], [0, 0, 1, 0], [], []>} : vector<32x128xf32>, vector<256x128xf32>, vector<32x256xf32> -> vector<32x256xf32>
    %175 = arith.addf %168, %174 : vector<32x256xf32>
    %c0_245 = arith.constant 0 : index
    %c0_246 = arith.constant 0 : index
    %176 = vector.load %arg3[%c0_245, %c0_246] : memref<32x1xf32, #tpu.memory_space<vmem>>, vector<32x1xf32>
    %177 = vector.broadcast %176 : vector<32x1xf32> to vector<32x256xf32>
    %178 = arith.addf %175, %177 : vector<32x256xf32>
    %cst_247 = arith.constant 3.000000e+00 : f32
    %179 = vector.broadcast %cst_247 : f32 to vector<32x256xf32>
    %180 = arith.addf %178, %179 : vector<32x256xf32>
    %c0_248 = arith.constant 0 : index
    %c0_249 = arith.constant 0 : index
    %181 = vector.load %arg4[%c0_248, %c0_249] : memref<32x256xf32, #tpu.memory_space<vmem>>, vector<32x256xf32>
    tpu.vector_store %arg4[%c0_248, %c0_249], %180 {strides = array<i32>} : memref<32x256xf32, #tpu.memory_space<vmem>>, vector<32x256xf32>,
    return
  }
  func.func @transform_0(%arg0: i32) -> (i32, i32, i32, i32, i32) {
    %c0_i32 = arith.constant 0 : i32
    %c0_i32_0 = arith.constant 0 : i32
    %c0_i32_1 = arith.constant 0 : i32
    %c0_i32_2 = arith.constant 0 : i32
    %c0_i32_3 = arith.constant 0 : i32
    %c0_i32_4 = arith.constant 0 : i32
    return %c0_i32, %c0_i32_0, %c0_i32_1, %c0_i32_2, %c0_i32_3 : i32, i32, i32, i32, i32
  }
  func.func @transform_1(%arg0: i32) -> (i32, i32, i32, i32) {
    %c0_i32 = arith.constant 0 : i32
    %c0_i32_0 = arith.constant 0 : i32
    %c0_i32_1 = arith.constant 0 : i32
    %c0_i32_2 = arith.constant 0 : i32
    %c0_i32_3 = arith.constant 0 : i32
    return %c0_i32, %c0_i32_0, %c0_i32_1, %c0_i32_2 : i32, i32, i32, i32
  }
  func.func @transform_2(%arg0: i32) -> (i32, i32) {
    %c0_i32 = arith.constant 0 : i32
    %c0_i32_0 = arith.constant 0 : i32
    %c0_i32_1 = arith.constant 0 : i32
    return %c0_i32, %c0_i32_0 : i32, i32
  }
  func.func @transform_3(%arg0: i32) -> (i32, i32) {
    %c0_i32 = arith.constant 0 : i32
    %c0_i32_0 = arith.constant 0 : i32
    %c0_i32_1 = arith.constant 0 : i32
    return %c0_i32, %c0_i32_0 : i32, i32
  }
}

</mosaic_0001>

<llo_original>
// kernel: conv2d_plus.1
$region0: #{conv2d_plus.1}
  #allocation0 [shape = 'u32[]', space=smem, size = 0x4, offset = 0x4, fixed_abs, tag = 'smem constant byte address 0x4 - core index']
  #allocation1 [shape = 'u32[144,128]{1,0:T(1,128)}', space=vmem, size = 0x12000, scoped, tag = 'internal scratch']
  %s0 = inlined_call_operand.vmem [shape: f32[2,2,18,18,128], index: 0, kind: input, shape index: {}]
  %s1 = inlined_call_operand.vmem [shape: f32[5,5,32,128], index: 1, kind: input, shape index: {}]
  %s2 = inlined_call_operand.vmem [shape: f32[32,1], index: 2, kind: input, shape index: {}]
  %s3 = inlined_call_operand.vmem [shape: f32[32,256], index: 3, kind: output, shape index: {}]
  %s4 = sld [smem:[#allocation0]]
  $region22: #{conv2d_plus.1} parent=0
    _
  %s6 = ssub.s32 1, %s4
  %s7 = scalar_select 0, %s6, %s4
  // Predicated region
  $region2: #{conv2d_plus.1} parent=0 // pred_check
    _
  $region3: #{conv2d_plus.1} parent=0 // pred_check_branch
    %9 = sbr.rel (0) target = $region5
  $region4: #{conv2d_plus.1} parent=0 // pred_region
    _
  $region5: #{conv2d_plus.1} parent=0 // pred_fallthru
    _
  // Predicated region
  $region6: #{conv2d_plus.1} parent=0 // pred_check
    _
  $region7: #{conv2d_plus.1} parent=0 // pred_check_branch
    %11 = sbr.rel (0) target = $region9
  $region8: #{conv2d_plus.1} parent=0 // pred_region
    _
  $region9: #{conv2d_plus.1} parent=0 // pred_fallthru
    _
  // Predicated region
  $region10: #{conv2d_plus.1} parent=0 // pred_check
    _
  $region11: #{conv2d_plus.1} parent=0 // pred_check_branch
    %13 = sbr.rel (0) target = $region13
  $region12: #{conv2d_plus.1} parent=0 // pred_region
    _
  $region13: #{conv2d_plus.1} parent=0 // pred_fallthru
    _
  %v14 = vld [vmem:[%s0] sm:$0xff]
  %v15 = vld [vmem:[%s0 + $0x8] sm:$0xff]
  %v16 = vld [vmem:[%s0 + $0x18] sm:$0xff]
  %v17 = vld [vmem:[%s0 + $0x20] sm:$0xff]
  %v18 = vld [vmem:[%s0 + $0x30] sm:$0xff]
  %v19 = vld [vmem:[%s0 + $0x38] sm:$0xff]
  %v20 = vld [vmem:[%s0 + $0x48] sm:$0xff]
  %v21 = vld [vmem:[%s0 + $0x50] sm:$0xff]
  %v22 = vld [vmem:[%s0 + $0x60] sm:$0xff]
  %v23 = vld [vmem:[%s0 + $0x68] sm:$0xff]
  %v24 = vld [vmem:[%s0 + $0x78] sm:$0xff]
  %v25 = vld [vmem:[%s0 + $0x80] sm:$0xff]
  %v26 = vld [vmem:[%s0 + $0x90] sm:$0xff]
  %v27 = vld [vmem:[%s0 + $0x98] sm:$0xff]
  %v28 = vld [vmem:[%s0 + $0xa8] sm:$0xff]
  %v29 = vld [vmem:[%s0 + $0xb0] sm:$0xff]
  %v30 = vld [vmem:[%s0 + $0xc0] sm:$0xff]
  %v31 = vld [vmem:[%s0 + $0xc8] sm:$0xff]
  %v32 = vld [vmem:[%s0 + $0xd8] sm:$0xff]
  %v33 = vld [vmem:[%s0 + $0xe0] sm:$0xff]
  %v34 = vld [vmem:[%s0 + $0xf0] sm:$0xff]
  %v35 = vld [vmem:[%s0 + $0xf8] sm:$0xff]
  %v36 = vld [vmem:[%s0 + $0x108] sm:$0xff]
  %v37 = vld [vmem:[%s0 + $0x110] sm:$0xff]
  %v38 = vld [vmem:[%s0 + $0x120] sm:$0xff]
  %v39 = vld [vmem:[%s0 + $0x128] sm:$0xff]
  %v40 = vld [vmem:[%s0 + $0x138] sm:$0xff]
  %v41 = vld [vmem:[%s0 + $0x140] sm:$0xff]
  %v42 = vld [vmem:[%s0 + $0x150] sm:$0xff]
  %v43 = vld [vmem:[%s0 + $0x158] sm:$0xff]
  %v44 = vld [vmem:[%s0 + $0x168] sm:$0xff]
  %v45 = vld [vmem:[%s0 + $0x170] sm:$0xff]
  %v46 = vld [vmem:[%s1] sm:$0xff]
  %v47 = vld [vmem:[%s1 + $0x8] sm:$0xff]
  %v48 = vld [vmem:[%s1 + $0x10] sm:$0xff]
  %v49 = vld [vmem:[%s1 + $0x18] sm:$0xff]
  %s50 = scalar_lea.vmem %s0, 432
  %v51 = vld [vmem:[%s50] sm:$0xff]
  %v52 = vld [vmem:[%s50 + $0x8] sm:$0xff]
  %v53 = vld [vmem:[%s50 + $0x18] sm:$0xff]
  %v54 = vld [vmem:[%s50 + $0x20] sm:$0xff]
  %v55 = vld [vmem:[%s50 + $0x30] sm:$0xff]
  %v56 = vld [vmem:[%s50 + $0x38] sm:$0xff]
  %v57 = vld [vmem:[%s50 + $0x48] sm:$0xff]
  %v58 = vld [vmem:[%s50 + $0x50] sm:$0xff]
  %v59 = vld [vmem:[%s50 + $0x60] sm:$0xff]
  %v60 = vld [vmem:[%s50 + $0x68] sm:$0xff]
  %v61 = vld [vmem:[%s50 + $0x78] sm:$0xff]
  %v62 = vld [vmem:[%s50 + $0x80] sm:$0xff]
  %v63 = vld [vmem:[%s50 + $0x90] sm:$0xff]
  %v64 = vld [vmem:[%s50 + $0x98] sm:$0xff]
  %v65 = vld [vmem:[%s50 + $0xa8] sm:$0xff]
  %v66 = vld [vmem:[%s50 + $0xb0] sm:$0xff]
  %v67 = vld [vmem:[%s50 + $0xc0] sm:$0xff]
  %v68 = vld [vmem:[%s50 + $0xc8] sm:$0xff]
  %v69 = vld [vmem:[%s50 + $0xd8] sm:$0xff]
  %v70 = vld [vmem:[%s50 + $0xe0] sm:$0xff]
  %v71 = vld [vmem:[%s50 + $0xf0] sm:$0xff]
  %v72 = vld [vmem:[%s50 + $0xf8] sm:$0xff]
  %v73 = vld [vmem:[%s50 + $0x108] sm:$0xff]
  %v74 = vld [vmem:[%s50 + $0x110] sm:$0xff]
  %v75 = vld [vmem:[%s50 + $0x120] sm:$0xff]
  %v76 = vld [vmem:[%s50 + $0x128] sm:$0xff]
  %v77 = vld [vmem:[%s50 + $0x138] sm:$0xff]
  %v78 = vld [vmem:[%s50 + $0x140] sm:$0xff]
  %v79 = vld [vmem:[%s50 + $0x150] sm:$0xff]
  %v80 = vld [vmem:[%s50 + $0x158] sm:$0xff]
  %v81 = vld [vmem:[%s50 + $0x168] sm:$0xff]
  %v82 = vld [vmem:[%s50 + $0x170] sm:$0xff]
  %s83 = scalar_lea.vmem %s1, 32
  %v84 = vld [vmem:[%s83] sm:$0xff]
  %v85 = vld [vmem:[%s83 + $0x8] sm:$0xff]
  %v86 = vld [vmem:[%s83 + $0x10] sm:$0xff]
  %v87 = vld [vmem:[%s83 + $0x18] sm:$0xff]
  %88 = vmatprep.subr.mxu0 0.0
  %89 = vmatpush1.xpose.msra.mxu0 %v51
  %90 = vmatprep.subr.mxu0 0.0
  %91 = vmatpush1.xpose.msra.mxu0 %v52
  %92 = vmatprep.subr.mxu0 0.0
  %93 = vmatpush1.xpose.msra.mxu0 %v53
  %94 = vmatprep.subr.mxu0 0.0
  %95 = vmatpush1.xpose.msra.mxu0 %v54
  %96 = vmatprep.subr.mxu0 0.0
  %97 = vmatpush1.xpose.msra.mxu0 %v55
  %98 = vmatprep.subr.mxu0 0.0
  %99 = vmatpush1.xpose.msra.mxu0 %v56
  %100 = vmatprep.subr.mxu0 0.0
  %101 = vmatpush1.xpose.msra.mxu0 %v57
  %102 = vmatprep.subr.mxu0 0.0
  %103 = vmatpush1.xpose.msra.mxu0 %v58
  %104 = vmatprep.subr.mxu0 0.0
  %105 = vmatpush1.xpose.msra.mxu0 %v59
  %106 = vmatprep.subr.mxu0 0.0
  %107 = vmatpush1.xpose.msra.mxu0 %v60
  %108 = vmatprep.subr.mxu0 0.0
  %109 = vmatpush1.xpose.msra.mxu0 %v61
  %110 = vmatprep.subr.mxu0 0.0
  %111 = vmatpush1.xpose.msra.mxu0 %v62
  %112 = vmatprep.subr.mxu0 0.0
  %113 = vmatpush1.xpose.msra.mxu0 %v63
  %114 = vmatprep.subr.mxu0 0.0
  %115 = vmatpush1.xpose.msra.mxu0 %v64
  %116 = vmatprep.subr.mxu0 0.0
  %117 = vmatpush1.xpose.msra.mxu0 %v65
  %118 = vmatprep.subr.mxu0 0.0
  %119 = vmatpush1.xpose.msra.mxu0 %v66
  %120 = vmatprep.subr.mxu0 0.0
  %121 = vmatpush1.xpose.msra.mxu0 %v67
  %122 = vmatprep.subr.mxu0 0.0
  %123 = vmatpush1.xpose.msra.mxu0 %v68
  %124 = vmatprep.subr.mxu0 0.0
  %125 = vmatpush1.xpose.msra.mxu0 %v69
  %126 = vmatprep.subr.mxu0 0.0
  %127 = vmatpush1.xpose.msra.mxu0 %v70
  %128 = vmatprep.subr.mxu0 0.0
  %129 = vmatpush1.xpose.msra.mxu0 %v71
  %130 = vmatprep.subr.mxu0 0.0
  %131 = vmatpush1.xpose.msra.mxu0 %v72
  %132 = vmatprep.subr.mxu0 0.0
  %133 = vmatpush1.xpose.msra.mxu0 %v73
  %134 = vmatprep.subr.mxu0 0.0
  %135 = vmatpush1.xpose.msra.mxu0 %v74
  %136 = vmatprep.subr.mxu0 0.0
  %137 = vmatpush1.xpose.msra.mxu0 %v75
  %138 = vmatprep.subr.mxu0 0.0
  %139 = vmatpush1.xpose.msra.mxu0 %v76
  %140 = vmatprep.subr.mxu0 0.0
  %141 = vmatpush1.xpose.msra.mxu0 %v77
  %142 = vmatprep.subr.mxu0 0.0
  %143 = vmatpush1.xpose.msra.mxu0 %v78
  %144 = vmatprep.subr.mxu0 0.0
  %145 = vmatpush1.xpose.msra.mxu0 %v79
  %146 = vmatprep.subr.mxu0 0.0
  %147 = vmatpush1.xpose.msra.mxu0 %v80
  %148 = vmatprep.subr.mxu0 0.0
  %149 = vmatpush1.xpose.msra.mxu0 %v81
  %150 = vmatprep.subr.mxu0 0.0
  %151 = vmatpush1.xpose.msra.mxu0 %v82
  %152 = vmatprep.mubr.f32.mxu0 0.0
  %153 = vmatmul.mubr.f32.gmra.mrb[0].mxu0 %v84
  %v154 = vpop.f32.mrb[0].mxu0
  %v155 = vadd.f32 0.0, %v154
  %v156 = vpop.f32.mrb[0].mxu0
  %v157 = vadd.f32 0.0, %v156
  %158 = vmatprep.mubr.f32.mxu0 0.0
  %159 = vmatmul.mubr.f32.gmra.mrb[0].mxu0 %v85
  %v160 = vpop.f32.mrb[0].mxu0
  %v161 = vadd.f32 0.0, %v160
  %v162 = vpop.f32.mrb[0].mxu0
  %v163 = vadd.f32 0.0, %v162
  %164 = vmatprep.mubr.f32.mxu0 0.0
  %165 = vmatmul.mubr.f32.gmra.mrb[0].mxu0 %v86
  %v166 = vpop.f32.mrb[0].mxu0
  %v167 = vadd.f32 0.0, %v166
  %v168 = vpop.f32.mrb[0].mxu0
  %v169 = vadd.f32 0.0, %v168
  %170 = vmatprep.mubr.f32.mxu0 0.0
  %171 = vmatmul.mubr.f32.gmra.mrb[0].mxu0 %v87
  %v172 = vpop.f32.mrb[0].mxu0
  %v173 = vadd.f32 0.0, %v172
  %v174 = vpop.f32.mrb[0].mxu0
  %v175 = vadd.f32 0.0, %v174
  %176 = vdwg.mxu0
  %177 = vmatprep.subr.mxu0 0.0
  %178 = vmatpush1.xpose.msra.mxu0 %v14
  %179 = vmatprep.subr.mxu0 0.0
  %180 = vmatpush1.xpose.msra.mxu0 %v15
  %181 = vmatprep.subr.mxu0 0.0
  %182 = vmatpush1.xpose.msra.mxu0 %v16
  %183 = vmatprep.subr.mxu0 0.0
  %184 = vmatpush1.xpose.msra.mxu0 %v17
  %185 = vmatprep.subr.mxu0 0.0
  %186 = vmatpush1.xpose.msra.mxu0 %v18
  %187 = vmatprep.subr.mxu0 0.0
  %188 = vmatpush1.xpose.msra.mxu0 %v19
  %189 = vmatprep.subr.mxu0 0.0
  %190 = vmatpush1.xpose.msra.mxu0 %v20
  %191 = vmatprep.subr.mxu0 0.0
  %192 = vmatpush1.xpose.msra.mxu0 %v21
  %193 = vmatprep.subr.mxu0 0.0
  %194 = vmatpush1.xpose.msra.mxu0 %v22
  %195 = vmatprep.subr.mxu0 0.0
  %196 = vmatpush1.xpose.msra.mxu0 %v23
  %197 = vmatprep.subr.mxu0 0.0
  %198 = vmatpush1.xpose.msra.mxu0 %v24
  %199 = vmatprep.subr.mxu0 0.0
  %200 = vmatpush1.xpose.msra.mxu0 %v25
  %201 = vmatprep.subr.mxu0 0.0
  %202 = vmatpush1.xpose.msra.mxu0 %v26
  %203 = vmatprep.subr.mxu0 0.0
  %204 = vmatpush1.xpose.msra.mxu0 %v27
  %205 = vmatprep.subr.mxu0 0.0
  %206 = vmatpush1.xpose.msra.mxu0 %v28
  %207 = vmatprep.subr.mxu0 0.0
  %208 = vmatpush1.xpose.msra.mxu0 %v29
  %209 = vmatprep.subr.mxu0 0.0
  %210 = vmatpush1.xpose.msra.mxu0 %v30
  %211 = vmatprep.subr.mxu0 0.0
  %212 = vmatpush1.xpose.msra.mxu0 %v31
  %213 = vmatprep.subr.mxu0 0.0
  %214 = vmatpush1.xpose.msra.mxu0 %v32
  %215 = vmatprep.subr.mxu0 0.0
  %216 = vmatpush1.xpose.msra.mxu0 %v33
  %217 = vmatprep.subr.mxu0 0.0
  %218 = vmatpush1.xpose.msra.mxu0 %v34
  %219 = vmatprep.subr.mxu0 0.0
  %220 = vmatpush1.xpose.msra.mxu0 %v35
  %221 = vmatprep.subr.mxu0 0.0
  %222 = vmatpush1.xpose.msra.mxu0 %v36
  %223 = vmatprep.subr.mxu0 0.0
  %224 = vmatpush1.xpose.msra.mxu0 %v37
  %225 = vmatprep.subr.mxu0 0.0
  %226 = vmatpush1.xpose.msra.mxu0 %v38
  %227 = vmatprep.subr.mxu0 0.0
  %228 = vmatpush1.xpose.msra.mxu0 %v39
  %229 = vmatprep.subr.mxu0 0.0
  %230 = vmatpush1.xpose.msra.mxu0 %v40
  %231 = vmatprep.subr.mxu0 0.0
  %232 = vmatpush1.xpose.msra.mxu0 %v41
  %233 = vmatprep.subr.mxu0 0.0
  %234 = vmatpush1.xpose.msra.mxu0 %v42
  %235 = vmatprep.subr.mxu0 0.0
  %236 = vmatpush1.xpose.msra.mxu0 %v43
  %237 = vmatprep.subr.mxu0 0.0
  %238 = vmatpush1.xpose.msra.mxu0 %v44
  %239 = vmatprep.subr.mxu0 0.0
  %240 = vmatpush1.xpose.msra.mxu0 %v45
  %241 = vmatprep.mubr.f32.mxu0 0.0
  %242 = vmatmul.mubr.f32.gmra.mrb[0].mxu0 %v46
  %v243 = vpop.f32.mrb[0].mxu0
  %v244 = vadd.f32 %v155, %v243
  %v245 = vpop.f32.mrb[0].mxu0
  %v246 = vadd.f32 %v157, %v245
  %247 = vmatprep.mubr.f32.mxu0 0.0
  %248 = vmatmul.mubr.f32.gmra.mrb[0].mxu0 %v47
  %v249 = vpop.f32.mrb[0].mxu0
  %v250 = vadd.f32 %v161, %v249
  %v251 = vpop.f32.mrb[0].mxu0
  %v252 = vadd.f32 %v163, %v251
  %253 = vmatprep.mubr.f32.mxu0 0.0
  %254 = vmatmul.mubr.f32.gmra.mrb[0].mxu0 %v48
  %v255 = vpop.f32.mrb[0].mxu0
  %v256 = vadd.f32 %v167, %v255
  %v257 = vpop.f32.mrb[0].mxu0
  %v258 = vadd.f32 %v169, %v257
  %259 = vmatprep.mubr.f32.mxu0 0.0
  %260 = vmatmul.mubr.f32.gmra.mrb[0].mxu0 %v49
  %v261 = vpop.f32.mrb[0].mxu0
  %v262 = vadd.f32 %v173, %v261
  %v263 = vpop.f32.mrb[0].mxu0
  %v264 = vadd.f32 %v175, %v263
  %265 = vdwg.mxu0
  %v266 = vld [vmem:[%s0 + $0x1] sm:$0xff]
  %v267 = vld [vmem:[%s0 + $0x9] sm:$0xff]
  %v268 = vld [vmem:[%s0 + $0x19] sm:$0xff]
  %v269 = vld [vmem:[%s0 + $0x21] sm:$0xff]
  %v270 = vld [vmem:[%s0 + $0x31] sm:$0xff]
  %v271 = vld [vmem:[%s0 + $0x39] sm:$0xff]
  %v272 = vld [vmem:[%s0 + $0x49] sm:$0xff]
  %v273 = vld [vmem:[%s0 + $0x51] sm:$0xff]
  %v274 = vld [vmem:[%s0 + $0x61] sm:$0xff]
  %v275 = vld [vmem:[%s0 + $0x69] sm:$0xff]
  %v276 = vld [vmem:[%s0 + $0x79] sm:$0xff]
  %v277 = vld [vmem:[%s0 + $0x81] sm:$0xff]
  %v278 = vld [vmem:[%s0 + $0x91] sm:$0xff]
  %v279 = vld [vmem:[%s0 + $0x99] sm:$0xff]
  %v280 = vld [vmem:[%s0 + $0xa9] sm:$0xff]
  %v281 = vld [vmem:[%s0 + $0xb1] sm:$0xff]
  %v282 = vld [vmem:[%s0 + $0xc1] sm:$0xff]
  %v283 = vld [vmem:[%s0 + $0xc9] sm:$0xff]
  %v284 = vld [vmem:[%s0 + $0xd9] sm:$0xff]
  %v285 = vld [vmem:[%s0 + $0xe1] sm:$0xff]
  %v286 = vld [vmem:[%s0 + $0xf1] sm:$0xff]
  %v287 = vld [vmem:[%s0 + $0xf9] sm:$0xff]
  %v288 = vld [vmem:[%s0 + $0x109] sm:$0xff]
  %v289 = vld [vmem:[%s0 + $0x111] sm:$0xff]
  %v290 = vld [vmem:[%s0 + $0x121] sm:$0xff]
  %v291 = vld [vmem:[%s0 + $0x129] sm:$0xff]
  %v292 = vld [vmem:[%s0 + $0x139] sm:$0xff]
  %v293 = vld [vmem:[%s0 + $0x141] sm:$0xff]
  %v294 = vld [vmem:[%s0 + $0x151] sm:$0xff]
  %v295 = vld [vmem:[%s0 + $0x159] sm:$0xff]
  %v296 = vld [vmem:[%s0 + $0x169] sm:$0xff]
  %v297 = vld [vmem:[%s0 + $0x171] sm:$0xff]
  %s298 = scalar_lea.vmem %s1, 64
  %v299 = vld [vmem:[%s298] sm:$0xff]
  %v300 = vld [vmem:[%s298 + $0x8] sm:$0xff]
  %v301 = vld [vmem:[%s298 + $0x10] sm:$0xff]
  %v302 = vld [vmem:[%s298 + $0x18] sm:$0xff]
  %303 = vmatprep.subr.mxu0 0.0
  %304 = vmatpush1.xpose.msra.mxu0 %v266
  %305 = vmatprep.subr.mxu0 0.0
  %306 = vmatpush1.xpose.msra.mxu0 %v267
  %307 = vmatprep.subr.mxu0 0.0
  %308 = vmatpush1.xpose.msra.mxu0 %v268
  %309 = vmatprep.subr.mxu0 0.0
  %310 = vmatpush1.xpose.msra.mxu0 %v269
  %311 = vmatprep.subr.mxu0 0.0
  %312 = vmatpush1.xpose.msra.mxu0 %v270
  %313 = vmatprep.subr.mxu0 0.0
  %314 = vmatpush1.xpose.msra.mxu0 %v271
  %315 = vmatprep.subr.mxu0 0.0
  %316 = vmatpush1.xpose.msra.mxu0 %v272
  %317 = vmatprep.subr.mxu0 0.0
  %318 = vmatpush1.xpose.msra.mxu0 %v273
  %319 = vmatprep.subr.mxu0 0.0
  %320 = vmatpush1.xpose.msra.mxu0 %v274
  %321 = vmatprep.subr.mxu0 0.0
  %322 = vmatpush1.xpose.msra.mxu0 %v275
  %323 = vmatprep.subr.mxu0 0.0
  %324 = vmatpush1.xpose.msra.mxu0 %v276
  %325 = vmatprep.subr.mxu0 0.0
  %326 = vmatpush1.xpose.msra.mxu0 %v277
  %327 = vmatprep.subr.mxu0 0.0
  %328 = vmatpush1.xpose.msra.mxu0 %v278
  %329 = vmatprep.subr.mxu0 0.0
  %330 = vmatpush1.xpose.msra.mxu0 %v279
  %331 = vmatprep.subr.mxu0 0.0
  %332 = vmatpush1.xpose.msra.mxu0 %v280
  %333 = vmatprep.subr.mxu0 0.0
  %334 = vmatpush1.xpose.msra.mxu0 %v281
  %335 = vmatprep.subr.mxu0 0.0
  %336 = vmatpush1.xpose.msra.mxu0 %v282
  %337 = vmatprep.subr.mxu0 0.0
  %338 = vmatpush1.xpose.msra.mxu0 %v283
  %339 = vmatprep.subr.mxu0 0.0
  %340 = vmatpush1.xpose.msra.mxu0 %v284
  %341 = vmatprep.subr.mxu0 0.0
  %342 = vmatpush1.xpose.msra.mxu0 %v285
  %343 = vmatprep.subr.mxu0 0.0
  %344 = vmatpush1.xpose.msra.mxu0 %v286
  %345 = vmatprep.subr.mxu0 0.0
  %346 = vmatpush1.xpose.msra.mxu0 %v287
  %347 = vmatprep.subr.mxu0 0.0
  %348 = vmatpush1.xpose.msra.mxu0 %v288
  %349 = vmatprep.subr.mxu0 0.0
  %350 = vmatpush1.xpose.msra.mxu0 %v289
  %351 = vmatprep.subr.mxu0 0.0
  %352 = vmatpush1.xpose.msra.mxu0 %v290
  %353 = vmatprep.subr.mxu0 0.0
  %354 = vmatpush1.xpose.msra.mxu0 %v291
  %355 = vmatprep.subr.mxu0 0.0
  %356 = vmatpush1.xpose.msra.mxu0 %v292
  %357 = vmatprep.subr.mxu0 0.0
  %358 = vmatpush1.xpose.msra.mxu0 %v293
  %359 = vmatprep.subr.mxu0 0.0
  %360 = vmatpush1.xpose.msra.mxu0 %v294
  %361 = vmatprep.subr.mxu0 0.0
  %362 = vmatpush1.xpose.msra.mxu0 %v295
  %363 = vmatprep.subr.mxu0 0.0
  %364 = vmatpush1.xpose.msra.mxu0 %v296
  %365 = vmatprep.subr.mxu0 0.0
  %366 = vmatpush1.xpose.msra.mxu0 %v297
  %367 = vmatprep.mubr.f32.mxu0 0.0
  %368 = vmatmul.mubr.f32.gmra.mrb[0].mxu0 %v299
  %v369 = vpop.f32.mrb[0].mxu0
  %v370 = vadd.f32 0.0, %v369
  %v371 = vpop.f32.mrb[0].mxu0
  %v372 = vadd.f32 0.0, %v371
  %373 = vmatprep.mubr.f32.mxu0 0.0
  %374 = vmatmul.mubr.f32.gmra.mrb[0].mxu0 %v300
  %v375 = vpop.f32.mrb[0].mxu0
  %v376 = vadd.f32 0.0, %v375
  %v377 = vpop.f32.mrb[0].mxu0
  %v378 = vadd.f32 0.0, %v377
  %379 = vmatprep.mubr.f32.mxu0 0.0
  %380 = vmatmul.mubr.f32.gmra.mrb[0].mxu0 %v301
  %v381 = vpop.f32.mrb[0].mxu0
  %v382 = vadd.f32 0.0, %v381
  %v383 = vpop.f32.mrb[0].mxu0
  %v384 = vadd.f32 0.0, %v383
  %385 = vmatprep.mubr.f32.mxu0 0.0
  %386 = vmatmul.mubr.f32.gmra.mrb[0].mxu0 %v302
  %v387 = vpop.f32.mrb[0].mxu0
  %v388 = vadd.f32 0.0, %v387
  %v389 = vpop.f32.mrb[0].mxu0
  %v390 = vadd.f32 0.0, %v389
  %391 = vdwg.mxu0
  %v392 = vadd.f32 %v244, %v370
  %v393 = vadd.f32 %v246, %v372
  %v394 = vadd.f32 %v250, %v376
  %v395 = vadd.f32 %v252, %v378
  %v396 = vadd.f32 %v256, %v382
  %v397 = vadd.f32 %v258, %v384
  %v398 = vadd.f32 %v262, %v388
  %v399 = vadd.f32 %v264, %v390
  %v400 = vld [vmem:[%s50 + $0x1] sm:$0xff]
  %v401 = vld [vmem:[%s50 + $0x9] sm:$0xff]
  %v402 = vld [vmem:[%s50 + $0x19] sm:$0xff]
  %v403 = vld [vmem:[%s50 + $0x21] sm:$0xff]
  %v404 = vld [vmem:[%s50 + $0x31] sm:$0xff]
  %v405 = vld [vmem:[%s50 + $0x39] sm:$0xff]
  %v406 = vld [vmem:[%s50 + $0x49] sm:$0xff]
  %v407 = vld [vmem:[%s50 + $0x51] sm:$0xff]
  %v408 = vld [vmem:[%s50 + $0x61] sm:$0xff]
  %v409 = vld [vmem:[%s50 + $0x69] sm:$0xff]
  %v410 = vld [vmem:[%s50 + $0x79] sm:$0xff]
  %v411 = vld [vmem:[%s50 + $0x81] sm:$0xff]
  %v412 = vld [vmem:[%s50 + $0x91] sm:$0xff]
  %v413 = vld [vmem:[%s50 + $0x99] sm:$0xff]
  %v414 = vld [vmem:[%s50 + $0xa9] sm:$0xff]
  %v415 = vld [vmem:[%s50 + $0xb1] sm:$0xff]
  %v416 = vld [vmem:[%s50 + $0xc1] sm:$0xff]
  %v417 = vld [vmem:[%s50 + $0xc9] sm:$0xff]
  %v418 = vld [vmem:[%s50 + $0xd9] sm:$0xff]
  %v419 = vld [vmem:[%s50 + $0xe1] sm:$0xff]
  %v420 = vld [vmem:[%s50 + $0xf1] sm:$0xff]
  %v421 = vld [vmem:[%s50 + $0xf9] sm:$0xff]
  %v422 = vld [vmem:[%s50 + $0x109] sm:$0xff]
  %v423 = vld [vmem:[%s50 + $0x111] sm:$0xff]
  %v424 = vld [vmem:[%s50 + $0x121] sm:$0xff]
  %v425 = vld [vmem:[%s50 + $0x129] sm:$0xff]
  %v426 = vld [vmem:[%s50 + $0x139] sm:$0xff]
  %v427 = vld [vmem:[%s50 + $0x141] sm:$0xff]
  %v428 = vld [vmem:[%s50 + $0x151] sm:$0xff]
  %v429 = vld [vmem:[%s50 + $0x159] sm:$0xff]
  %v430 = vld [vmem:[%s50 + $0x169] sm:$0xff]
  %v431 = vld [vmem:[%s50 + $0x171] sm:$0xff]
  %s432 = scalar_lea.vmem %s1, 96
  %v433 = vld [vmem:[%s432] sm:$0xff]
  %v434 = vld [vmem:[%s432 + $0x8] sm:$0xff]
  %v435 = vld [vmem:[%s432 + $0x10] sm:$0xff]
  %v436 = vld [vmem:[%s432 + $0x18] sm:$0xff]
  %437 = vmatprep.subr.mxu0 0.0
  %438 = vmatpush1.xpose.msra.mxu0 %v400
  %439 = vmatprep.subr.mxu0 0.0
  %440 = vmatpush1.xpose.msra.mxu0 %v401
  %441 = vmatprep.subr.mxu0 0.0
  %442 = vmatpush1.xpose.msra.mxu0 %v402
  %443 = vmatprep.subr.mxu0 0.0
  %444 = vmatpush1.xpose.msra.mxu0 %v403
  %445 = vmatprep.subr.mxu0 0.0
  %446 = vmatpush1.xpose.msra.mxu0 %v404
  %447 = vmatprep.subr.mxu0 0.0
  %448 = vmatpush1.xpose.msra.mxu0 %v405
  %449 = vmatprep.subr.mxu0 0.0
  %450 = vmatpush1.xpose.msra.mxu0 %v406
  %451 = vmatprep.subr.mxu0 0.0
  %452 = vmatpush1.xpose.msra.mxu0 %v407
  %453 = vmatprep.subr.mxu0 0.0
  %454 = vmatpush1.xpose.msra.mxu0 %v408
  %455 = vmatprep.subr.mxu0 0.0
  %456 = vmatpush1.xpose.msra.mxu0 %v409
  %457 = vmatprep.subr.mxu0 0.0
  %458 = vmatpush1.xpose.msra.mxu0 %v410
  %459 = vmatprep.subr.mxu0 0.0
  %460 = vmatpush1.xpose.msra.mxu0 %v411
  %461 = vmatprep.subr.mxu0 0.0
  %462 = vmatpush1.xpose.msra.mxu0 %v412
  %463 = vmatprep.subr.mxu0 0.0
  %464 = vmatpush1.xpose.msra.mxu0 %v413
  %465 = vmatprep.subr.mxu0 0.0
  %466 = vmatpush1.xpose.msra.mxu0 %v414
  %467 = vmatprep.subr.mxu0 0.0
  %468 = vmatpush1.xpose.msra.mxu0 %v415
  %469 = vmatprep.subr.mxu0 0.0
  %470 = vmatpush1.xpose.msra.mxu0 %v416
  %471 = vmatprep.subr.mxu0 0.0
  %472 = vmatpush1.xpose.msra.mxu0 %v417
  %473 = vmatprep.subr.mxu0 0.0
  %474 = vmatpush1.xpose.msra.mxu0 %v418
  %475 = vmatprep.subr.mxu0 0.0
  %476 = vmatpush1.xpose.msra.mxu0 %v419
  %477 = vmatprep.subr.mxu0 0.0
  %478 = vmatpush1.xpose.msra.mxu0 %v420
  %479 = vmatprep.subr.mxu0 0.0
  %480 = vmatpush1.xpose.msra.mxu0 %v421
  %481 = vmatprep.subr.mxu0 0.0
  %482 = vmatpush1.xpose.msra.mxu0 %v422
  %483 = vmatprep.subr.mxu0 0.0
  %484 = vmatpush1.xpose.msra.mxu0 %v423
  %485 = vmatprep.subr.mxu0 0.0
  %486 = vmatpush1.xpose.msra.mxu0 %v424
  %487 = vmatprep.subr.mxu0 0.0
  %488 = vmatpush1.xpose.msra.mxu0 %v425
  %489 = vmatprep.subr.mxu0 0.0
  %490 = vmatpush1.xpose.msra.mxu0 %v426
  %491 = vmatprep.subr.mxu0 0.0
  %492 = vmatpush1.xpose.msra.mxu0 %v427
  %493 = vmatprep.subr.mxu0 0.0
  %494 = vmatpush1.xpose.msra.mxu0 %v428
  %495 = vmatprep.subr.mxu0 0.0
  %496 = vmatpush1.xpose.msra.mxu0 %v429
  %497 = vmatprep.subr.mxu0 0.0
  %498 = vmatpush1.xpose.msra.mxu0 %v430
  %499 = vmatprep.subr.mxu0 0.0
  %500 = vmatpush1.xpose.msra.mxu0 %v431
  %501 = vmatprep.mubr.f32.mxu0 0.0
  %502 = vmatmul.mubr.f32.gmra.mrb[0].mxu0 %v433
  %v503 = vpop.f32.mrb[0].mxu0
  %v504 = vadd.f32 0.0, %v503
  %v505 = vpop.f32.mrb[0].mxu0
  %v506 = vadd.f32 0.0, %v505
  %507 = vmatprep.mubr.f32.mxu0 0.0
  %508 = vmatmul.mubr.f32.gmra.mrb[0].mxu0 %v434
  %v509 = vpop.f32.mrb[0].mxu0
  %v510 = vadd.f32 0.0, %v509
  %v511 = vpop.f32.mrb[0].mxu0
  %v512 = vadd.f32 0.0, %v511
  %513 = vmatprep.mubr.f32.mxu0 0.0
  %514 = vmatmul.mubr.f32.gmra.mrb[0].mxu0 %v435
  %v515 = vpop.f32.mrb[0].mxu0
  %v516 = vadd.f32 0.0, %v515
  %v517 = vpop.f32.mrb[0].mxu0
  %v518 = vadd.f32 0.0, %v517
  %519 = vmatprep.mubr.f32.mxu0 0.0
  %520 = vmatmul.mubr.f32.gmra.mrb[0].mxu0 %v436
  %v521 = vpop.f32.mrb[0].mxu0
  %v522 = vadd.f32 0.0, %v521
  %v523 = vpop.f32.mrb[0].mxu0
  %v524 = vadd.f32 0.0, %v523
  %525 = vdwg.mxu0
  %v526 = vadd.f32 %v392, %v504
  %v527 = vadd.f32 %v393, %v506
  %v528 = vadd.f32 %v394, %v510
  %v529 = vadd.f32 %v395, %v512
  %v530 = vadd.f32 %v396, %v516
  %v531 = vadd.f32 %v397, %v518
  %v532 = vadd.f32 %v398, %v522
  %v533 = vadd.f32 %v399, %v524
  %v534 = vld [vmem:[%s0 + $0x2] sm:$0xff]
  %v535 = vld [vmem:[%s0 + $0xa] sm:$0xff]
  %v536 = vld [vmem:[%s0 + $0x1a] sm:$0xff]
  %v537 = vld [vmem:[%s0 + $0x22] sm:$0xff]
  %v538 = vld [vmem:[%s0 + $0x32] sm:$0xff]
  %v539 = vld [vmem:[%s0 + $0x3a] sm:$0xff]
  %v540 = vld [vmem:[%s0 + $0x4a] sm:$0xff]
  %v541 = vld [vmem:[%s0 + $0x52] sm:$0xff]
  %v542 = vld [vmem:[%s0 + $0x62] sm:$0xff]
  %v543 = vld [vmem:[%s0 + $0x6a] sm:$0xff]
  %v544 = vld [vmem:[%s0 + $0x7a] sm:$0xff]
  %v545 = vld [vmem:[%s0 + $0x82] sm:$0xff]
  %v546 = vld [vmem:[%s0 + $0x92] sm:$0xff]
  %v547 = vld [vmem:[%s0 + $0x9a] sm:$0xff]
  %v548 = vld [vmem:[%s0 + $0xaa] sm:$0xff]
  %v549 = vld [vmem:[%s0 + $0xb2] sm:$0xff]
  %v550 = vld [vmem:[%s0 + $0xc2] sm:$0xff]
  %v551 = vld [vmem:[%s0 + $0xca] sm:$0xff]
  %v552 = vld [vmem:[%s0 + $0xda] sm:$0xff]
  %v553 = vld [vmem:[%s0 + $0xe2] sm:$0xff]
  %v554 = vld [vmem:[%s0 + $0xf2] sm:$0xff]
  %v555 = vld [vmem:[%s0 + $0xfa] sm:$0xff]
  %v556 = vld [vmem:[%s0 + $0x10a] sm:$0xff]
  %v557 = vld [vmem:[%s0 + $0x112] sm:$0xff]
  %v558 = vld [vmem:[%s0 + $0x122] sm:$0xff]
  %v559 = vld [vmem:[%s0 + $0x12a] sm:$0xff]
  %v560 = vld [vmem:[%s0 + $0x13a] sm:$0xff]
  %v561 = vld [vmem:[%s0 + $0x142] sm:$0xff]
  %v562 = vld [vmem:[%s0 + $0x152] sm:$0xff]
  %v563 = vld [vmem:[%s0 + $0x15a] sm:$0xff]
  %v564 = vld [vmem:[%s0 + $0x16a] sm:$0xff]
  %v565 = vld [vmem:[%s0 + $0x172] sm:$0xff]
  %s566 = scalar_lea.vmem %s1, 128
  %v567 = vld [vmem:[%s566] sm:$0xff]
  %v568 = vld [vmem:[%s566 + $0x8] sm:$0xff]
  %v569 = vld [vmem:[%s566 + $0x10] sm:$0xff]
  %v570 = vld [vmem:[%s566 + $0x18] sm:$0xff]
  %571 = vmatprep.subr.mxu0 0.0
  %572 = vmatpush1.xpose.msra.mxu0 %v534
  %573 = vmatprep.subr.mxu0 0.0
  %574 = vmatpush1.xpose.msra.mxu0 %v535
  %575 = vmatprep.subr.mxu0 0.0
  %576 = vmatpush1.xpose.msra.mxu0 %v536
  %577 = vmatprep.subr.mxu0 0.0
  %578 = vmatpush1.xpose.msra.mxu0 %v537
  %579 = vmatprep.subr.mxu0 0.0
  %580 = vmatpush1.xpose.msra.mxu0 %v538
  %581 = vmatprep.subr.mxu0 0.0
  %582 = vmatpush1.xpose.msra.mxu0 %v539
  %583 = vmatprep.subr.mxu0 0.0
  %584 = vmatpush1.xpose.msra.mxu0 %v540
  %585 = vmatprep.subr.mxu0 0.0
  %586 = vmatpush1.xpose.msra.mxu0 %v541
  %587 = vmatprep.subr.mxu0 0.0
  %588 = vmatpush1.xpose.msra.mxu0 %v542
  %589 = vmatprep.subr.mxu0 0.0
  %590 = vmatpush1.xpose.msra.mxu0 %v543
  %591 = vmatprep.subr.mxu0 0.0
  %592 = vmatpush1.xpose.msra.mxu0 %v544
  %593 = vmatprep.subr.mxu0 0.0
  %594 = vmatpush1.xpose.msra.mxu0 %v545
  %595 = vmatprep.subr.mxu0 0.0
  %596 = vmatpush1.xpose.msra.mxu0 %v546
  %597 = vmatprep.subr.mxu0 0.0
  %598 = vmatpush1.xpose.msra.mxu0 %v547
  %599 = vmatprep.subr.mxu0 0.0
  %600 = vmatpush1.xpose.msra.mxu0 %v548
  %601 = vmatprep.subr.mxu0 0.0
  %602 = vmatpush1.xpose.msra.mxu0 %v549
  %603 = vmatprep.subr.mxu0 0.0
  %604 = vmatpush1.xpose.msra.mxu0 %v550
  %605 = vmatprep.subr.mxu0 0.0
  %606 = vmatpush1.xpose.msra.mxu0 %v551
  %607 = vmatprep.subr.mxu0 0.0
  %608 = vmatpush1.xpose.msra.mxu0 %v552
  %609 = vmatprep.subr.mxu0 0.0
  %610 = vmatpush1.xpose.msra.mxu0 %v553
  %611 = vmatprep.subr.mxu0 0.0
  %612 = vmatpush1.xpose.msra.mxu0 %v554
  %613 = vmatprep.subr.mxu0 0.0
  %614 = vmatpush1.xpose.msra.mxu0 %v555
  %615 = vmatprep.subr.mxu0 0.0
  %616 = vmatpush1.xpose.msra.mxu0 %v556
  %617 = vmatprep.subr.mxu0 0.0
  %618 = vmatpush1.xpose.msra.mxu0 %v557
  %619 = vmatprep.subr.mxu0 0.0
  %620 = vmatpush1.xpose.msra.mxu0 %v558
  %621 = vmatprep.subr.mxu0 0.0
  %622 = vmatpush1.xpose.msra.mxu0 %v559
  %623 = vmatprep.subr.mxu0 0.0
  %624 = vmatpush1.xpose.msra.mxu0 %v560
  %625 = vmatprep.subr.mxu0 0.0
  %626 = vmatpush1.xpose.msra.mxu0 %v561
  %627 = vmatprep.subr.mxu0 0.0
  %628 = vmatpush1.xpose.msra.mxu0 %v562
  %629 = vmatprep.subr.mxu0 0.0
  %630 = vmatpush1.xpose.msra.mxu0 %v563
  %631 = vmatprep.subr.mxu0 0.0
  %632 = vmatpush1.xpose.msra.mxu0 %v564
  %633 = vmatprep.subr.mxu0 0.0
  %634 = vmatpush1.xpose.msra.mxu0 %v565
  %635 = vmatprep.mubr.f32.mxu0 0.0
  %636 = vmatmul.mubr.f32.gmra.mrb[0].mxu0 %v567
  %v637 = vpop.f32.mrb[0].mxu0
  %v638 = vadd.f32 0.0, %v637
  %v639 = vpop.f32.mrb[0].mxu0
  %v640 = vadd.f32 0.0, %v639
  %641 = vmatprep.mubr.f32.mxu0 0.0
  %642 = vmatmul.mubr.f32.gmra.mrb[0].mxu0 %v568
  %v643 = vpop.f32.mrb[0].mxu0
  %v644 = vadd.f32 0.0, %v643
  %v645 = vpop.f32.mrb[0].mxu0
  %v646 = vadd.f32 0.0, %v645
  %647 = vmatprep.mubr.f32.mxu0 0.0
  %648 = vmatmul.mubr.f32.gmra.mrb[0].mxu0 %v569
  %v649 = vpop.f32.mrb[0].mxu0
  %v650 = vadd.f32 0.0, %v649
  %v651 = vpop.f32.mrb[0].mxu0
  %v652 = vadd.f32 0.0, %v651
  %653 = vmatprep.mubr.f32.mxu0 0.0
  %654 = vmatmul.mubr.f32.gmra.mrb[0].mxu0 %v570
  %v655 = vpop.f32.mrb[0].mxu0
  %v656 = vadd.f32 0.0, %v655
  %v657 = vpop.f32.mrb[0].mxu0
  %v658 = vadd.f32 0.0, %v657
  %659 = vdwg.mxu0
  %v660 = vadd.f32 %v526, %v638
  %v661 = vadd.f32 %v527, %v640
  %v662 = vadd.f32 %v528, %v644
  %v663 = vadd.f32 %v529, %v646
  %v664 = vadd.f32 %v530, %v650
  %v665 = vadd.f32 %v531, %v652
  %v666 = vadd.f32 %v532, %v656
  %v667 = vadd.f32 %v533, %v658
  %s668 = scalar_lea.vmem %s0, 864
  %v669 = vld [vmem:[%s668] sm:$0xff]
  %v670 = vld [vmem:[%s668 + $0x8] sm:$0xff]
  %v671 = vld [vmem:[%s668 + $0x18] sm:$0xff]
  %v672 = vld [vmem:[%s668 + $0x20] sm:$0xff]
  %v673 = vld [vmem:[%s668 + $0x30] sm:$0xff]
  %v674 = vld [vmem:[%s668 + $0x38] sm:$0xff]
  %v675 = vld [vmem:[%s668 + $0x48] sm:$0xff]
  %v676 = vld [vmem:[%s668 + $0x50] sm:$0xff]
  %v677 = vld [vmem:[%s668 + $0x60] sm:$0xff]
  %v678 = vld [vmem:[%s668 + $0x68] sm:$0xff]
  %v679 = vld [vmem:[%s668 + $0x78] sm:$0xff]
  %v680 = vld [vmem:[%s668 + $0x80] sm:$0xff]
  %v681 = vld [vmem:[%s668 + $0x90] sm:$0xff]
  %v682 = vld [vmem:[%s668 + $0x98] sm:$0xff]
  %v683 = vld [vmem:[%s668 + $0xa8] sm:$0xff]
  %v684 = vld [vmem:[%s668 + $0xb0] sm:$0xff]
  %v685 = vld [vmem:[%s668 + $0xc0] sm:$0xff]
  %v686 = vld [vmem:[%s668 + $0xc8] sm:$0xff]
  %v687 = vld [vmem:[%s668 + $0xd8] sm:$0xff]
  %v688 = vld [vmem:[%s668 + $0xe0] sm:$0xff]
  %v689 = vld [vmem:[%s668 + $0xf0] sm:$0xff]
  %v690 = vld [vmem:[%s668 + $0xf8] sm:$0xff]
  %v691 = vld [vmem:[%s668 + $0x108] sm:$0xff]
  %v692 = vld [vmem:[%s668 + $0x110] sm:$0xff]
  %v693 = vld [vmem:[%s668 + $0x120] sm:$0xff]
  %v694 = vld [vmem:[%s668 + $0x128] sm:$0xff]
  %v695 = vld [vmem:[%s668 + $0x138] sm:$0xff]
  %v696 = vld [vmem:[%s668 + $0x140] sm:$0xff]
  %v697 = vld [vmem:[%s668 + $0x150] sm:$0xff]
  %v698 = vld [vmem:[%s668 + $0x158] sm:$0xff]
  %v699 = vld [vmem:[%s668 + $0x168] sm:$0xff]
  %v700 = vld [vmem:[%s668 + $0x170] sm:$0xff]
  %s701 = scalar_lea.vmem %s1, 160
  %v702 = vld [vmem:[%s701] sm:$0xff]
  %v703 = vld [vmem:[%s701 + $0x8] sm:$0xff]
  %v704 = vld [vmem:[%s701 + $0x10] sm:$0xff]
  %v705 = vld [vmem:[%s701 + $0x18] sm:$0xff]
  %706 = vmatprep.subr.mxu0 0.0
  %707 = vmatpush1.xpose.msra.mxu0 %v669
  %708 = vmatprep.subr.mxu0 0.0
  %709 = vmatpush1.xpose.msra.mxu0 %v670
  %710 = vmatprep.subr.mxu0 0.0
  %711 = vmatpush1.xpose.msra.mxu0 %v671
  %712 = vmatprep.subr.mxu0 0.0
  %713 = vmatpush1.xpose.msra.mxu0 %v672
  %714 = vmatprep.subr.mxu0 0.0
  %715 = vmatpush1.xpose.msra.mxu0 %v673
  %716 = vmatprep.subr.mxu0 0.0
  %717 = vmatpush1.xpose.msra.mxu0 %v674
  %718 = vmatprep.subr.mxu0 0.0
  %719 = vmatpush1.xpose.msra.mxu0 %v675
  %720 = vmatprep.subr.mxu0 0.0
  %721 = vmatpush1.xpose.msra.mxu0 %v676
  %722 = vmatprep.subr.mxu0 0.0
  %723 = vmatpush1.xpose.msra.mxu0 %v677
  %724 = vmatprep.subr.mxu0 0.0
  %725 = vmatpush1.xpose.msra.mxu0 %v678
  %726 = vmatprep.subr.mxu0 0.0
  %727 = vmatpush1.xpose.msra.mxu0 %v679
  %728 = vmatprep.subr.mxu0 0.0
  %729 = vmatpush1.xpose.msra.mxu0 %v680
  %730 = vmatprep.subr.mxu0 0.0
  %731 = vmatpush1.xpose.msra.mxu0 %v681
  %732 = vmatprep.subr.mxu0 0.0
  %733 = vmatpush1.xpose.msra.mxu0 %v682
  %734 = vmatprep.subr.mxu0 0.0
  %735 = vmatpush1.xpose.msra.mxu0 %v683
  %736 = vmatprep.subr.mxu0 0.0
  %737 = vmatpush1.xpose.msra.mxu0 %v684
  %738 = vmatprep.subr.mxu0 0.0
  %739 = vmatpush1.xpose.msra.mxu0 %v685
  %740 = vmatprep.subr.mxu0 0.0
  %741 = vmatpush1.xpose.msra.mxu0 %v686
  %742 = vmatprep.subr.mxu0 0.0
  %743 = vmatpush1.xpose.msra.mxu0 %v687
  %744 = vmatprep.subr.mxu0 0.0
  %745 = vmatpush1.xpose.msra.mxu0 %v688
  %746 = vmatprep.subr.mxu0 0.0
  %747 = vmatpush1.xpose.msra.mxu0 %v689
  %748 = vmatprep.subr.mxu0 0.0
  %749 = vmatpush1.xpose.msra.mxu0 %v690
  %750 = vmatprep.subr.mxu0 0.0
  %751 = vmatpush1.xpose.msra.mxu0 %v691
  %752 = vmatprep.subr.mxu0 0.0
  %753 = vmatpush1.xpose.msra.mxu0 %v692
  %754 = vmatprep.subr.mxu0 0.0
  %755 = vmatpush1.xpose.msra.mxu0 %v693
  %756 = vmatprep.subr.mxu0 0.0
  %757 = vmatpush1.xpose.msra.mxu0 %v694
  %758 = vmatprep.subr.mxu0 0.0
  %759 = vmatpush1.xpose.msra.mxu0 %v695
  %760 = vmatprep.subr.mxu0 0.0
  %761 = vmatpush1.xpose.msra.mxu0 %v696
  %762 = vmatprep.subr.mxu0 0.0
  %763 = vmatpush1.xpose.msra.mxu0 %v697
  %764 = vmatprep.subr.mxu0 0.0
  %765 = vmatpush1.xpose.msra.mxu0 %v698
  %766 = vmatprep.subr.mxu0 0.0
  %767 = vmatpush1.xpose.msra.mxu0 %v699
  %768 = vmatprep.subr.mxu0 0.0
  %769 = vmatpush1.xpose.msra.mxu0 %v700
  %770 = vmatprep.mubr.f32.mxu0 0.0
  %771 = vmatmul.mubr.f32.gmra.mrb[0].mxu0 %v702
  %v772 = vpop.f32.mrb[0].mxu0
  %v773 = vadd.f32 0.0, %v772
  %v774 = vpop.f32.mrb[0].mxu0
  %v775 = vadd.f32 0.0, %v774
  %776 = vmatprep.mubr.f32.mxu0 0.0
  %777 = vmatmul.mubr.f32.gmra.mrb[0].mxu0 %v703
  %v778 = vpop.f32.mrb[0].mxu0
  %v779 = vadd.f32 0.0, %v778
  %v780 = vpop.f32.mrb[0].mxu0
  %v781 = vadd.f32 0.0, %v780
  %782 = vmatprep.mubr.f32.mxu0 0.0
  %783 = vmatmul.mubr.f32.gmra.mrb[0].mxu0 %v704
  %v784 = vpop.f32.mrb[0].mxu0
  %v785 = vadd.f32 0.0, %v784
  %v786 = vpop.f32.mrb[0].mxu0
  %v787 = vadd.f32 0.0, %v786
  %788 = vmatprep.mubr.f32.mxu0 0.0
  %789 = vmatmul.mubr.f32.gmra.mrb[0].mxu0 %v705
  %v790 = vpop.f32.mrb[0].mxu0
  %v791 = vadd.f32 0.0, %v790
  %v792 = vpop.f32.mrb[0].mxu0
  %v793 = vadd.f32 0.0, %v792
  %794 = vdwg.mxu0
  %v795 = vadd.f32 %v660, %v773
  %v796 = vadd.f32 %v661, %v775
  %v797 = vadd.f32 %v662, %v779
  %v798 = vadd.f32 %v663, %v781
  %v799 = vadd.f32 %v664, %v785
  %v800 = vadd.f32 %v665, %v787
  %v801 = vadd.f32 %v666, %v791
  %v802 = vadd.f32 %v667, %v793
  %s803 = scalar_lea.vmem %s0, 1296
  %v804 = vld [vmem:[%s803] sm:$0xff]
  %v805 = vld [vmem:[%s803 + $0x8] sm:$0xff]
  %v806 = vld [vmem:[%s803 + $0x18] sm:$0xff]
  %v807 = vld [vmem:[%s803 + $0x20] sm:$0xff]
  %v808 = vld [vmem:[%s803 + $0x30] sm:$0xff]
  %v809 = vld [vmem:[%s803 + $0x38] sm:$0xff]
  %v810 = vld [vmem:[%s803 + $0x48] sm:$0xff]
  %v811 = vld [vmem:[%s803 + $0x50] sm:$0xff]
  %v812 = vld [vmem:[%s803 + $0x60] sm:$0xff]
  %v813 = vld [vmem:[%s803 + $0x68] sm:$0xff]
  %v814 = vld [vmem:[%s803 + $0x78] sm:$0xff]
  %v815 = vld [vmem:[%s803 + $0x80] sm:$0xff]
  %v816 = vld [vmem:[%s803 + $0x90] sm:$0xff]
  %v817 = vld [vmem:[%s803 + $0x98] sm:$0xff]
  %v818 = vld [vmem:[%s803 + $0xa8] sm:$0xff]
  %v819 = vld [vmem:[%s803 + $0xb0] sm:$0xff]
  %v820 = vld [vmem:[%s803 + $0xc0] sm:$0xff]
  %v821 = vld [vmem:[%s803 + $0xc8] sm:$0xff]
  %v822 = vld [vmem:[%s803 + $0xd8] sm:$0xff]
  %v823 = vld [vmem:[%s803 + $0xe0] sm:$0xff]
  %v824 = vld [vmem:[%s803 + $0xf0] sm:$0xff]
  %v825 = vld [vmem:[%s803 + $0xf8] sm:$0xff]
  %v826 = vld [vmem:[%s803 + $0x108] sm:$0xff]
  %v827 = vld [vmem:[%s803 + $0x110] sm:$0xff]
  %v828 = vld [vmem:[%s803 + $0x120] sm:$0xff]
  %v829 = vld [vmem:[%s803 + $0x128] sm:$0xff]
  %v830 = vld [vmem:[%s803 + $0x138] sm:$0xff]
  %v831 = vld [vmem:[%s803 + $0x140] sm:$0xff]
  %v832 = vld [vmem:[%s803 + $0x150] sm:$0xff]
  %v833 = vld [vmem:[%s803 + $0x158] sm:$0xff]
  %v834 = vld [vmem:[%s803 + $0x168] sm:$0xff]
  %v835 = vld [vmem:[%s803 + $0x170] sm:$0xff]
  %s836 = scalar_lea.vmem %s1, 192
  %v837 = vld [vmem:[%s836] sm:$0xff]
  %v838 = vld [vmem:[%s836 + $0x8] sm:$0xff]
  %v839 = vld [vmem:[%s836 + $0x10] sm:$0xff]
  %v840 = vld [vmem:[%s836 + $0x18] sm:$0xff]
  %841 = vmatprep.subr.mxu0 0.0
  %842 = vmatpush1.xpose.msra.mxu0 %v804
  %843 = vmatprep.subr.mxu0 0.0
  %844 = vmatpush1.xpose.msra.mxu0 %v805
  %845 = vmatprep.subr.mxu0 0.0
  %846 = vmatpush1.xpose.msra.mxu0 %v806
  %847 = vmatprep.subr.mxu0 0.0
  %848 = vmatpush1.xpose.msra.mxu0 %v807
  %849 = vmatprep.subr.mxu0 0.0
  %850 = vmatpush1.xpose.msra.mxu0 %v808
  %851 = vmatprep.subr.mxu0 0.0
  %852 = vmatpush1.xpose.msra.mxu0 %v809
  %853 = vmatprep.subr.mxu0 0.0
  %854 = vmatpush1.xpose.msra.mxu0 %v810
  %855 = vmatprep.subr.mxu0 0.0
  %856 = vmatpush1.xpose.msra.mxu0 %v811
  %857 = vmatprep.subr.mxu0 0.0
  %858 = vmatpush1.xpose.msra.mxu0 %v812
  %859 = vmatprep.subr.mxu0 0.0
  %860 = vmatpush1.xpose.msra.mxu0 %v813
  %861 = vmatprep.subr.mxu0 0.0
  %862 = vmatpush1.xpose.msra.mxu0 %v814
  %863 = vmatprep.subr.mxu0 0.0
  %864 = vmatpush1.xpose.msra.mxu0 %v815
  %865 = vmatprep.subr.mxu0 0.0
  %866 = vmatpush1.xpose.msra.mxu0 %v816
  %867 = vmatprep.subr.mxu0 0.0
  %868 = vmatpush1.xpose.msra.mxu0 %v817
  %869 = vmatprep.subr.mxu0 0.0
  %870 = vmatpush1.xpose.msra.mxu0 %v818
  %871 = vmatprep.subr.mxu0 0.0
  %872 = vmatpush1.xpose.msra.mxu0 %v819
  %873 = vmatprep.subr.mxu0 0.0
  %874 = vmatpush1.xpose.msra.mxu0 %v820
  %875 = vmatprep.subr.mxu0 0.0
  %876 = vmatpush1.xpose.msra.mxu0 %v821
  %877 = vmatprep.subr.mxu0 0.0
  %878 = vmatpush1.xpose.msra.mxu0 %v822
  %879 = vmatprep.subr.mxu0 0.0
  %880 = vmatpush1.xpose.msra.mxu0 %v823
  %881 = vmatprep.subr.mxu0 0.0
  %882 = vmatpush1.xpose.msra.mxu0 %v824
  %883 = vmatprep.subr.mxu0 0.0
  %884 = vmatpush1.xpose.msra.mxu0 %v825
  %885 = vmatprep.subr.mxu0 0.0
  %886 = vmatpush1.xpose.msra.mxu0 %v826
  %887 = vmatprep.subr.mxu0 0.0
  %888 = vmatpush1.xpose.msra.mxu0 %v827
  %889 = vmatprep.subr.mxu0 0.0
  %890 = vmatpush1.xpose.msra.mxu0 %v828
  %891 = vmatprep.subr.mxu0 0.0
  %892 = vmatpush1.xpose.msra.mxu0 %v829
  %893 = vmatprep.subr.mxu0 0.0
  %894 = vmatpush1.xpose.msra.mxu0 %v830
  %895 = vmatprep.subr.mxu0 0.0
  %896 = vmatpush1.xpose.msra.mxu0 %v831
  %897 = vmatprep.subr.mxu0 0.0
  %898 = vmatpush1.xpose.msra.mxu0 %v832
  %899 = vmatprep.subr.mxu0 0.0
  %900 = vmatpush1.xpose.msra.mxu0 %v833
  %901 = vmatprep.subr.mxu0 0.0
  %902 = vmatpush1.xpose.msra.mxu0 %v834
  %903 = vmatprep.subr.mxu0 0.0
  %904 = vmatpush1.xpose.msra.mxu0 %v835
  %905 = vmatprep.mubr.f32.mxu0 0.0
  %906 = vmatmul.mubr.f32.gmra.mrb[0].mxu0 %v837
  %v907 = vpop.f32.mrb[0].mxu0
  %v908 = vadd.f32 0.0, %v907
  %v909 = vpop.f32.mrb[0].mxu0
  %v910 = vadd.f32 0.0, %v909
  %911 = vmatprep.mubr.f32.mxu0 0.0
  %912 = vmatmul.mubr.f32.gmra.mrb[0].mxu0 %v838
  %v913 = vpop.f32.mrb[0].mxu0
  %v914 = vadd.f32 0.0, %v913
  %v915 = vpop.f32.mrb[0].mxu0
  %v916 = vadd.f32 0.0, %v915
  %917 = vmatprep.mubr.f32.mxu0 0.0
  %918 = vmatmul.mubr.f32.gmra.mrb[0].mxu0 %v839
  %v919 = vpop.f32.mrb[0].mxu0
  %v920 = vadd.f32 0.0, %v919
  %v921 = vpop.f32.mrb[0].mxu0
  %v922 = vadd.f32 0.0, %v921
  %923 = vmatprep.mubr.f32.mxu0 0.0
  %924 = vmatmul.mubr.f32.gmra.mrb[0].mxu0 %v840
  %v925 = vpop.f32.mrb[0].mxu0
  %v926 = vadd.f32 0.0, %v925
  %v927 = vpop.f32.mrb[0].mxu0
  %v928 = vadd.f32 0.0, %v927
  %929 = vdwg.mxu0
  %v930 = vadd.f32 %v795, %v908
  %v931 = vadd.f32 %v796, %v910
  %v932 = vadd.f32 %v797, %v914
  %v933 = vadd.f32 %v798, %v916
  %v934 = vadd.f32 %v799, %v920
  %v935 = vadd.f32 %v800, %v922
  %v936 = vadd.f32 %v801, %v926
  %v937 = vadd.f32 %v802, %v928
  %v938 = vld [vmem:[%s668 + $0x1] sm:$0xff]
  %v939 = vld [vmem:[%s668 + $0x9] sm:$0xff]
  %v940 = vld [vmem:[%s668 + $0x19] sm:$0xff]
  %v941 = vld [vmem:[%s668 + $0x21] sm:$0xff]
  %v942 = vld [vmem:[%s668 + $0x31] sm:$0xff]
  %v943 = vld [vmem:[%s668 + $0x39] sm:$0xff]
  %v944 = vld [vmem:[%s668 + $0x49] sm:$0xff]
  %v945 = vld [vmem:[%s668 + $0x51] sm:$0xff]
  %v946 = vld [vmem:[%s668 + $0x61] sm:$0xff]
  %v947 = vld [vmem:[%s668 + $0x69] sm:$0xff]
  %v948 = vld [vmem:[%s668 + $0x79] sm:$0xff]
  %v949 = vld [vmem:[%s668 + $0x81] sm:$0xff]
  %v950 = vld [vmem:[%s668 + $0x91] sm:$0xff]
  %v951 = vld [vmem:[%s668 + $0x99] sm:$0xff]
  %v952 = vld [vmem:[%s668 + $0xa9] sm:$0xff]
  %v953 = vld [vmem:[%s668 + $0xb1] sm:$0xff]
  %v954 = vld [vmem:[%s668 + $0xc1] sm:$0xff]
  %v955 = vld [vmem:[%s668 + $0xc9] sm:$0xff]
  %v956 = vld [vmem:[%s668 + $0xd9] sm:$0xff]
  %v957 = vld [vmem:[%s668 + $0xe1] sm:$0xff]
  %v958 = vld [vmem:[%s668 + $0xf1] sm:$0xff]
  %v959 = vld [vmem:[%s668 + $0xf9] sm:$0xff]
  %v960 = vld [vmem:[%s668 + $0x109] sm:$0xff]
  %v961 = vld [vmem:[%s668 + $0x111] sm:$0xff]
  %v962 = vld [vmem:[%s668 + $0x121] sm:$0xff]
  %v963 = vld [vmem:[%s668 + $0x129] sm:$0xff]
  %v964 = vld [vmem:[%s668 + $0x139] sm:$0xff]
  %v965 = vld [vmem:[%s668 + $0x141] sm:$0xff]
  %v966 = vld [vmem:[%s668 + $0x151] sm:$0xff]
  %v967 = vld [vmem:[%s668 + $0x159] sm:$0xff]
  %v968 = vld [vmem:[%s668 + $0x169] sm:$0xff]
  %v969 = vld [vmem:[%s668 + $0x171] sm:$0xff]
  %s970 = scalar_lea.vmem %s1, 224
  %v971 = vld [vmem:[%s970] sm:$0xff]
  %v972 = vld [vmem:[%s970 + $0x8] sm:$0xff]
  %v973 = vld [vmem:[%s970 + $0x10] sm:$0xff]
  %v974 = vld [vmem:[%s970 + $0x18] sm:$0xff]
  %975 = vmatprep.subr.mxu0 0.0
  %976 = vmatpush1.xpose.msra.mxu0 %v938
  %977 = vmatprep.subr.mxu0 0.0
  %978 = vmatpush1.xpose.msra.mxu0 %v939
  %979 = vmatprep.subr.mxu0 0.0
  %980 = vmatpush1.xpose.msra.mxu0 %v940
  %981 = vmatprep.subr.mxu0 0.0
  %982 = vmatpush1.xpose.msra.mxu0 %v941
  %983 = vmatprep.subr.mxu0 0.0
  %984 = vmatpush1.xpose.msra.mxu0 %v942
  %985 = vmatprep.subr.mxu0 0.0
  %986 = vmatpush1.xpose.msra.mxu0 %v943
  %987 = vmatprep.subr.mxu0 0.0
  %988 = vmatpush1.xpose.msra.mxu0 %v944
  %989 = vmatprep.subr.mxu0 0.0
  %990 = vmatpush1.xpose.msra.mxu0 %v945
  %991 = vmatprep.subr.mxu0 0.0
  %992 = vmatpush1.xpose.msra.mxu0 %v946
  %993 = vmatprep.subr.mxu0 0.0
  %994 = vmatpush1.xpose.msra.mxu0 %v947
  %995 = vmatprep.subr.mxu0 0.0
  %996 = vmatpush1.xpose.msra.mxu0 %v948
  %997 = vmatprep.subr.mxu0 0.0
  %998 = vmatpush1.xpose.msra.mxu0 %v949
  %999 = vmatprep.subr.mxu0 0.0
  %1000 = vmatpush1.xpose.msra.mxu0 %v950
  %1001 = vmatprep.subr.mxu0 0.0
  %1002 = vmatpush1.xpose.msra.mxu0 %v951
  %1003 = vmatprep.subr.mxu0 0.0
  %1004 = vmatpush1.xpose.msra.mxu0 %v952
  %1005 = vmatprep.subr.mxu0 0.0
  %1006 = vmatpush1.xpose.msra.mxu0 %v953
  %1007 = vmatprep.subr.mxu0 0.0
  %1008 = vmatpush1.xpose.msra.mxu0 %v954
  %1009 = vmatprep.subr.mxu0 0.0
  %1010 = vmatpush1.xpose.msra.mxu0 %v955
  %1011 = vmatprep.subr.mxu0 0.0
  %1012 = vmatpush1.xpose.msra.mxu0 %v956
  %1013 = vmatprep.subr.mxu0 0.0
  %1014 = vmatpush1.xpose.msra.mxu0 %v957
  %1015 = vmatprep.subr.mxu0 0.0
  %1016 = vmatpush1.xpose.msra.mxu0 %v958
  %1017 = vmatprep.subr.mxu0 0.0
  %1018 = vmatpush1.xpose.msra.mxu0 %v959
  %1019 = vmatprep.subr.mxu0 0.0
  %1020 = vmatpush1.xpose.msra.mxu0 %v960
  %1021 = vmatprep.subr.mxu0 0.0
  %1022 = vmatpush1.xpose.msra.mxu0 %v961
  %1023 = vmatprep.subr.mxu0 0.0
  %1024 = vmatpush1.xpose.msra.mxu0 %v962
  %1025 = vmatprep.subr.mxu0 0.0
  %1026 = vmatpush1.xpose.msra.mxu0 %v963
  %1027 = vmatprep.subr.mxu0 0.0
  %1028 = vmatpush1.xpose.msra.mxu0 %v964
  %1029 = vmatprep.subr.mxu0 0.0
  %1030 = vmatpush1.xpose.msra.mxu0 %v965
  %1031 = vmatprep.subr.mxu0 0.0
  %1032 = vmatpush1.xpose.msra.mxu0 %v966
  %1033 = vmatprep.subr.mxu0 0.0
  %1034 = vmatpush1.xpose.msra.mxu0 %v967
  %1035 = vmatprep.subr.mxu0 0.0
  %1036 = vmatpush1.xpose.msra.mxu0 %v968
  %1037 = vmatprep.subr.mxu0 0.0
  %1038 = vmatpush1.xpose.msra.mxu0 %v969
  %1039 = vmatprep.mubr.f32.mxu0 0.0
  %1040 = vmatmul.mubr.f32.gmra.mrb[0].mxu0 %v971
  %v1041 = vpop.f32.mrb[0].mxu0
  %v1042 = vadd.f32 0.0, %v1041
  %v1043 = vpop.f32.mrb[0].mxu0
  %v1044 = vadd.f32 0.0, %v1043
  %1045 = vmatprep.mubr.f32.mxu0 0.0
  %1046 = vmatmul.mubr.f32.gmra.mrb[0].mxu0 %v972
  %v1047 = vpop.f32.mrb[0].mxu0
  %v1048 = vadd.f32 0.0, %v1047
  %v1049 = vpop.f32.mrb[0].mxu0
  %v1050 = vadd.f32 0.0, %v1049
  %1051 = vmatprep.mubr.f32.mxu0 0.0
  %1052 = vmatmul.mubr.f32.gmra.mrb[0].mxu0 %v973
  %v1053 = vpop.f32.mrb[0].mxu0
  %v1054 = vadd.f32 0.0, %v1053
  %v1055 = vpop.f32.mrb[0].mxu0
  %v1056 = vadd.f32 0.0, %v1055
  %1057 = vmatprep.mubr.f32.mxu0 0.0
  %1058 = vmatmul.mubr.f32.gmra.mrb[0].mxu0 %v974
  %v1059 = vpop.f32.mrb[0].mxu0
  %v1060 = vadd.f32 0.0, %v1059
  %v1061 = vpop.f32.mrb[0].mxu0
  %v1062 = vadd.f32 0.0, %v1061
  %1063 = vdwg.mxu0
  %v1064 = vadd.f32 %v930, %v1042
  %v1065 = vadd.f32 %v931, %v1044
  %v1066 = vadd.f32 %v932, %v1048
  %v1067 = vadd.f32 %v933, %v1050
  %v1068 = vadd.f32 %v934, %v1054
  %v1069 = vadd.f32 %v935, %v1056
  %v1070 = vadd.f32 %v936, %v1060
  %v1071 = vadd.f32 %v937, %v1062
  %v1072 = vld [vmem:[%s803 + $0x1] sm:$0xff]
  %v1073 = vld [vmem:[%s803 + $0x9] sm:$0xff]
  %v1074 = vld [vmem:[%s803 + $0x19] sm:$0xff]
  %v1075 = vld [vmem:[%s803 + $0x21] sm:$0xff]
  %v1076 = vld [vmem:[%s803 + $0x31] sm:$0xff]
  %v1077 = vld [vmem:[%s803 + $0x39] sm:$0xff]
  %v1078 = vld [vmem:[%s803 + $0x49] sm:$0xff]
  %v1079 = vld [vmem:[%s803 + $0x51] sm:$0xff]
  %v1080 = vld [vmem:[%s803 + $0x61] sm:$0xff]
  %v1081 = vld [vmem:[%s803 + $0x69] sm:$0xff]
  %v1082 = vld [vmem:[%s803 + $0x79] sm:$0xff]
  %v1083 = vld [vmem:[%s803 + $0x81] sm:$0xff]
  %v1084 = vld [vmem:[%s803 + $0x91] sm:$0xff]
  %v1085 = vld [vmem:[%s803 + $0x99] sm:$0xff]
  %v1086 = vld [vmem:[%s803 + $0xa9] sm:$0xff]
  %v1087 = vld [vmem:[%s803 + $0xb1] sm:$0xff]
  %v1088 = vld [vmem:[%s803 + $0xc1] sm:$0xff]
  %v1089 = vld [vmem:[%s803 + $0xc9] sm:$0xff]
  %v1090 = vld [vmem:[%s803 + $0xd9] sm:$0xff]
  %v1091 = vld [vmem:[%s803 + $0xe1] sm:$0xff]
  %v1092 = vld [vmem:[%s803 + $0xf1] sm:$0xff]
  %v1093 = vld [vmem:[%s803 + $0xf9] sm:$0xff]
  %v1094 = vld [vmem:[%s803 + $0x109] sm:$0xff]
  %v1095 = vld [vmem:[%s803 + $0x111] sm:$0xff]
  %v1096 = vld [vmem:[%s803 + $0x121] sm:$0xff]
  %v1097 = vld [vmem:[%s803 + $0x129] sm:$0xff]
  %v1098 = vld [vmem:[%s803 + $0x139] sm:$0xff]
  %v1099 = vld [vmem:[%s803 + $0x141] sm:$0xff]
  %v1100 = vld [vmem:[%s803 + $0x151] sm:$0xff]
  %v1101 = vld [vmem:[%s803 + $0x159] sm:$0xff]
  %v1102 = vld [vmem:[%s803 + $0x169] sm:$0xff]
  %v1103 = vld [vmem:[%s803 + $0x171] sm:$0xff]
  %s1104 = scalar_lea.vmem %s1, 256
  %v1105 = vld [vmem:[%s1104] sm:$0xff]
  %v1106 = vld [vmem:[%s1104 + $0x8] sm:$0xff]
  %v1107 = vld [vmem:[%s1104 + $0x10] sm:$0xff]
  %v1108 = vld [vmem:[%s1104 + $0x18] sm:$0xff]
  %1109 = vmatprep.subr.mxu0 0.0
  %1110 = vmatpush1.xpose.msra.mxu0 %v1072
  %1111 = vmatprep.subr.mxu0 0.0
  %1112 = vmatpush1.xpose.msra.mxu0 %v1073
  %1113 = vmatprep.subr.mxu0 0.0
  %1114 = vmatpush1.xpose.msra.mxu0 %v1074
  %1115 = vmatprep.subr.mxu0 0.0
  %1116 = vmatpush1.xpose.msra.mxu0 %v1075
  %1117 = vmatprep.subr.mxu0 0.0
  %1118 = vmatpush1.xpose.msra.mxu0 %v1076
  %1119 = vmatprep.subr.mxu0 0.0
  %1120 = vmatpush1.xpose.msra.mxu0 %v1077
  %1121 = vmatprep.subr.mxu0 0.0
  %1122 = vmatpush1.xpose.msra.mxu0 %v1078
  %1123 = vmatprep.subr.mxu0 0.0
  %1124 = vmatpush1.xpose.msra.mxu0 %v1079
  %1125 = vmatprep.subr.mxu0 0.0
  %1126 = vmatpush1.xpose.msra.mxu0 %v1080
  %1127 = vmatprep.subr.mxu0 0.0
  %1128 = vmatpush1.xpose.msra.mxu0 %v1081
  %1129 = vmatprep.subr.mxu0 0.0
  %1130 = vmatpush1.xpose.msra.mxu0 %v1082
  %1131 = vmatprep.subr.mxu0 0.0
  %1132 = vmatpush1.xpose.msra.mxu0 %v1083
  %1133 = vmatprep.subr.mxu0 0.0
  %1134 = vmatpush1.xpose.msra.mxu0 %v1084
  %1135 = vmatprep.subr.mxu0 0.0
  %1136 = vmatpush1.xpose.msra.mxu0 %v1085
  %1137 = vmatprep.subr.mxu0 0.0
  %1138 = vmatpush1.xpose.msra.mxu0 %v1086
  %1139 = vmatprep.subr.mxu0 0.0
  %1140 = vmatpush1.xpose.msra.mxu0 %v1087
  %1141 = vmatprep.subr.mxu0 0.0
  %1142 = vmatpush1.xpose.msra.mxu0 %v1088
  %1143 = vmatprep.subr.mxu0 0.0
  %1144 = vmatpush1.xpose.msra.mxu0 %v1089
  %1145 = vmatprep.subr.mxu0 0.0
  %1146 = vmatpush1.xpose.msra.mxu0 %v1090
  %1147 = vmatprep.subr.mxu0 0.0
  %1148 = vmatpush1.xpose.msra.mxu0 %v1091
  %1149 = vmatprep.subr.mxu0 0.0
  %1150 = vmatpush1.xpose.msra.mxu0 %v1092
  %1151 = vmatprep.subr.mxu0 0.0
  %1152 = vmatpush1.xpose.msra.mxu0 %v1093
  %1153 = vmatprep.subr.mxu0 0.0
  %1154 = vmatpush1.xpose.msra.mxu0 %v1094
  %1155 = vmatprep.subr.mxu0 0.0
  %1156 = vmatpush1.xpose.msra.mxu0 %v1095
  %1157 = vmatprep.subr.mxu0 0.0
  %1158 = vmatpush1.xpose.msra.mxu0 %v1096
  %1159 = vmatprep.subr.mxu0 0.0
  %1160 = vmatpush1.xpose.msra.mxu0 %v1097
  %1161 = vmatprep.subr.mxu0 0.0
  %1162 = vmatpush1.xpose.msra.mxu0 %v1098
  %1163 = vmatprep.subr.mxu0 0.0
  %1164 = vmatpush1.xpose.msra.mxu0 %v1099
  %1165 = vmatprep.subr.mxu0 0.0
  %1166 = vmatpush1.xpose.msra.mxu0 %v1100
  %1167 = vmatprep.subr.mxu0 0.0
  %1168 = vmatpush1.xpose.msra.mxu0 %v1101
  %1169 = vmatprep.subr.mxu0 0.0
  %1170 = vmatpush1.xpose.msra.mxu0 %v1102
  %1171 = vmatprep.subr.mxu0 0.0
  %1172 = vmatpush1.xpose.msra.mxu0 %v1103
  %1173 = vmatprep.mubr.f32.mxu0 0.0
  %1174 = vmatmul.mubr.f32.gmra.mrb[0].mxu0 %v1105
  %v1175 = vpop.f32.mrb[0].mxu0
  %v1176 = vadd.f32 0.0, %v1175
  %v1177 = vpop.f32.mrb[0].mxu0
  %v1178 = vadd.f32 0.0, %v1177
  %1179 = vmatprep.mubr.f32.mxu0 0.0
  %1180 = vmatmul.mubr.f32.gmra.mrb[0].mxu0 %v1106
  %v1181 = vpop.f32.mrb[0].mxu0
  %v1182 = vadd.f32 0.0, %v1181
  %v1183 = vpop.f32.mrb[0].mxu0
  %v1184 = vadd.f32 0.0, %v1183
  %1185 = vmatprep.mubr.f32.mxu0 0.0
  %1186 = vmatmul.mubr.f32.gmra.mrb[0].mxu0 %v1107
  %v1187 = vpop.f32.mrb[0].mxu0
  %v1188 = vadd.f32 0.0, %v1187
  %v1189 = vpop.f32.mrb[0].mxu0
  %v1190 = vadd.f32 0.0, %v1189
  %1191 = vmatprep.mubr.f32.mxu0 0.0
  %1192 = vmatmul.mubr.f32.gmra.mrb[0].mxu0 %v1108
  %v1193 = vpop.f32.mrb[0].mxu0
  %v1194 = vadd.f32 0.0, %v1193
  %v1195 = vpop.f32.mrb[0].mxu0
  %v1196 = vadd.f32 0.0, %v1195
  %1197 = vdwg.mxu0
  %v1198 = vadd.f32 %v1064, %v1176
  %v1199 = vadd.f32 %v1065, %v1178
  %v1200 = vadd.f32 %v1066, %v1182
  %v1201 = vadd.f32 %v1067, %v1184
  %v1202 = vadd.f32 %v1068, %v1188
  %v1203 = vadd.f32 %v1069, %v1190
  %v1204 = vadd.f32 %v1070, %v1194
  %v1205 = vadd.f32 %v1071, %v1196
  %v1206 = vld [vmem:[%s668 + $0x2] sm:$0xff]
  %v1207 = vld [vmem:[%s668 + $0xa] sm:$0xff]
  %v1208 = vld [vmem:[%s668 + $0x1a] sm:$0xff]
  %v1209 = vld [vmem:[%s668 + $0x22] sm:$0xff]
  %v1210 = vld [vmem:[%s668 + $0x32] sm:$0xff]
  %v1211 = vld [vmem:[%s668 + $0x3a] sm:$0xff]
  %v1212 = vld [vmem:[%s668 + $0x4a] sm:$0xff]
  %v1213 = vld [vmem:[%s668 + $0x52] sm:$0xff]
  %v1214 = vld [vmem:[%s668 + $0x62] sm:$0xff]
  %v1215 = vld [vmem:[%s668 + $0x6a] sm:$0xff]
  %v1216 = vld [vmem:[%s668 + $0x7a] sm:$0xff]
  %v1217 = vld [vmem:[%s668 + $0x82] sm:$0xff]
  %v1218 = vld [vmem:[%s668 + $0x92] sm:$0xff]
  %v1219 = vld [vmem:[%s668 + $0x9a] sm:$0xff]
  %v1220 = vld [vmem:[%s668 + $0xaa] sm:$0xff]
  %v1221 = vld [vmem:[%s668 + $0xb2] sm:$0xff]
  %v1222 = vld [vmem:[%s668 + $0xc2] sm:$0xff]
  %v1223 = vld [vmem:[%s668 + $0xca] sm:$0xff]
  %v1224 = vld [vmem:[%s668 + $0xda] sm:$0xff]
  %v1225 = vld [vmem:[%s668 + $0xe2] sm:$0xff]
  %v1226 = vld [vmem:[%s668 + $0xf2] sm:$0xff]
  %v1227 = vld [vmem:[%s668 + $0xfa] sm:$0xff]
  %v1228 = vld [vmem:[%s668 + $0x10a] sm:$0xff]
  %v1229 = vld [vmem:[%s668 + $0x112] sm:$0xff]
  %v1230 = vld [vmem:[%s668 + $0x122] sm:$0xff]
  %v1231 = vld [vmem:[%s668 + $0x12a] sm:$0xff]
  %v1232 = vld [vmem:[%s668 + $0x13a] sm:$0xff]
  %v1233 = vld [vmem:[%s668 + $0x142] sm:$0xff]
  %v1234 = vld [vmem:[%s668 + $0x152] sm:$0xff]
  %v1235 = vld [vmem:[%s668 + $0x15a] sm:$0xff]
  %v1236 = vld [vmem:[%s668 + $0x16a] sm:$0xff]
  %v1237 = vld [vmem:[%s668 + $0x172] sm:$0xff]
  %s1238 = scalar_lea.vmem %s1, 288
  %v1239 = vld [vmem:[%s1238] sm:$0xff]
  %v1240 = vld [vmem:[%s1238 + $0x8] sm:$0xff]
  %v1241 = vld [vmem:[%s1238 + $0x10] sm:$0xff]
  %v1242 = vld [vmem:[%s1238 + $0x18] sm:$0xff]
  %1243 = vmatprep.subr.mxu0 0.0
  %1244 = vmatpush1.xpose.msra.mxu0 %v1206
  %1245 = vmatprep.subr.mxu0 0.0
  %1246 = vmatpush1.xpose.msra.mxu0 %v1207
  %1247 = vmatprep.subr.mxu0 0.0
  %1248 = vmatpush1.xpose.msra.mxu0 %v1208
  %1249 = vmatprep.subr.mxu0 0.0
  %1250 = vmatpush1.xpose.msra.mxu0 %v1209
  %1251 = vmatprep.subr.mxu0 0.0
  %1252 = vmatpush1.xpose.msra.mxu0 %v1210
  %1253 = vmatprep.subr.mxu0 0.0
  %1254 = vmatpush1.xpose.msra.mxu0 %v1211
  %1255 = vmatprep.subr.mxu0 0.0
  %1256 = vmatpush1.xpose.msra.mxu0 %v1212
  %1257 = vmatprep.subr.mxu0 0.0
  %1258 = vmatpush1.xpose.msra.mxu0 %v1213
  %1259 = vmatprep.subr.mxu0 0.0
  %1260 = vmatpush1.xpose.msra.mxu0 %v1214
  %1261 = vmatprep.subr.mxu0 0.0
  %1262 = vmatpush1.xpose.msra.mxu0 %v1215
  %1263 = vmatprep.subr.mxu0 0.0
  %1264 = vmatpush1.xpose.msra.mxu0 %v1216
  %1265 = vmatprep.subr.mxu0 0.0
  %1266 = vmatpush1.xpose.msra.mxu0 %v1217
  %1267 = vmatprep.subr.mxu0 0.0
  %1268 = vmatpush1.xpose.msra.mxu0 %v1218
  %1269 = vmatprep.subr.mxu0 0.0
  %1270 = vmatpush1.xpose.msra.mxu0 %v1219
  %1271 = vmatprep.subr.mxu0 0.0
  %1272 = vmatpush1.xpose.msra.mxu0 %v1220
  %1273 = vmatprep.subr.mxu0 0.0
  %1274 = vmatpush1.xpose.msra.mxu0 %v1221
  %1275 = vmatprep.subr.mxu0 0.0
  %1276 = vmatpush1.xpose.msra.mxu0 %v1222
  %1277 = vmatprep.subr.mxu0 0.0
  %1278 = vmatpush1.xpose.msra.mxu0 %v1223
  %1279 = vmatprep.subr.mxu0 0.0
  %1280 = vmatpush1.xpose.msra.mxu0 %v1224
  %1281 = vmatprep.subr.mxu0 0.0
  %1282 = vmatpush1.xpose.msra.mxu0 %v1225
  %1283 = vmatprep.subr.mxu0 0.0
  %1284 = vmatpush1.xpose.msra.mxu0 %v1226
  %1285 = vmatprep.subr.mxu0 0.0
  %1286 = vmatpush1.xpose.msra.mxu0 %v1227
  %1287 = vmatprep.subr.mxu0 0.0
  %1288 = vmatpush1.xpose.msra.mxu0 %v1228
  %1289 = vmatprep.subr.mxu0 0.0
  %1290 = vmatpush1.xpose.msra.mxu0 %v1229
  %1291 = vmatprep.subr.mxu0 0.0
  %1292 = vmatpush1.xpose.msra.mxu0 %v1230
  %1293 = vmatprep.subr.mxu0 0.0
  %1294 = vmatpush1.xpose.msra.mxu0 %v1231
  %1295 = vmatprep.subr.mxu0 0.0
  %1296 = vmatpush1.xpose.msra.mxu0 %v1232
  %1297 = vmatprep.subr.mxu0 0.0
  %1298 = vmatpush1.xpose.msra.mxu0 %v1233
  %1299 = vmatprep.subr.mxu0 0.0
  %1300 = vmatpush1.xpose.msra.mxu0 %v1234
  %1301 = vmatprep.subr.mxu0 0.0
  %1302 = vmatpush1.xpose.msra.mxu0 %v1235
  %1303 = vmatprep.subr.mxu0 0.0
  %1304 = vmatpush1.xpose.msra.mxu0 %v1236
  %1305 = vmatprep.subr.mxu0 0.0
  %1306 = vmatpush1.xpose.msra.mxu0 %v1237
  %1307 = vmatprep.mubr.f32.mxu0 0.0
  %1308 = vmatmul.mubr.f32.gmra.mrb[0].mxu0 %v1239
  %v1309 = vpop.f32.mrb[0].mxu0
  %v1310 = vadd.f32 0.0, %v1309
  %v1311 = vpop.f32.mrb[0].mxu0
  %v1312 = vadd.f32 0.0, %v1311
  %1313 = vmatprep.mubr.f32.mxu0 0.0
  %1314 = vmatmul.mubr.f32.gmra.mrb[0].mxu0 %v1240
  %v1315 = vpop.f32.mrb[0].mxu0
  %v1316 = vadd.f32 0.0, %v1315
  %v1317 = vpop.f32.mrb[0].mxu0
  %v1318 = vadd.f32 0.0, %v1317
  %1319 = vmatprep.mubr.f32.mxu0 0.0
  %1320 = vmatmul.mubr.f32.gmra.mrb[0].mxu0 %v1241
  %v1321 = vpop.f32.mrb[0].mxu0
  %v1322 = vadd.f32 0.0, %v1321
  %v1323 = vpop.f32.mrb[0].mxu0
  %v1324 = vadd.f32 0.0, %v1323
  %1325 = vmatprep.mubr.f32.mxu0 0.0
  %1326 = vmatmul.mubr.f32.gmra.mrb[0].mxu0 %v1242
  %v1327 = vpop.f32.mrb[0].mxu0
  %v1328 = vadd.f32 0.0, %v1327
  %v1329 = vpop.f32.mrb[0].mxu0
  %v1330 = vadd.f32 0.0, %v1329
  %1331 = vdwg.mxu0
  %v1332 = vadd.f32 %v1198, %v1310
  %v1333 = vadd.f32 %v1199, %v1312
  %v1334 = vadd.f32 %v1200, %v1316
  %v1335 = vadd.f32 %v1201, %v1318
  %v1336 = vadd.f32 %v1202, %v1322
  %v1337 = vadd.f32 %v1203, %v1324
  %v1338 = vadd.f32 %v1204, %v1328
  %v1339 = vadd.f32 %v1205, %v1330
  %s1340 = scalar_lea.vmem %s0, 24
  %v1341 = vld [vmem:[%s1340] sm:$0xff]
  %v1342 = vld [vmem:[%s1340 + $0x8] sm:$0xff]
  %v1343 = vld [vmem:[%s1340 + $0x18] sm:$0xff]
  %v1344 = vld [vmem:[%s1340 + $0x20] sm:$0xff]
  %v1345 = vld [vmem:[%s1340 + $0x30] sm:$0xff]
  %v1346 = vld [vmem:[%s1340 + $0x38] sm:$0xff]
  %v1347 = vld [vmem:[%s1340 + $0x48] sm:$0xff]
  %v1348 = vld [vmem:[%s1340 + $0x50] sm:$0xff]
  %v1349 = vld [vmem:[%s1340 + $0x60] sm:$0xff]
  %v1350 = vld [vmem:[%s1340 + $0x68] sm:$0xff]
  %v1351 = vld [vmem:[%s1340 + $0x78] sm:$0xff]
  %v1352 = vld [vmem:[%s1340 + $0x80] sm:$0xff]
  %v1353 = vld [vmem:[%s1340 + $0x90] sm:$0xff]
  %v1354 = vld [vmem:[%s1340 + $0x98] sm:$0xff]
  %v1355 = vld [vmem:[%s1340 + $0xa8] sm:$0xff]
  %v1356 = vld [vmem:[%s1340 + $0xb0] sm:$0xff]
  %v1357 = vld [vmem:[%s1340 + $0xc0] sm:$0xff]
  %v1358 = vld [vmem:[%s1340 + $0xc8] sm:$0xff]
  %v1359 = vld [vmem:[%s1340 + $0xd8] sm:$0xff]
  %v1360 = vld [vmem:[%s1340 + $0xe0] sm:$0xff]
  %v1361 = vld [vmem:[%s1340 + $0xf0] sm:$0xff]
  %v1362 = vld [vmem:[%s1340 + $0xf8] sm:$0xff]
  %v1363 = vld [vmem:[%s1340 + $0x108] sm:$0xff]
  %v1364 = vld [vmem:[%s1340 + $0x110] sm:$0xff]
  %v1365 = vld [vmem:[%s1340 + $0x120] sm:$0xff]
  %v1366 = vld [vmem:[%s1340 + $0x128] sm:$0xff]
  %v1367 = vld [vmem:[%s1340 + $0x138] sm:$0xff]
  %v1368 = vld [vmem:[%s1340 + $0x140] sm:$0xff]
  %v1369 = vld [vmem:[%s1340 + $0x150] sm:$0xff]
  %v1370 = vld [vmem:[%s1340 + $0x158] sm:$0xff]
  %v1371 = vld [vmem:[%s1340 + $0x168] sm:$0xff]
  %v1372 = vld [vmem:[%s1340 + $0x170] sm:$0xff]
  %s1373 = scalar_lea.vmem %s1, 320
  %v1374 = vld [vmem:[%s1373] sm:$0xff]
  %v1375 = vld [vmem:[%s1373 + $0x8] sm:$0xff]
  %v1376 = vld [vmem:[%s1373 + $0x10] sm:$0xff]
  %v1377 = vld [vmem:[%s1373 + $0x18] sm:$0xff]
  %1378 = vmatprep.subr.mxu0 0.0
  %1379 = vmatpush1.xpose.msra.mxu0 %v1341
  %1380 = vmatprep.subr.mxu0 0.0
  %1381 = vmatpush1.xpose.msra.mxu0 %v1342
  %1382 = vmatprep.subr.mxu0 0.0
  %1383 = vmatpush1.xpose.msra.mxu0 %v1343
  %1384 = vmatprep.subr.mxu0 0.0
  %1385 = vmatpush1.xpose.msra.mxu0 %v1344
  %1386 = vmatprep.subr.mxu0 0.0
  %1387 = vmatpush1.xpose.msra.mxu0 %v1345
  %1388 = vmatprep.subr.mxu0 0.0
  %1389 = vmatpush1.xpose.msra.mxu0 %v1346
  %1390 = vmatprep.subr.mxu0 0.0
  %1391 = vmatpush1.xpose.msra.mxu0 %v1347
  %1392 = vmatprep.subr.mxu0 0.0
  %1393 = vmatpush1.xpose.msra.mxu0 %v1348
  %1394 = vmatprep.subr.mxu0 0.0
  %1395 = vmatpush1.xpose.msra.mxu0 %v1349
  %1396 = vmatprep.subr.mxu0 0.0
  %1397 = vmatpush1.xpose.msra.mxu0 %v1350
  %1398 = vmatprep.subr.mxu0 0.0
  %1399 = vmatpush1.xpose.msra.mxu0 %v1351
  %1400 = vmatprep.subr.mxu0 0.0
  %1401 = vmatpush1.xpose.msra.mxu0 %v1352
  %1402 = vmatprep.subr.mxu0 0.0
  %1403 = vmatpush1.xpose.msra.mxu0 %v1353
  %1404 = vmatprep.subr.mxu0 0.0
  %1405 = vmatpush1.xpose.msra.mxu0 %v1354
  %1406 = vmatprep.subr.mxu0 0.0
  %1407 = vmatpush1.xpose.msra.mxu0 %v1355
  %1408 = vmatprep.subr.mxu0 0.0
  %1409 = vmatpush1.xpose.msra.mxu0 %v1356
  %1410 = vmatprep.subr.mxu0 0.0
  %1411 = vmatpush1.xpose.msra.mxu0 %v1357
  %1412 = vmatprep.subr.mxu0 0.0
  %1413 = vmatpush1.xpose.msra.mxu0 %v1358
  %1414 = vmatprep.subr.mxu0 0.0
  %1415 = vmatpush1.xpose.msra.mxu0 %v1359
  %1416 = vmatprep.subr.mxu0 0.0
  %1417 = vmatpush1.xpose.msra.mxu0 %v1360
  %1418 = vmatprep.subr.mxu0 0.0
  %1419 = vmatpush1.xpose.msra.mxu0 %v1361
  %1420 = vmatprep.subr.mxu0 0.0
  %1421 = vmatpush1.xpose.msra.mxu0 %v1362
  %1422 = vmatprep.subr.mxu0 0.0
  %1423 = vmatpush1.xpose.msra.mxu0 %v1363
  %1424 = vmatprep.subr.mxu0 0.0
  %1425 = vmatpush1.xpose.msra.mxu0 %v1364
  %1426 = vmatprep.subr.mxu0 0.0
  %1427 = vmatpush1.xpose.msra.mxu0 %v1365
  %1428 = vmatprep.subr.mxu0 0.0
  %1429 = vmatpush1.xpose.msra.mxu0 %v1366
  %1430 = vmatprep.subr.mxu0 0.0
  %1431 = vmatpush1.xpose.msra.mxu0 %v1367
  %1432 = vmatprep.subr.mxu0 0.0
  %1433 = vmatpush1.xpose.msra.mxu0 %v1368
  %1434 = vmatprep.subr.mxu0 0.0
  %1435 = vmatpush1.xpose.msra.mxu0 %v1369
  %1436 = vmatprep.subr.mxu0 0.0
  %1437 = vmatpush1.xpose.msra.mxu0 %v1370
  %1438 = vmatprep.subr.mxu0 0.0
  %1439 = vmatpush1.xpose.msra.mxu0 %v1371
  %1440 = vmatprep.subr.mxu0 0.0
  %1441 = vmatpush1.xpose.msra.mxu0 %v1372
  %1442 = vmatprep.mubr.f32.mxu0 0.0
  %1443 = vmatmul.mubr.f32.gmra.mrb[0].mxu0 %v1374
  %v1444 = vpop.f32.mrb[0].mxu0
  %v1445 = vadd.f32 0.0, %v1444
  %v1446 = vpop.f32.mrb[0].mxu0
  %v1447 = vadd.f32 0.0, %v1446
  %1448 = vmatprep.mubr.f32.mxu0 0.0
  %1449 = vmatmul.mubr.f32.gmra.mrb[0].mxu0 %v1375
  %v1450 = vpop.f32.mrb[0].mxu0
  %v1451 = vadd.f32 0.0, %v1450
  %v1452 = vpop.f32.mrb[0].mxu0
  %v1453 = vadd.f32 0.0, %v1452
  %1454 = vmatprep.mubr.f32.mxu0 0.0
  %1455 = vmatmul.mubr.f32.gmra.mrb[0].mxu0 %v1376
  %v1456 = vpop.f32.mrb[0].mxu0
  %v1457 = vadd.f32 0.0, %v1456
  %v1458 = vpop.f32.mrb[0].mxu0
  %v1459 = vadd.f32 0.0, %v1458
  %1460 = vmatprep.mubr.f32.mxu0 0.0
  %1461 = vmatmul.mubr.f32.gmra.mrb[0].mxu0 %v1377
  %v1462 = vpop.f32.mrb[0].mxu0
  %v1463 = vadd.f32 0.0, %v1462
  %v1464 = vpop.f32.mrb[0].mxu0
  %v1465 = vadd.f32 0.0, %v1464
  %1466 = vdwg.mxu0
  %v1467 = vadd.f32 %v1332, %v1445
  %v1468 = vadd.f32 %v1333, %v1447
  %v1469 = vadd.f32 %v1334, %v1451
  %v1470 = vadd.f32 %v1335, %v1453
  %v1471 = vadd.f32 %v1336, %v1457
  %v1472 = vadd.f32 %v1337, %v1459
  %v1473 = vadd.f32 %v1338, %v1463
  %v1474 = vadd.f32 %v1339, %v1465
  %s1475 = scalar_lea.vmem %s0, 456
  %v1476 = vld [vmem:[%s1475] sm:$0xff]
  %v1477 = vld [vmem:[%s1475 + $0x8] sm:$0xff]
  %v1478 = vld [vmem:[%s1475 + $0x18] sm:$0xff]
  %v1479 = vld [vmem:[%s1475 + $0x20] sm:$0xff]
  %v1480 = vld [vmem:[%s1475 + $0x30] sm:$0xff]
  %v1481 = vld [vmem:[%s1475 + $0x38] sm:$0xff]
  %v1482 = vld [vmem:[%s1475 + $0x48] sm:$0xff]
  %v1483 = vld [vmem:[%s1475 + $0x50] sm:$0xff]
  %v1484 = vld [vmem:[%s1475 + $0x60] sm:$0xff]
  %v1485 = vld [vmem:[%s1475 + $0x68] sm:$0xff]
  %v1486 = vld [vmem:[%s1475 + $0x78] sm:$0xff]
  %v1487 = vld [vmem:[%s1475 + $0x80] sm:$0xff]
  %v1488 = vld [vmem:[%s1475 + $0x90] sm:$0xff]
  %v1489 = vld [vmem:[%s1475 + $0x98] sm:$0xff]
  %v1490 = vld [vmem:[%s1475 + $0xa8] sm:$0xff]
  %v1491 = vld [vmem:[%s1475 + $0xb0] sm:$0xff]
  %v1492 = vld [vmem:[%s1475 + $0xc0] sm:$0xff]
  %v1493 = vld [vmem:[%s1475 + $0xc8] sm:$0xff]
  %v1494 = vld [vmem:[%s1475 + $0xd8] sm:$0xff]
  %v1495 = vld [vmem:[%s1475 + $0xe0] sm:$0xff]
  %v1496 = vld [vmem:[%s1475 + $0xf0] sm:$0xff]
  %v1497 = vld [vmem:[%s1475 + $0xf8] sm:$0xff]
  %v1498 = vld [vmem:[%s1475 + $0x108] sm:$0xff]
  %v1499 = vld [vmem:[%s1475 + $0x110] sm:$0xff]
  %v1500 = vld [vmem:[%s1475 + $0x120] sm:$0xff]
  %v1501 = vld [vmem:[%s1475 + $0x128] sm:$0xff]
  %v1502 = vld [vmem:[%s1475 + $0x138] sm:$0xff]
  %v1503 = vld [vmem:[%s1475 + $0x140] sm:$0xff]
  %v1504 = vld [vmem:[%s1475 + $0x150] sm:$0xff]
  %v1505 = vld [vmem:[%s1475 + $0x158] sm:$0xff]
  %v1506 = vld [vmem:[%s1475 + $0x168] sm:$0xff]
  %v1507 = vld [vmem:[%s1475 + $0x170] sm:$0xff]
  %s1508 = scalar_lea.vmem %s1, 352
  %v1509 = vld [vmem:[%s1508] sm:$0xff]
  %v1510 = vld [vmem:[%s1508 + $0x8] sm:$0xff]
  %v1511 = vld [vmem:[%s1508 + $0x10] sm:$0xff]
  %v1512 = vld [vmem:[%s1508 + $0x18] sm:$0xff]
  %1513 = vmatprep.subr.mxu0 0.0
  %1514 = vmatpush1.xpose.msra.mxu0 %v1476
  %1515 = vmatprep.subr.mxu0 0.0
  %1516 = vmatpush1.xpose.msra.mxu0 %v1477
  %1517 = vmatprep.subr.mxu0 0.0
  %1518 = vmatpush1.xpose.msra.mxu0 %v1478
  %1519 = vmatprep.subr.mxu0 0.0
  %1520 = vmatpush1.xpose.msra.mxu0 %v1479
  %1521 = vmatprep.subr.mxu0 0.0
  %1522 = vmatpush1.xpose.msra.mxu0 %v1480
  %1523 = vmatprep.subr.mxu0 0.0
  %1524 = vmatpush1.xpose.msra.mxu0 %v1481
  %1525 = vmatprep.subr.mxu0 0.0
  %1526 = vmatpush1.xpose.msra.mxu0 %v1482
  %1527 = vmatprep.subr.mxu0 0.0
  %1528 = vmatpush1.xpose.msra.mxu0 %v1483
  %1529 = vmatprep.subr.mxu0 0.0
  %1530 = vmatpush1.xpose.msra.mxu0 %v1484
  %1531 = vmatprep.subr.mxu0 0.0
  %1532 = vmatpush1.xpose.msra.mxu0 %v1485
  %1533 = vmatprep.subr.mxu0 0.0
  %1534 = vmatpush1.xpose.msra.mxu0 %v1486
  %1535 = vmatprep.subr.mxu0 0.0
  %1536 = vmatpush1.xpose.msra.mxu0 %v1487
  %1537 = vmatprep.subr.mxu0 0.0
  %1538 = vmatpush1.xpose.msra.mxu0 %v1488
  %1539 = vmatprep.subr.mxu0 0.0
  %1540 = vmatpush1.xpose.msra.mxu0 %v1489
  %1541 = vmatprep.subr.mxu0 0.0
  %1542 = vmatpush1.xpose.msra.mxu0 %v1490
  %1543 = vmatprep.subr.mxu0 0.0
  %1544 = vmatpush1.xpose.msra.mxu0 %v1491
  %1545 = vmatprep.subr.mxu0 0.0
  %1546 = vmatpush1.xpose.msra.mxu0 %v1492
  %1547 = vmatprep.subr.mxu0 0.0
  %1548 = vmatpush1.xpose.msra.mxu0 %v1493
  %1549 = vmatprep.subr.mxu0 0.0
  %1550 = vmatpush1.xpose.msra.mxu0 %v1494
  %1551 = vmatprep.subr.mxu0 0.0
  %1552 = vmatpush1.xpose.msra.mxu0 %v1495
  %1553 = vmatprep.subr.mxu0 0.0
  %1554 = vmatpush1.xpose.msra.mxu0 %v1496
  %1555 = vmatprep.subr.mxu0 0.0
  %1556 = vmatpush1.xpose.msra.mxu0 %v1497
  %1557 = vmatprep.subr.mxu0 0.0
  %1558 = vmatpush1.xpose.msra.mxu0 %v1498
  %1559 = vmatprep.subr.mxu0 0.0
  %1560 = vmatpush1.xpose.msra.mxu0 %v1499
  %1561 = vmatprep.subr.mxu0 0.0
  %1562 = vmatpush1.xpose.msra.mxu0 %v1500
  %1563 = vmatprep.subr.mxu0 0.0
  %1564 = vmatpush1.xpose.msra.mxu0 %v1501
  %1565 = vmatprep.subr.mxu0 0.0
  %1566 = vmatpush1.xpose.msra.mxu0 %v1502
  %1567 = vmatprep.subr.mxu0 0.0
  %1568 = vmatpush1.xpose.msra.mxu0 %v1503
  %1569 = vmatprep.subr.mxu0 0.0
  %1570 = vmatpush1.xpose.msra.mxu0 %v1504
  %1571 = vmatprep.subr.mxu0 0.0
  %1572 = vmatpush1.xpose.msra.mxu0 %v1505
  %1573 = vmatprep.subr.mxu0 0.0
  %1574 = vmatpush1.xpose.msra.mxu0 %v1506
  %1575 = vmatprep.subr.mxu0 0.0
  %1576 = vmatpush1.xpose.msra.mxu0 %v1507
  %1577 = vmatprep.mubr.f32.mxu0 0.0
  %1578 = vmatmul.mubr.f32.gmra.mrb[0].mxu0 %v1509
  %v1579 = vpop.f32.mrb[0].mxu0
  %v1580 = vadd.f32 0.0, %v1579
  %v1581 = vpop.f32.mrb[0].mxu0
  %v1582 = vadd.f32 0.0, %v1581
  %1583 = vmatprep.mubr.f32.mxu0 0.0
  %1584 = vmatmul.mubr.f32.gmra.mrb[0].mxu0 %v1510
  %v1585 = vpop.f32.mrb[0].mxu0
  %v1586 = vadd.f32 0.0, %v1585
  %v1587 = vpop.f32.mrb[0].mxu0
  %v1588 = vadd.f32 0.0, %v1587
  %1589 = vmatprep.mubr.f32.mxu0 0.0
  %1590 = vmatmul.mubr.f32.gmra.mrb[0].mxu0 %v1511
  %v1591 = vpop.f32.mrb[0].mxu0
  %v1592 = vadd.f32 0.0, %v1591
  %v1593 = vpop.f32.mrb[0].mxu0
  %v1594 = vadd.f32 0.0, %v1593
  %1595 = vmatprep.mubr.f32.mxu0 0.0
  %1596 = vmatmul.mubr.f32.gmra.mrb[0].mxu0 %v1512
  %v1597 = vpop.f32.mrb[0].mxu0
  %v1598 = vadd.f32 0.0, %v1597
  %v1599 = vpop.f32.mrb[0].mxu0
  %v1600 = vadd.f32 0.0, %v1599
  %1601 = vdwg.mxu0
  %v1602 = vadd.f32 %v1467, %v1580
  %v1603 = vadd.f32 %v1468, %v1582
  %v1604 = vadd.f32 %v1469, %v1586
  %v1605 = vadd.f32 %v1470, %v1588
  %v1606 = vadd.f32 %v1471, %v1592
  %v1607 = vadd.f32 %v1472, %v1594
  %v1608 = vadd.f32 %v1473, %v1598
  %v1609 = vadd.f32 %v1474, %v1600
  %v1610 = vld [vmem:[%s1340 + $0x1] sm:$0xff]
  %v1611 = vld [vmem:[%s1340 + $0x9] sm:$0xff]
  %v1612 = vld [vmem:[%s1340 + $0x19] sm:$0xff]
  %v1613 = vld [vmem:[%s1340 + $0x21] sm:$0xff]
  %v1614 = vld [vmem:[%s1340 + $0x31] sm:$0xff]
  %v1615 = vld [vmem:[%s1340 + $0x39] sm:$0xff]
  %v1616 = vld [vmem:[%s1340 + $0x49] sm:$0xff]
  %v1617 = vld [vmem:[%s1340 + $0x51] sm:$0xff]
  %v1618 = vld [vmem:[%s1340 + $0x61] sm:$0xff]
  %v1619 = vld [vmem:[%s1340 + $0x69] sm:$0xff]
  %v1620 = vld [vmem:[%s1340 + $0x79] sm:$0xff]
  %v1621 = vld [vmem:[%s1340 + $0x81] sm:$0xff]
  %v1622 = vld [vmem:[%s1340 + $0x91] sm:$0xff]
  %v1623 = vld [vmem:[%s1340 + $0x99] sm:$0xff]
  %v1624 = vld [vmem:[%s1340 + $0xa9] sm:$0xff]
  %v1625 = vld [vmem:[%s1340 + $0xb1] sm:$0xff]
  %v1626 = vld [vmem:[%s1340 + $0xc1] sm:$0xff]
  %v1627 = vld [vmem:[%s1340 + $0xc9] sm:$0xff]
  %v1628 = vld [vmem:[%s1340 + $0xd9] sm:$0xff]
  %v1629 = vld [vmem:[%s1340 + $0xe1] sm:$0xff]
  %v1630 = vld [vmem:[%s1340 + $0xf1] sm:$0xff]
  %v1631 = vld [vmem:[%s1340 + $0xf9] sm:$0xff]
  %v1632 = vld [vmem:[%s1340 + $0x109] sm:$0xff]
  %v1633 = vld [vmem:[%s1340 + $0x111] sm:$0xff]
  %v1634 = vld [vmem:[%s1340 + $0x121] sm:$0xff]
  %v1635 = vld [vmem:[%s1340 + $0x129] sm:$0xff]
  %v1636 = vld [vmem:[%s1340 + $0x139] sm:$0xff]
  %v1637 = vld [vmem:[%s1340 + $0x141] sm:$0xff]
  %v1638 = vld [vmem:[%s1340 + $0x151] sm:$0xff]
  %v1639 = vld [vmem:[%s1340 + $0x159] sm:$0xff]
  %v1640 = vld [vmem:[%s1340 + $0x169] sm:$0xff]
  %v1641 = vld [vmem:[%s1340 + $0x171] sm:$0xff]
  %s1642 = scalar_lea.vmem %s1, 384
  %v1643 = vld [vmem:[%s1642] sm:$0xff]
  %v1644 = vld [vmem:[%s1642 + $0x8] sm:$0xff]
  %v1645 = vld [vmem:[%s1642 + $0x10] sm:$0xff]
  %v1646 = vld [vmem:[%s1642 + $0x18] sm:$0xff]
  %1647 = vmatprep.subr.mxu0 0.0
  %1648 = vmatpush1.xpose.msra.mxu0 %v1610
  %1649 = vmatprep.subr.mxu0 0.0
  %1650 = vmatpush1.xpose.msra.mxu0 %v1611
  %1651 = vmatprep.subr.mxu0 0.0
  %1652 = vmatpush1.xpose.msra.mxu0 %v1612
  %1653 = vmatprep.subr.mxu0 0.0
  %1654 = vmatpush1.xpose.msra.mxu0 %v1613
  %1655 = vmatprep.subr.mxu0 0.0
  %1656 = vmatpush1.xpose.msra.mxu0 %v1614
  %1657 = vmatprep.subr.mxu0 0.0
  %1658 = vmatpush1.xpose.msra.mxu0 %v1615
  %1659 = vmatprep.subr.mxu0 0.0
  %1660 = vmatpush1.xpose.msra.mxu0 %v1616
  %1661 = vmatprep.subr.mxu0 0.0
  %1662 = vmatpush1.xpose.msra.mxu0 %v1617
  %1663 = vmatprep.subr.mxu0 0.0
  %1664 = vmatpush1.xpose.msra.mxu0 %v1618
  %1665 = vmatprep.subr.mxu0 0.0
  %1666 = vmatpush1.xpose.msra.mxu0 %v1619
  %1667 = vmatprep.subr.mxu0 0.0
  %1668 = vmatpush1.xpose.msra.mxu0 %v1620
  %1669 = vmatprep.subr.mxu0 0.0
  %1670 = vmatpush1.xpose.msra.mxu0 %v1621
  %1671 = vmatprep.subr.mxu0 0.0
  %1672 = vmatpush1.xpose.msra.mxu0 %v1622
  %1673 = vmatprep.subr.mxu0 0.0
  %1674 = vmatpush1.xpose.msra.mxu0 %v1623
  %1675 = vmatprep.subr.mxu0 0.0
  %1676 = vmatpush1.xpose.msra.mxu0 %v1624
  %1677 = vmatprep.subr.mxu0 0.0
  %1678 = vmatpush1.xpose.msra.mxu0 %v1625
  %1679 = vmatprep.subr.mxu0 0.0
  %1680 = vmatpush1.xpose.msra.mxu0 %v1626
  %1681 = vmatprep.subr.mxu0 0.0
  %1682 = vmatpush1.xpose.msra.mxu0 %v1627
  %1683 = vmatprep.subr.mxu0 0.0
  %1684 = vmatpush1.xpose.msra.mxu0 %v1628
  %1685 = vmatprep.subr.mxu0 0.0
  %1686 = vmatpush1.xpose.msra.mxu0 %v1629
  %1687 = vmatprep.subr.mxu0 0.0
  %1688 = vmatpush1.xpose.msra.mxu0 %v1630
  %1689 = vmatprep.subr.mxu0 0.0
  %1690 = vmatpush1.xpose.msra.mxu0 %v1631
  %1691 = vmatprep.subr.mxu0 0.0
  %1692 = vmatpush1.xpose.msra.mxu0 %v1632
  %1693 = vmatprep.subr.mxu0 0.0
  %1694 = vmatpush1.xpose.msra.mxu0 %v1633
  %1695 = vmatprep.subr.mxu0 0.0
  %1696 = vmatpush1.xpose.msra.mxu0 %v1634
  %1697 = vmatprep.subr.mxu0 0.0
  %1698 = vmatpush1.xpose.msra.mxu0 %v1635
  %1699 = vmatprep.subr.mxu0 0.0
  %1700 = vmatpush1.xpose.msra.mxu0 %v1636
  %1701 = vmatprep.subr.mxu0 0.0
  %1702 = vmatpush1.xpose.msra.mxu0 %v1637
  %1703 = vmatprep.subr.mxu0 0.0
  %1704 = vmatpush1.xpose.msra.mxu0 %v1638
  %1705 = vmatprep.subr.mxu0 0.0
  %1706 = vmatpush1.xpose.msra.mxu0 %v1639
  %1707 = vmatprep.subr.mxu0 0.0
  %1708 = vmatpush1.xpose.msra.mxu0 %v1640
  %1709 = vmatprep.subr.mxu0 0.0
  %1710 = vmatpush1.xpose.msra.mxu0 %v1641
  %1711 = vmatprep.mubr.f32.mxu0 0.0
  %1712 = vmatmul.mubr.f32.gmra.mrb[0].mxu0 %v1643
  %v1713 = vpop.f32.mrb[0].mxu0
  %v1714 = vadd.f32 0.0, %v1713
  %v1715 = vpop.f32.mrb[0].mxu0
  %v1716 = vadd.f32 0.0, %v1715
  %1717 = vmatprep.mubr.f32.mxu0 0.0
  %1718 = vmatmul.mubr.f32.gmra.mrb[0].mxu0 %v1644
  %v1719 = vpop.f32.mrb[0].mxu0
  %v1720 = vadd.f32 0.0, %v1719
  %v1721 = vpop.f32.mrb[0].mxu0
  %v1722 = vadd.f32 0.0, %v1721
  %1723 = vmatprep.mubr.f32.mxu0 0.0
  %1724 = vmatmul.mubr.f32.gmra.mrb[0].mxu0 %v1645
  %v1725 = vpop.f32.mrb[0].mxu0
  %v1726 = vadd.f32 0.0, %v1725
  %v1727 = vpop.f32.mrb[0].mxu0
  %v1728 = vadd.f32 0.0, %v1727
  %1729 = vmatprep.mubr.f32.mxu0 0.0
  %1730 = vmatmul.mubr.f32.gmra.mrb[0].mxu0 %v1646
  %v1731 = vpop.f32.mrb[0].mxu0
  %v1732 = vadd.f32 0.0, %v1731
  %v1733 = vpop.f32.mrb[0].mxu0
  %v1734 = vadd.f32 0.0, %v1733
  %1735 = vdwg.mxu0
  %v1736 = vadd.f32 %v1602, %v1714
  %v1737 = vadd.f32 %v1603, %v1716
  %v1738 = vadd.f32 %v1604, %v1720
  %v1739 = vadd.f32 %v1605, %v1722
  %v1740 = vadd.f32 %v1606, %v1726
  %v1741 = vadd.f32 %v1607, %v1728
  %v1742 = vadd.f32 %v1608, %v1732
  %v1743 = vadd.f32 %v1609, %v1734
  %v1744 = vld [vmem:[%s1475 + $0x1] sm:$0xff]
  %v1745 = vld [vmem:[%s1475 + $0x9] sm:$0xff]
  %v1746 = vld [vmem:[%s1475 + $0x19] sm:$0xff]
  %v1747 = vld [vmem:[%s1475 + $0x21] sm:$0xff]
  %v1748 = vld [vmem:[%s1475 + $0x31] sm:$0xff]
  %v1749 = vld [vmem:[%s1475 + $0x39] sm:$0xff]
  %v1750 = vld [vmem:[%s1475 + $0x49] sm:$0xff]
  %v1751 = vld [vmem:[%s1475 + $0x51] sm:$0xff]
  %v1752 = vld [vmem:[%s1475 + $0x61] sm:$0xff]
  %v1753 = vld [vmem:[%s1475 + $0x69] sm:$0xff]
  %v1754 = vld [vmem:[%s1475 + $0x79] sm:$0xff]
  %v1755 = vld [vmem:[%s1475 + $0x81] sm:$0xff]
  %v1756 = vld [vmem:[%s1475 + $0x91] sm:$0xff]
  %v1757 = vld [vmem:[%s1475 + $0x99] sm:$0xff]
  %v1758 = vld [vmem:[%s1475 + $0xa9] sm:$0xff]
  %v1759 = vld [vmem:[%s1475 + $0xb1] sm:$0xff]
  %v1760 = vld [vmem:[%s1475 + $0xc1] sm:$0xff]
  %v1761 = vld [vmem:[%s1475 + $0xc9] sm:$0xff]
  %v1762 = vld [vmem:[%s1475 + $0xd9] sm:$0xff]
  %v1763 = vld [vmem:[%s1475 + $0xe1] sm:$0xff]
  %v1764 = vld [vmem:[%s1475 + $0xf1] sm:$0xff]
  %v1765 = vld [vmem:[%s1475 + $0xf9] sm:$0xff]
  %v1766 = vld [vmem:[%s1475 + $0x109] sm:$0xff]
  %v1767 = vld [vmem:[%s1475 + $0x111] sm:$0xff]
  %v1768 = vld [vmem:[%s1475 + $0x121] sm:$0xff]
  %v1769 = vld [vmem:[%s1475 + $0x129] sm:$0xff]
  %v1770 = vld [vmem:[%s1475 + $0x139] sm:$0xff]
  %v1771 = vld [vmem:[%s1475 + $0x141] sm:$0xff]
  %v1772 = vld [vmem:[%s1475 + $0x151] sm:$0xff]
  %v1773 = vld [vmem:[%s1475 + $0x159] sm:$0xff]
  %v1774 = vld [vmem:[%s1475 + $0x169] sm:$0xff]
  %v1775 = vld [vmem:[%s1475 + $0x171] sm:$0xff]
  %s1776 = scalar_lea.vmem %s1, 416
  %v1777 = vld [vmem:[%s1776] sm:$0xff]
  %v1778 = vld [vmem:[%s1776 + $0x8] sm:$0xff]
  %v1779 = vld [vmem:[%s1776 + $0x10] sm:$0xff]
  %v1780 = vld [vmem:[%s1776 + $0x18] sm:$0xff]
  %1781 = vmatprep.subr.mxu0 0.0
  %1782 = vmatpush1.xpose.msra.mxu0 %v1744
  %1783 = vmatprep.subr.mxu0 0.0
  %1784 = vmatpush1.xpose.msra.mxu0 %v1745
  %1785 = vmatprep.subr.mxu0 0.0
  %1786 = vmatpush1.xpose.msra.mxu0 %v1746
  %1787 = vmatprep.subr.mxu0 0.0
  %1788 = vmatpush1.xpose.msra.mxu0 %v1747
  %1789 = vmatprep.subr.mxu0 0.0
  %1790 = vmatpush1.xpose.msra.mxu0 %v1748
  %1791 = vmatprep.subr.mxu0 0.0
  %1792 = vmatpush1.xpose.msra.mxu0 %v1749
  %1793 = vmatprep.subr.mxu0 0.0
  %1794 = vmatpush1.xpose.msra.mxu0 %v1750
  %1795 = vmatprep.subr.mxu0 0.0
  %1796 = vmatpush1.xpose.msra.mxu0 %v1751
  %1797 = vmatprep.subr.mxu0 0.0
  %1798 = vmatpush1.xpose.msra.mxu0 %v1752
  %1799 = vmatprep.subr.mxu0 0.0
  %1800 = vmatpush1.xpose.msra.mxu0 %v1753
  %1801 = vmatprep.subr.mxu0 0.0
  %1802 = vmatpush1.xpose.msra.mxu0 %v1754
  %1803 = vmatprep.subr.mxu0 0.0
  %1804 = vmatpush1.xpose.msra.mxu0 %v1755
  %1805 = vmatprep.subr.mxu0 0.0
  %1806 = vmatpush1.xpose.msra.mxu0 %v1756
  %1807 = vmatprep.subr.mxu0 0.0
  %1808 = vmatpush1.xpose.msra.mxu0 %v1757
  %1809 = vmatprep.subr.mxu0 0.0
  %1810 = vmatpush1.xpose.msra.mxu0 %v1758
  %1811 = vmatprep.subr.mxu0 0.0
  %1812 = vmatpush1.xpose.msra.mxu0 %v1759
  %1813 = vmatprep.subr.mxu0 0.0
  %1814 = vmatpush1.xpose.msra.mxu0 %v1760
  %1815 = vmatprep.subr.mxu0 0.0
  %1816 = vmatpush1.xpose.msra.mxu0 %v1761
  %1817 = vmatprep.subr.mxu0 0.0
  %1818 = vmatpush1.xpose.msra.mxu0 %v1762
  %1819 = vmatprep.subr.mxu0 0.0
  %1820 = vmatpush1.xpose.msra.mxu0 %v1763
  %1821 = vmatprep.subr.mxu0 0.0
  %1822 = vmatpush1.xpose.msra.mxu0 %v1764
  %1823 = vmatprep.subr.mxu0 0.0
  %1824 = vmatpush1.xpose.msra.mxu0 %v1765
  %1825 = vmatprep.subr.mxu0 0.0
  %1826 = vmatpush1.xpose.msra.mxu0 %v1766
  %1827 = vmatprep.subr.mxu0 0.0
  %1828 = vmatpush1.xpose.msra.mxu0 %v1767
  %1829 = vmatprep.subr.mxu0 0.0
  %1830 = vmatpush1.xpose.msra.mxu0 %v1768
  %1831 = vmatprep.subr.mxu0 0.0
  %1832 = vmatpush1.xpose.msra.mxu0 %v1769
  %1833 = vmatprep.subr.mxu0 0.0
  %1834 = vmatpush1.xpose.msra.mxu0 %v1770
  %1835 = vmatprep.subr.mxu0 0.0
  %1836 = vmatpush1.xpose.msra.mxu0 %v1771
  %1837 = vmatprep.subr.mxu0 0.0
  %1838 = vmatpush1.xpose.msra.mxu0 %v1772
  %1839 = vmatprep.subr.mxu0 0.0
  %1840 = vmatpush1.xpose.msra.mxu0 %v1773
  %1841 = vmatprep.subr.mxu0 0.0
  %1842 = vmatpush1.xpose.msra.mxu0 %v1774
  %1843 = vmatprep.subr.mxu0 0.0
  %1844 = vmatpush1.xpose.msra.mxu0 %v1775
  %1845 = vmatprep.mubr.f32.mxu0 0.0
  %1846 = vmatmul.mubr.f32.gmra.mrb[0].mxu0 %v1777
  %v1847 = vpop.f32.mrb[0].mxu0
  %v1848 = vadd.f32 0.0, %v1847
  %v1849 = vpop.f32.mrb[0].mxu0
  %v1850 = vadd.f32 0.0, %v1849
  %1851 = vmatprep.mubr.f32.mxu0 0.0
  %1852 = vmatmul.mubr.f32.gmra.mrb[0].mxu0 %v1778
  %v1853 = vpop.f32.mrb[0].mxu0
  %v1854 = vadd.f32 0.0, %v1853
  %v1855 = vpop.f32.mrb[0].mxu0
  %v1856 = vadd.f32 0.0, %v1855
  %1857 = vmatprep.mubr.f32.mxu0 0.0
  %1858 = vmatmul.mubr.f32.gmra.mrb[0].mxu0 %v1779
  %v1859 = vpop.f32.mrb[0].mxu0
  %v1860 = vadd.f32 0.0, %v1859
  %v1861 = vpop.f32.mrb[0].mxu0
  %v1862 = vadd.f32 0.0, %v1861
  %1863 = vmatprep.mubr.f32.mxu0 0.0
  %1864 = vmatmul.mubr.f32.gmra.mrb[0].mxu0 %v1780
  %v1865 = vpop.f32.mrb[0].mxu0
  %v1866 = vadd.f32 0.0, %v1865
  %v1867 = vpop.f32.mrb[0].mxu0
  %v1868 = vadd.f32 0.0, %v1867
  %1869 = vdwg.mxu0
  %v1870 = vadd.f32 %v1736, %v1848
  %v1871 = vadd.f32 %v1737, %v1850
  %v1872 = vadd.f32 %v1738, %v1854
  %v1873 = vadd.f32 %v1739, %v1856
  %v1874 = vadd.f32 %v1740, %v1860
  %v1875 = vadd.f32 %v1741, %v1862
  %v1876 = vadd.f32 %v1742, %v1866
  %v1877 = vadd.f32 %v1743, %v1868
  %v1878 = vld [vmem:[%s1340 + $0x2] sm:$0xff]
  %v1879 = vld [vmem:[%s1340 + $0xa] sm:$0xff]
  %v1880 = vld [vmem:[%s1340 + $0x1a] sm:$0xff]
  %v1881 = vld [vmem:[%s1340 + $0x22] sm:$0xff]
  %v1882 = vld [vmem:[%s1340 + $0x32] sm:$0xff]
  %v1883 = vld [vmem:[%s1340 + $0x3a] sm:$0xff]
  %v1884 = vld [vmem:[%s1340 + $0x4a] sm:$0xff]
  %v1885 = vld [vmem:[%s1340 + $0x52] sm:$0xff]
  %v1886 = vld [vmem:[%s1340 + $0x62] sm:$0xff]
  %v1887 = vld [vmem:[%s1340 + $0x6a] sm:$0xff]
  %v1888 = vld [vmem:[%s1340 + $0x7a] sm:$0xff]
  %v1889 = vld [vmem:[%s1340 + $0x82] sm:$0xff]
  %v1890 = vld [vmem:[%s1340 + $0x92] sm:$0xff]
  %v1891 = vld [vmem:[%s1340 + $0x9a] sm:$0xff]
  %v1892 = vld [vmem:[%s1340 + $0xaa] sm:$0xff]
  %v1893 = vld [vmem:[%s1340 + $0xb2] sm:$0xff]
  %v1894 = vld [vmem:[%s1340 + $0xc2] sm:$0xff]
  %v1895 = vld [vmem:[%s1340 + $0xca] sm:$0xff]
  %v1896 = vld [vmem:[%s1340 + $0xda] sm:$0xff]
  %v1897 = vld [vmem:[%s1340 + $0xe2] sm:$0xff]
  %v1898 = vld [vmem:[%s1340 + $0xf2] sm:$0xff]
  %v1899 = vld [vmem:[%s1340 + $0xfa] sm:$0xff]
  %v1900 = vld [vmem:[%s1340 + $0x10a] sm:$0xff]
  %v1901 = vld [vmem:[%s1340 + $0x112] sm:$0xff]
  %v1902 = vld [vmem:[%s1340 + $0x122] sm:$0xff]
  %v1903 = vld [vmem:[%s1340 + $0x12a] sm:$0xff]
  %v1904 = vld [vmem:[%s1340 + $0x13a] sm:$0xff]
  %v1905 = vld [vmem:[%s1340 + $0x142] sm:$0xff]
  %v1906 = vld [vmem:[%s1340 + $0x152] sm:$0xff]
  %v1907 = vld [vmem:[%s1340 + $0x15a] sm:$0xff]
  %v1908 = vld [vmem:[%s1340 + $0x16a] sm:$0xff]
  %v1909 = vld [vmem:[%s1340 + $0x172] sm:$0xff]
  %s1910 = scalar_lea.vmem %s1, 448
  %v1911 = vld [vmem:[%s1910] sm:$0xff]
  %v1912 = vld [vmem:[%s1910 + $0x8] sm:$0xff]
  %v1913 = vld [vmem:[%s1910 + $0x10] sm:$0xff]
  %v1914 = vld [vmem:[%s1910 + $0x18] sm:$0xff]
  %1915 = vmatprep.subr.mxu0 0.0
  %1916 = vmatpush1.xpose.msra.mxu0 %v1878
  %1917 = vmatprep.subr.mxu0 0.0
  %1918 = vmatpush1.xpose.msra.mxu0 %v1879
  %1919 = vmatprep.subr.mxu0 0.0
  %1920 = vmatpush1.xpose.msra.mxu0 %v1880
  %1921 = vmatprep.subr.mxu0 0.0
  %1922 = vmatpush1.xpose.msra.mxu0 %v1881
  %1923 = vmatprep.subr.mxu0 0.0
  %1924 = vmatpush1.xpose.msra.mxu0 %v1882
  %1925 = vmatprep.subr.mxu0 0.0
  %1926 = vmatpush1.xpose.msra.mxu0 %v1883
  %1927 = vmatprep.subr.mxu0 0.0
  %1928 = vmatpush1.xpose.msra.mxu0 %v1884
  %1929 = vmatprep.subr.mxu0 0.0
  %1930 = vmatpush1.xpose.msra.mxu0 %v1885
  %1931 = vmatprep.subr.mxu0 0.0
  %1932 = vmatpush1.xpose.msra.mxu0 %v1886
  %1933 = vmatprep.subr.mxu0 0.0
  %1934 = vmatpush1.xpose.msra.mxu0 %v1887
  %1935 = vmatprep.subr.mxu0 0.0
  %1936 = vmatpush1.xpose.msra.mxu0 %v1888
  %1937 = vmatprep.subr.mxu0 0.0
  %1938 = vmatpush1.xpose.msra.mxu0 %v1889
  %1939 = vmatprep.subr.mxu0 0.0
  %1940 = vmatpush1.xpose.msra.mxu0 %v1890
  %1941 = vmatprep.subr.mxu0 0.0
  %1942 = vmatpush1.xpose.msra.mxu0 %v1891
  %1943 = vmatprep.subr.mxu0 0.0
  %1944 = vmatpush1.xpose.msra.mxu0 %v1892
  %1945 = vmatprep.subr.mxu0 0.0
  %1946 = vmatpush1.xpose.msra.mxu0 %v1893
  %1947 = vmatprep.subr.mxu0 0.0
  %1948 = vmatpush1.xpose.msra.mxu0 %v1894
  %1949 = vmatprep.subr.mxu0 0.0
  %1950 = vmatpush1.xpose.msra.mxu0 %v1895
  %1951 = vmatprep.subr.mxu0 0.0
  %1952 = vmatpush1.xpose.msra.mxu0 %v1896
  %1953 = vmatprep.subr.mxu0 0.0
  %1954 = vmatpush1.xpose.msra.mxu0 %v1897
  %1955 = vmatprep.subr.mxu0 0.0
  %1956 = vmatpush1.xpose.msra.mxu0 %v1898
  %1957 = vmatprep.subr.mxu0 0.0
  %1958 = vmatpush1.xpose.msra.mxu0 %v1899
  %1959 = vmatprep.subr.mxu0 0.0
  %1960 = vmatpush1.xpose.msra.mxu0 %v1900
  %1961 = vmatprep.subr.mxu0 0.0
  %1962 = vmatpush1.xpose.msra.mxu0 %v1901
  %1963 = vmatprep.subr.mxu0 0.0
  %1964 = vmatpush1.xpose.msra.mxu0 %v1902
  %1965 = vmatprep.subr.mxu0 0.0
  %1966 = vmatpush1.xpose.msra.mxu0 %v1903
  %1967 = vmatprep.subr.mxu0 0.0
  %1968 = vmatpush1.xpose.msra.mxu0 %v1904
  %1969 = vmatprep.subr.mxu0 0.0
  %1970 = vmatpush1.xpose.msra.mxu0 %v1905
  %1971 = vmatprep.subr.mxu0 0.0
  %1972 = vmatpush1.xpose.msra.mxu0 %v1906
  %1973 = vmatprep.subr.mxu0 0.0
  %1974 = vmatpush1.xpose.msra.mxu0 %v1907
  %1975 = vmatprep.subr.mxu0 0.0
  %1976 = vmatpush1.xpose.msra.mxu0 %v1908
  %1977 = vmatprep.subr.mxu0 0.0
  %1978 = vmatpush1.xpose.msra.mxu0 %v1909
  %1979 = vmatprep.mubr.f32.mxu0 0.0
  %1980 = vmatmul.mubr.f32.gmra.mrb[0].mxu0 %v1911
  %v1981 = vpop.f32.mrb[0].mxu0
  %v1982 = vadd.f32 0.0, %v1981
  %v1983 = vpop.f32.mrb[0].mxu0
  %v1984 = vadd.f32 0.0, %v1983
  %1985 = vmatprep.mubr.f32.mxu0 0.0
  %1986 = vmatmul.mubr.f32.gmra.mrb[0].mxu0 %v1912
  %v1987 = vpop.f32.mrb[0].mxu0
  %v1988 = vadd.f32 0.0, %v1987
  %v1989 = vpop.f32.mrb[0].mxu0
  %v1990 = vadd.f32 0.0, %v1989
  %1991 = vmatprep.mubr.f32.mxu0 0.0
  %1992 = vmatmul.mubr.f32.gmra.mrb[0].mxu0 %v1913
  %v1993 = vpop.f32.mrb[0].mxu0
  %v1994 = vadd.f32 0.0, %v1993
  %v1995 = vpop.f32.mrb[0].mxu0
  %v1996 = vadd.f32 0.0, %v1995
  %1997 = vmatprep.mubr.f32.mxu0 0.0
  %1998 = vmatmul.mubr.f32.gmra.mrb[0].mxu0 %v1914
  %v1999 = vpop.f32.mrb[0].mxu0
  %v2000 = vadd.f32 0.0, %v1999
  %v2001 = vpop.f32.mrb[0].mxu0
  %v2002 = vadd.f32 0.0, %v2001
  %2003 = vdwg.mxu0
  %v2004 = vadd.f32 %v1870, %v1982
  %v2005 = vadd.f32 %v1871, %v1984
  %v2006 = vadd.f32 %v1872, %v1988
  %v2007 = vadd.f32 %v1873, %v1990
  %v2008 = vadd.f32 %v1874, %v1994
  %v2009 = vadd.f32 %v1875, %v1996
  %v2010 = vadd.f32 %v1876, %v2000
  %v2011 = vadd.f32 %v1877, %v2002
  %s2012 = scalar_lea.vmem %s0, 888
  %v2013 = vld [vmem:[%s2012] sm:$0xff]
  %v2014 = vld [vmem:[%s2012 + $0x8] sm:$0xff]
  %v2015 = vld [vmem:[%s2012 + $0x18] sm:$0xff]
  %v2016 = vld [vmem:[%s2012 + $0x20] sm:$0xff]
  %v2017 = vld [vmem:[%s2012 + $0x30] sm:$0xff]
  %v2018 = vld [vmem:[%s2012 + $0x38] sm:$0xff]
  %v2019 = vld [vmem:[%s2012 + $0x48] sm:$0xff]
  %v2020 = vld [vmem:[%s2012 + $0x50] sm:$0xff]
  %v2021 = vld [vmem:[%s2012 + $0x60] sm:$0xff]
  %v2022 = vld [vmem:[%s2012 + $0x68] sm:$0xff]
  %v2023 = vld [vmem:[%s2012 + $0x78] sm:$0xff]
  %v2024 = vld [vmem:[%s2012 + $0x80] sm:$0xff]
  %v2025 = vld [vmem:[%s2012 + $0x90] sm:$0xff]
  %v2026 = vld [vmem:[%s2012 + $0x98] sm:$0xff]
  %v2027 = vld [vmem:[%s2012 + $0xa8] sm:$0xff]
  %v2028 = vld [vmem:[%s2012 + $0xb0] sm:$0xff]
  %v2029 = vld [vmem:[%s2012 + $0xc0] sm:$0xff]
  %v2030 = vld [vmem:[%s2012 + $0xc8] sm:$0xff]
  %v2031 = vld [vmem:[%s2012 + $0xd8] sm:$0xff]
  %v2032 = vld [vmem:[%s2012 + $0xe0] sm:$0xff]
  %v2033 = vld [vmem:[%s2012 + $0xf0] sm:$0xff]
  %v2034 = vld [vmem:[%s2012 + $0xf8] sm:$0xff]
  %v2035 = vld [vmem:[%s2012 + $0x108] sm:$0xff]
  %v2036 = vld [vmem:[%s2012 + $0x110] sm:$0xff]
  %v2037 = vld [vmem:[%s2012 + $0x120] sm:$0xff]
  %v2038 = vld [vmem:[%s2012 + $0x128] sm:$0xff]
  %v2039 = vld [vmem:[%s2012 + $0x138] sm:$0xff]
  %v2040 = vld [vmem:[%s2012 + $0x140] sm:$0xff]
  %v2041 = vld [vmem:[%s2012 + $0x150] sm:$0xff]
  %v2042 = vld [vmem:[%s2012 + $0x158] sm:$0xff]
  %v2043 = vld [vmem:[%s2012 + $0x168] sm:$0xff]
  %v2044 = vld [vmem:[%s2012 + $0x170] sm:$0xff]
  %s2045 = scalar_lea.vmem %s1, 480
  %v2046 = vld [vmem:[%s2045] sm:$0xff]
  %v2047 = vld [vmem:[%s2045 + $0x8] sm:$0xff]
  %v2048 = vld [vmem:[%s2045 + $0x10] sm:$0xff]
  %v2049 = vld [vmem:[%s2045 + $0x18] sm:$0xff]
  %2050 = vmatprep.subr.mxu0 0.0
  %2051 = vmatpush1.xpose.msra.mxu0 %v2013
  %2052 = vmatprep.subr.mxu0 0.0
  %2053 = vmatpush1.xpose.msra.mxu0 %v2014
  %2054 = vmatprep.subr.mxu0 0.0
  %2055 = vmatpush1.xpose.msra.mxu0 %v2015
  %2056 = vmatprep.subr.mxu0 0.0
  %2057 = vmatpush1.xpose.msra.mxu0 %v2016
  %2058 = vmatprep.subr.mxu0 0.0
  %2059 = vmatpush1.xpose.msra.mxu0 %v2017
  %2060 = vmatprep.subr.mxu0 0.0
  %2061 = vmatpush1.xpose.msra.mxu0 %v2018
  %2062 = vmatprep.subr.mxu0 0.0
  %2063 = vmatpush1.xpose.msra.mxu0 %v2019
  %2064 = vmatprep.subr.mxu0 0.0
  %2065 = vmatpush1.xpose.msra.mxu0 %v2020
  %2066 = vmatprep.subr.mxu0 0.0
  %2067 = vmatpush1.xpose.msra.mxu0 %v2021
  %2068 = vmatprep.subr.mxu0 0.0
  %2069 = vmatpush1.xpose.msra.mxu0 %v2022
  %2070 = vmatprep.subr.mxu0 0.0
  %2071 = vmatpush1.xpose.msra.mxu0 %v2023
  %2072 = vmatprep.subr.mxu0 0.0
  %2073 = vmatpush1.xpose.msra.mxu0 %v2024
  %2074 = vmatprep.subr.mxu0 0.0
  %2075 = vmatpush1.xpose.msra.mxu0 %v2025
  %2076 = vmatprep.subr.mxu0 0.0
  %2077 = vmatpush1.xpose.msra.mxu0 %v2026
  %2078 = vmatprep.subr.mxu0 0.0
  %2079 = vmatpush1.xpose.msra.mxu0 %v2027
  %2080 = vmatprep.subr.mxu0 0.0
  %2081 = vmatpush1.xpose.msra.mxu0 %v2028
  %2082 = vmatprep.subr.mxu0 0.0
  %2083 = vmatpush1.xpose.msra.mxu0 %v2029
  %2084 = vmatprep.subr.mxu0 0.0
  %2085 = vmatpush1.xpose.msra.mxu0 %v2030
  %2086 = vmatprep.subr.mxu0 0.0
  %2087 = vmatpush1.xpose.msra.mxu0 %v2031
  %2088 = vmatprep.subr.mxu0 0.0
  %2089 = vmatpush1.xpose.msra.mxu0 %v2032
  %2090 = vmatprep.subr.mxu0 0.0
  %2091 = vmatpush1.xpose.msra.mxu0 %v2033
  %2092 = vmatprep.subr.mxu0 0.0
  %2093 = vmatpush1.xpose.msra.mxu0 %v2034
  %2094 = vmatprep.subr.mxu0 0.0
  %2095 = vmatpush1.xpose.msra.mxu0 %v2035
  %2096 = vmatprep.subr.mxu0 0.0
  %2097 = vmatpush1.xpose.msra.mxu0 %v2036
  %2098 = vmatprep.subr.mxu0 0.0
  %2099 = vmatpush1.xpose.msra.mxu0 %v2037
  %2100 = vmatprep.subr.mxu0 0.0
  %2101 = vmatpush1.xpose.msra.mxu0 %v2038
  %2102 = vmatprep.subr.mxu0 0.0
  %2103 = vmatpush1.xpose.msra.mxu0 %v2039
  %2104 = vmatprep.subr.mxu0 0.0
  %2105 = vmatpush1.xpose.msra.mxu0 %v2040
  %2106 = vmatprep.subr.mxu0 0.0
  %2107 = vmatpush1.xpose.msra.mxu0 %v2041
  %2108 = vmatprep.subr.mxu0 0.0
  %2109 = vmatpush1.xpose.msra.mxu0 %v2042
  %2110 = vmatprep.subr.mxu0 0.0
  %2111 = vmatpush1.xpose.msra.mxu0 %v2043
  %2112 = vmatprep.subr.mxu0 0.0
  %2113 = vmatpush1.xpose.msra.mxu0 %v2044
  %2114 = vmatprep.mubr.f32.mxu0 0.0
  %2115 = vmatmul.mubr.f32.gmra.mrb[0].mxu0 %v2046
  %v2116 = vpop.f32.mrb[0].mxu0
  %v2117 = vadd.f32 0.0, %v2116
  %v2118 = vpop.f32.mrb[0].mxu0
  %v2119 = vadd.f32 0.0, %v2118
  %2120 = vmatprep.mubr.f32.mxu0 0.0
  %2121 = vmatmul.mubr.f32.gmra.mrb[0].mxu0 %v2047
  %v2122 = vpop.f32.mrb[0].mxu0
  %v2123 = vadd.f32 0.0, %v2122
  %v2124 = vpop.f32.mrb[0].mxu0
  %v2125 = vadd.f32 0.0, %v2124
  %2126 = vmatprep.mubr.f32.mxu0 0.0
  %2127 = vmatmul.mubr.f32.gmra.mrb[0].mxu0 %v2048
  %v2128 = vpop.f32.mrb[0].mxu0
  %v2129 = vadd.f32 0.0, %v2128
  %v2130 = vpop.f32.mrb[0].mxu0
  %v2131 = vadd.f32 0.0, %v2130
  %2132 = vmatprep.mubr.f32.mxu0 0.0
  %2133 = vmatmul.mubr.f32.gmra.mrb[0].mxu0 %v2049
  %v2134 = vpop.f32.mrb[0].mxu0
  %v2135 = vadd.f32 0.0, %v2134
  %v2136 = vpop.f32.mrb[0].mxu0
  %v2137 = vadd.f32 0.0, %v2136
  %2138 = vdwg.mxu0
  %v2139 = vadd.f32 %v2004, %v2117
  %v2140 = vadd.f32 %v2005, %v2119
  %v2141 = vadd.f32 %v2006, %v2123
  %v2142 = vadd.f32 %v2007, %v2125
  %v2143 = vadd.f32 %v2008, %v2129
  %v2144 = vadd.f32 %v2009, %v2131
  %v2145 = vadd.f32 %v2010, %v2135
  %v2146 = vadd.f32 %v2011, %v2137
  %s2147 = scalar_lea.vmem %s0, 1320
  %v2148 = vld [vmem:[%s2147] sm:$0xff]
  %v2149 = vld [vmem:[%s2147 + $0x8] sm:$0xff]
  %v2150 = vld [vmem:[%s2147 + $0x18] sm:$0xff]
  %v2151 = vld [vmem:[%s2147 + $0x20] sm:$0xff]
  %v2152 = vld [vmem:[%s2147 + $0x30] sm:$0xff]
  %v2153 = vld [vmem:[%s2147 + $0x38] sm:$0xff]
  %v2154 = vld [vmem:[%s2147 + $0x48] sm:$0xff]
  %v2155 = vld [vmem:[%s2147 + $0x50] sm:$0xff]
  %v2156 = vld [vmem:[%s2147 + $0x60] sm:$0xff]
  %v2157 = vld [vmem:[%s2147 + $0x68] sm:$0xff]
  %v2158 = vld [vmem:[%s2147 + $0x78] sm:$0xff]
  %v2159 = vld [vmem:[%s2147 + $0x80] sm:$0xff]
  %v2160 = vld [vmem:[%s2147 + $0x90] sm:$0xff]
  %v2161 = vld [vmem:[%s2147 + $0x98] sm:$0xff]
  %v2162 = vld [vmem:[%s2147 + $0xa8] sm:$0xff]
  %v2163 = vld [vmem:[%s2147 + $0xb0] sm:$0xff]
  %v2164 = vld [vmem:[%s2147 + $0xc0] sm:$0xff]
  %v2165 = vld [vmem:[%s2147 + $0xc8] sm:$0xff]
  %v2166 = vld [vmem:[%s2147 + $0xd8] sm:$0xff]
  %v2167 = vld [vmem:[%s2147 + $0xe0] sm:$0xff]
  %v2168 = vld [vmem:[%s2147 + $0xf0] sm:$0xff]
  %v2169 = vld [vmem:[%s2147 + $0xf8] sm:$0xff]
  %v2170 = vld [vmem:[%s2147 + $0x108] sm:$0xff]
  %v2171 = vld [vmem:[%s2147 + $0x110] sm:$0xff]
  %v2172 = vld [vmem:[%s2147 + $0x120] sm:$0xff]
  %v2173 = vld [vmem:[%s2147 + $0x128] sm:$0xff]
  %v2174 = vld [vmem:[%s2147 + $0x138] sm:$0xff]
  %v2175 = vld [vmem:[%s2147 + $0x140] sm:$0xff]
  %v2176 = vld [vmem:[%s2147 + $0x150] sm:$0xff]
  %v2177 = vld [vmem:[%s2147 + $0x158] sm:$0xff]
  %v2178 = vld [vmem:[%s2147 + $0x168] sm:$0xff]
  %v2179 = vld [vmem:[%s2147 + $0x170] sm:$0xff]
  %s2180 = scalar_lea.vmem %s1, 512
  %v2181 = vld [vmem:[%s2180] sm:$0xff]
  %v2182 = vld [vmem:[%s2180 + $0x8] sm:$0xff]
  %v2183 = vld [vmem:[%s2180 + $0x10] sm:$0xff]
  %v2184 = vld [vmem:[%s2180 + $0x18] sm:$0xff]
  %2185 = vmatprep.subr.mxu0 0.0
  %2186 = vmatpush1.xpose.msra.mxu0 %v2148
  %2187 = vmatprep.subr.mxu0 0.0
  %2188 = vmatpush1.xpose.msra.mxu0 %v2149
  %2189 = vmatprep.subr.mxu0 0.0
  %2190 = vmatpush1.xpose.msra.mxu0 %v2150
  %2191 = vmatprep.subr.mxu0 0.0
  %2192 = vmatpush1.xpose.msra.mxu0 %v2151
  %2193 = vmatprep.subr.mxu0 0.0
  %2194 = vmatpush1.xpose.msra.mxu0 %v2152
  %2195 = vmatprep.subr.mxu0 0.0
  %2196 = vmatpush1.xpose.msra.mxu0 %v2153
  %2197 = vmatprep.subr.mxu0 0.0
  %2198 = vmatpush1.xpose.msra.mxu0 %v2154
  %2199 = vmatprep.subr.mxu0 0.0
  %2200 = vmatpush1.xpose.msra.mxu0 %v2155
  %2201 = vmatprep.subr.mxu0 0.0
  %2202 = vmatpush1.xpose.msra.mxu0 %v2156
  %2203 = vmatprep.subr.mxu0 0.0
  %2204 = vmatpush1.xpose.msra.mxu0 %v2157
  %2205 = vmatprep.subr.mxu0 0.0
  %2206 = vmatpush1.xpose.msra.mxu0 %v2158
  %2207 = vmatprep.subr.mxu0 0.0
  %2208 = vmatpush1.xpose.msra.mxu0 %v2159
  %2209 = vmatprep.subr.mxu0 0.0
  %2210 = vmatpush1.xpose.msra.mxu0 %v2160
  %2211 = vmatprep.subr.mxu0 0.0
  %2212 = vmatpush1.xpose.msra.mxu0 %v2161
  %2213 = vmatprep.subr.mxu0 0.0
  %2214 = vmatpush1.xpose.msra.mxu0 %v2162
  %2215 = vmatprep.subr.mxu0 0.0
  %2216 = vmatpush1.xpose.msra.mxu0 %v2163
  %2217 = vmatprep.subr.mxu0 0.0
  %2218 = vmatpush1.xpose.msra.mxu0 %v2164
  %2219 = vmatprep.subr.mxu0 0.0
  %2220 = vmatpush1.xpose.msra.mxu0 %v2165
  %2221 = vmatprep.subr.mxu0 0.0
  %2222 = vmatpush1.xpose.msra.mxu0 %v2166
  %2223 = vmatprep.subr.mxu0 0.0
  %2224 = vmatpush1.xpose.msra.mxu0 %v2167
  %2225 = vmatprep.subr.mxu0 0.0
  %2226 = vmatpush1.xpose.msra.mxu0 %v2168
  %2227 = vmatprep.subr.mxu0 0.0
  %2228 = vmatpush1.xpose.msra.mxu0 %v2169
  %2229 = vmatprep.subr.mxu0 0.0
  %2230 = vmatpush1.xpose.msra.mxu0 %v2170
  %2231 = vmatprep.subr.mxu0 0.0
  %2232 = vmatpush1.xpose.msra.mxu0 %v2171
  %2233 = vmatprep.subr.mxu0 0.0
  %2234 = vmatpush1.xpose.msra.mxu0 %v2172
  %2235 = vmatprep.subr.mxu0 0.0
  %2236 = vmatpush1.xpose.msra.mxu0 %v2173
  %2237 = vmatprep.subr.mxu0 0.0
  %2238 = vmatpush1.xpose.msra.mxu0 %v2174
  %2239 = vmatprep.subr.mxu0 0.0
  %2240 = vmatpush1.xpose.msra.mxu0 %v2175
  %2241 = vmatprep.subr.mxu0 0.0
  %2242 = vmatpush1.xpose.msra.mxu0 %v2176
  %2243 = vmatprep.subr.mxu0 0.0
  %2244 = vmatpush1.xpose.msra.mxu0 %v2177
  %2245 = vmatprep.subr.mxu0 0.0
  %2246 = vmatpush1.xpose.msra.mxu0 %v2178
  %2247 = vmatprep.subr.mxu0 0.0
  %2248 = vmatpush1.xpose.msra.mxu0 %v2179
  %2249 = vmatprep.mubr.f32.mxu0 0.0
  %2250 = vmatmul.mubr.f32.gmra.mrb[0].mxu0 %v2181
  %v2251 = vpop.f32.mrb[0].mxu0
  %v2252 = vadd.f32 0.0, %v2251
  %v2253 = vpop.f32.mrb[0].mxu0
  %v2254 = vadd.f32 0.0, %v2253
  %2255 = vmatprep.mubr.f32.mxu0 0.0
  %2256 = vmatmul.mubr.f32.gmra.mrb[0].mxu0 %v2182
  %v2257 = vpop.f32.mrb[0].mxu0
  %v2258 = vadd.f32 0.0, %v2257
  %v2259 = vpop.f32.mrb[0].mxu0
  %v2260 = vadd.f32 0.0, %v2259
  %2261 = vmatprep.mubr.f32.mxu0 0.0
  %2262 = vmatmul.mubr.f32.gmra.mrb[0].mxu0 %v2183
  %v2263 = vpop.f32.mrb[0].mxu0
  %v2264 = vadd.f32 0.0, %v2263
  %v2265 = vpop.f32.mrb[0].mxu0
  %v2266 = vadd.f32 0.0, %v2265
  %2267 = vmatprep.mubr.f32.mxu0 0.0
  %2268 = vmatmul.mubr.f32.gmra.mrb[0].mxu0 %v2184
  %v2269 = vpop.f32.mrb[0].mxu0
  %v2270 = vadd.f32 0.0, %v2269
  %v2271 = vpop.f32.mrb[0].mxu0
  %v2272 = vadd.f32 0.0, %v2271
  %2273 = vdwg.mxu0
  %v2274 = vadd.f32 %v2139, %v2252
  %v2275 = vadd.f32 %v2140, %v2254
  %v2276 = vadd.f32 %v2141, %v2258
  %v2277 = vadd.f32 %v2142, %v2260
  %v2278 = vadd.f32 %v2143, %v2264
  %v2279 = vadd.f32 %v2144, %v2266
  %v2280 = vadd.f32 %v2145, %v2270
  %v2281 = vadd.f32 %v2146, %v2272
  %v2282 = vld [vmem:[%s2012 + $0x1] sm:$0xff]
  %v2283 = vld [vmem:[%s2012 + $0x9] sm:$0xff]
  %v2284 = vld [vmem:[%s2012 + $0x19] sm:$0xff]
  %v2285 = vld [vmem:[%s2012 + $0x21] sm:$0xff]
  %v2286 = vld [vmem:[%s2012 + $0x31] sm:$0xff]
  %v2287 = vld [vmem:[%s2012 + $0x39] sm:$0xff]
  %v2288 = vld [vmem:[%s2012 + $0x49] sm:$0xff]
  %v2289 = vld [vmem:[%s2012 + $0x51] sm:$0xff]
  %v2290 = vld [vmem:[%s2012 + $0x61] sm:$0xff]
  %v2291 = vld [vmem:[%s2012 + $0x69] sm:$0xff]
  %v2292 = vld [vmem:[%s2012 + $0x79] sm:$0xff]
  %v2293 = vld [vmem:[%s2012 + $0x81] sm:$0xff]
  %v2294 = vld [vmem:[%s2012 + $0x91] sm:$0xff]
  %v2295 = vld [vmem:[%s2012 + $0x99] sm:$0xff]
  %v2296 = vld [vmem:[%s2012 + $0xa9] sm:$0xff]
  %v2297 = vld [vmem:[%s2012 + $0xb1] sm:$0xff]
  %v2298 = vld [vmem:[%s2012 + $0xc1] sm:$0xff]
  %v2299 = vld [vmem:[%s2012 + $0xc9] sm:$0xff]
  %v2300 = vld [vmem:[%s2012 + $0xd9] sm:$0xff]
  %v2301 = vld [vmem:[%s2012 + $0xe1] sm:$0xff]
  %v2302 = vld [vmem:[%s2012 + $0xf1] sm:$0xff]
  %v2303 = vld [vmem:[%s2012 + $0xf9] sm:$0xff]
  %v2304 = vld [vmem:[%s2012 + $0x109] sm:$0xff]
  %v2305 = vld [vmem:[%s2012 + $0x111] sm:$0xff]
  %v2306 = vld [vmem:[%s2012 + $0x121] sm:$0xff]
  %v2307 = vld [vmem:[%s2012 + $0x129] sm:$0xff]
  %v2308 = vld [vmem:[%s2012 + $0x139] sm:$0xff]
  %v2309 = vld [vmem:[%s2012 + $0x141] sm:$0xff]
  %v2310 = vld [vmem:[%s2012 + $0x151] sm:$0xff]
  %v2311 = vld [vmem:[%s2012 + $0x159] sm:$0xff]
  %v2312 = vld [vmem:[%s2012 + $0x169] sm:$0xff]
  %v2313 = vld [vmem:[%s2012 + $0x171] sm:$0xff]
  %s2314 = scalar_lea.vmem %s1, 544
  %v2315 = vld [vmem:[%s2314] sm:$0xff]
  %v2316 = vld [vmem:[%s2314 + $0x8] sm:$0xff]
  %v2317 = vld [vmem:[%s2314 + $0x10] sm:$0xff]
  %v2318 = vld [vmem:[%s2314 + $0x18] sm:$0xff]
  %2319 = vmatprep.subr.mxu0 0.0
  %2320 = vmatpush1.xpose.msra.mxu0 %v2282
  %2321 = vmatprep.subr.mxu0 0.0
  %2322 = vmatpush1.xpose.msra.mxu0 %v2283
  %2323 = vmatprep.subr.mxu0 0.0
  %2324 = vmatpush1.xpose.msra.mxu0 %v2284
  %2325 = vmatprep.subr.mxu0 0.0
  %2326 = vmatpush1.xpose.msra.mxu0 %v2285
  %2327 = vmatprep.subr.mxu0 0.0
  %2328 = vmatpush1.xpose.msra.mxu0 %v2286
  %2329 = vmatprep.subr.mxu0 0.0
  %2330 = vmatpush1.xpose.msra.mxu0 %v2287
  %2331 = vmatprep.subr.mxu0 0.0
  %2332 = vmatpush1.xpose.msra.mxu0 %v2288
  %2333 = vmatprep.subr.mxu0 0.0
  %2334 = vmatpush1.xpose.msra.mxu0 %v2289
  %2335 = vmatprep.subr.mxu0 0.0
  %2336 = vmatpush1.xpose.msra.mxu0 %v2290
  %2337 = vmatprep.subr.mxu0 0.0
  %2338 = vmatpush1.xpose.msra.mxu0 %v2291
  %2339 = vmatprep.subr.mxu0 0.0
  %2340 = vmatpush1.xpose.msra.mxu0 %v2292
  %2341 = vmatprep.subr.mxu0 0.0
  %2342 = vmatpush1.xpose.msra.mxu0 %v2293
  %2343 = vmatprep.subr.mxu0 0.0
  %2344 = vmatpush1.xpose.msra.mxu0 %v2294
  %2345 = vmatprep.subr.mxu0 0.0
  %2346 = vmatpush1.xpose.msra.mxu0 %v2295
  %2347 = vmatprep.subr.mxu0 0.0
  %2348 = vmatpush1.xpose.msra.mxu0 %v2296
  %2349 = vmatprep.subr.mxu0 0.0
  %2350 = vmatpush1.xpose.msra.mxu0 %v2297
  %2351 = vmatprep.subr.mxu0 0.0
  %2352 = vmatpush1.xpose.msra.mxu0 %v2298
  %2353 = vmatprep.subr.mxu0 0.0
  %2354 = vmatpush1.xpose.msra.mxu0 %v2299
  %2355 = vmatprep.subr.mxu0 0.0
  %2356 = vmatpush1.xpose.msra.mxu0 %v2300
  %2357 = vmatprep.subr.mxu0 0.0
  %2358 = vmatpush1.xpose.msra.mxu0 %v2301
  %2359 = vmatprep.subr.mxu0 0.0
  %2360 = vmatpush1.xpose.msra.mxu0 %v2302
  %2361 = vmatprep.subr.mxu0 0.0
  %2362 = vmatpush1.xpose.msra.mxu0 %v2303
  %2363 = vmatprep.subr.mxu0 0.0
  %2364 = vmatpush1.xpose.msra.mxu0 %v2304
  %2365 = vmatprep.subr.mxu0 0.0
  %2366 = vmatpush1.xpose.msra.mxu0 %v2305
  %2367 = vmatprep.subr.mxu0 0.0
  %2368 = vmatpush1.xpose.msra.mxu0 %v2306
  %2369 = vmatprep.subr.mxu0 0.0
  %2370 = vmatpush1.xpose.msra.mxu0 %v2307
  %2371 = vmatprep.subr.mxu0 0.0
  %2372 = vmatpush1.xpose.msra.mxu0 %v2308
  %2373 = vmatprep.subr.mxu0 0.0
  %2374 = vmatpush1.xpose.msra.mxu0 %v2309
  %2375 = vmatprep.subr.mxu0 0.0
  %2376 = vmatpush1.xpose.msra.mxu0 %v2310
  %2377 = vmatprep.subr.mxu0 0.0
  %2378 = vmatpush1.xpose.msra.mxu0 %v2311
  %2379 = vmatprep.subr.mxu0 0.0
  %2380 = vmatpush1.xpose.msra.mxu0 %v2312
  %2381 = vmatprep.subr.mxu0 0.0
  %2382 = vmatpush1.xpose.msra.mxu0 %v2313
  %2383 = vmatprep.mubr.f32.mxu0 0.0
  %2384 = vmatmul.mubr.f32.gmra.mrb[0].mxu0 %v2315
  %v2385 = vpop.f32.mrb[0].mxu0
  %v2386 = vadd.f32 0.0, %v2385
  %v2387 = vpop.f32.mrb[0].mxu0
  %v2388 = vadd.f32 0.0, %v2387
  %2389 = vmatprep.mubr.f32.mxu0 0.0
  %2390 = vmatmul.mubr.f32.gmra.mrb[0].mxu0 %v2316
  %v2391 = vpop.f32.mrb[0].mxu0
  %v2392 = vadd.f32 0.0, %v2391
  %v2393 = vpop.f32.mrb[0].mxu0
  %v2394 = vadd.f32 0.0, %v2393
  %2395 = vmatprep.mubr.f32.mxu0 0.0
  %2396 = vmatmul.mubr.f32.gmra.mrb[0].mxu0 %v2317
  %v2397 = vpop.f32.mrb[0].mxu0
  %v2398 = vadd.f32 0.0, %v2397
  %v2399 = vpop.f32.mrb[0].mxu0
  %v2400 = vadd.f32 0.0, %v2399
  %2401 = vmatprep.mubr.f32.mxu0 0.0
  %2402 = vmatmul.mubr.f32.gmra.mrb[0].mxu0 %v2318
  %v2403 = vpop.f32.mrb[0].mxu0
  %v2404 = vadd.f32 0.0, %v2403
  %v2405 = vpop.f32.mrb[0].mxu0
  %v2406 = vadd.f32 0.0, %v2405
  %2407 = vdwg.mxu0
  %v2408 = vadd.f32 %v2274, %v2386
  %v2409 = vadd.f32 %v2275, %v2388
  %v2410 = vadd.f32 %v2276, %v2392
  %v2411 = vadd.f32 %v2277, %v2394
  %v2412 = vadd.f32 %v2278, %v2398
  %v2413 = vadd.f32 %v2279, %v2400
  %v2414 = vadd.f32 %v2280, %v2404
  %v2415 = vadd.f32 %v2281, %v2406
  %v2416 = vld [vmem:[%s2147 + $0x1] sm:$0xff]
  %v2417 = vld [vmem:[%s2147 + $0x9] sm:$0xff]
  %v2418 = vld [vmem:[%s2147 + $0x19] sm:$0xff]
  %v2419 = vld [vmem:[%s2147 + $0x21] sm:$0xff]
  %v2420 = vld [vmem:[%s2147 + $0x31] sm:$0xff]
  %v2421 = vld [vmem:[%s2147 + $0x39] sm:$0xff]
  %v2422 = vld [vmem:[%s2147 + $0x49] sm:$0xff]
  %v2423 = vld [vmem:[%s2147 + $0x51] sm:$0xff]
  %v2424 = vld [vmem:[%s2147 + $0x61] sm:$0xff]
  %v2425 = vld [vmem:[%s2147 + $0x69] sm:$0xff]
  %v2426 = vld [vmem:[%s2147 + $0x79] sm:$0xff]
  %v2427 = vld [vmem:[%s2147 + $0x81] sm:$0xff]
  %v2428 = vld [vmem:[%s2147 + $0x91] sm:$0xff]
  %v2429 = vld [vmem:[%s2147 + $0x99] sm:$0xff]
  %v2430 = vld [vmem:[%s2147 + $0xa9] sm:$0xff]
  %v2431 = vld [vmem:[%s2147 + $0xb1] sm:$0xff]
  %v2432 = vld [vmem:[%s2147 + $0xc1] sm:$0xff]
  %v2433 = vld [vmem:[%s2147 + $0xc9] sm:$0xff]
  %v2434 = vld [vmem:[%s2147 + $0xd9] sm:$0xff]
  %v2435 = vld [vmem:[%s2147 + $0xe1] sm:$0xff]
  %v2436 = vld [vmem:[%s2147 + $0xf1] sm:$0xff]
  %v2437 = vld [vmem:[%s2147 + $0xf9] sm:$0xff]
  %v2438 = vld [vmem:[%s2147 + $0x109] sm:$0xff]
  %v2439 = vld [vmem:[%s2147 + $0x111] sm:$0xff]
  %v2440 = vld [vmem:[%s2147 + $0x121] sm:$0xff]
  %v2441 = vld [vmem:[%s2147 + $0x129] sm:$0xff]
  %v2442 = vld [vmem:[%s2147 + $0x139] sm:$0xff]
  %v2443 = vld [vmem:[%s2147 + $0x141] sm:$0xff]
  %v2444 = vld [vmem:[%s2147 + $0x151] sm:$0xff]
  %v2445 = vld [vmem:[%s2147 + $0x159] sm:$0xff]
  %v2446 = vld [vmem:[%s2147 + $0x169] sm:$0xff]
  %v2447 = vld [vmem:[%s2147 + $0x171] sm:$0xff]
  %s2448 = scalar_lea.vmem %s1, 576
  %v2449 = vld [vmem:[%s2448] sm:$0xff]
  %v2450 = vld [vmem:[%s2448 + $0x8] sm:$0xff]
  %v2451 = vld [vmem:[%s2448 + $0x10] sm:$0xff]
  %v2452 = vld [vmem:[%s2448 + $0x18] sm:$0xff]
  %2453 = vmatprep.subr.mxu0 0.0
  %2454 = vmatpush1.xpose.msra.mxu0 %v2416
  %2455 = vmatprep.subr.mxu0 0.0
  %2456 = vmatpush1.xpose.msra.mxu0 %v2417
  %2457 = vmatprep.subr.mxu0 0.0
  %2458 = vmatpush1.xpose.msra.mxu0 %v2418
  %2459 = vmatprep.subr.mxu0 0.0
  %2460 = vmatpush1.xpose.msra.mxu0 %v2419
  %2461 = vmatprep.subr.mxu0 0.0
  %2462 = vmatpush1.xpose.msra.mxu0 %v2420
  %2463 = vmatprep.subr.mxu0 0.0
  %2464 = vmatpush1.xpose.msra.mxu0 %v2421
  %2465 = vmatprep.subr.mxu0 0.0
  %2466 = vmatpush1.xpose.msra.mxu0 %v2422
  %2467 = vmatprep.subr.mxu0 0.0
  %2468 = vmatpush1.xpose.msra.mxu0 %v2423
  %2469 = vmatprep.subr.mxu0 0.0
  %2470 = vmatpush1.xpose.msra.mxu0 %v2424
  %2471 = vmatprep.subr.mxu0 0.0
  %2472 = vmatpush1.xpose.msra.mxu0 %v2425
  %2473 = vmatprep.subr.mxu0 0.0
  %2474 = vmatpush1.xpose.msra.mxu0 %v2426
  %2475 = vmatprep.subr.mxu0 0.0
  %2476 = vmatpush1.xpose.msra.mxu0 %v2427
  %2477 = vmatprep.subr.mxu0 0.0
  %2478 = vmatpush1.xpose.msra.mxu0 %v2428
  %2479 = vmatprep.subr.mxu0 0.0
  %2480 = vmatpush1.xpose.msra.mxu0 %v2429
  %2481 = vmatprep.subr.mxu0 0.0
  %2482 = vmatpush1.xpose.msra.mxu0 %v2430
  %2483 = vmatprep.subr.mxu0 0.0
  %2484 = vmatpush1.xpose.msra.mxu0 %v2431
  %2485 = vmatprep.subr.mxu0 0.0
  %2486 = vmatpush1.xpose.msra.mxu0 %v2432
  %2487 = vmatprep.subr.mxu0 0.0
  %2488 = vmatpush1.xpose.msra.mxu0 %v2433
  %2489 = vmatprep.subr.mxu0 0.0
  %2490 = vmatpush1.xpose.msra.mxu0 %v2434
  %2491 = vmatprep.subr.mxu0 0.0
  %2492 = vmatpush1.xpose.msra.mxu0 %v2435
  %2493 = vmatprep.subr.mxu0 0.0
  %2494 = vmatpush1.xpose.msra.mxu0 %v2436
  %2495 = vmatprep.subr.mxu0 0.0
  %2496 = vmatpush1.xpose.msra.mxu0 %v2437
  %2497 = vmatprep.subr.mxu0 0.0
  %2498 = vmatpush1.xpose.msra.mxu0 %v2438
  %2499 = vmatprep.subr.mxu0 0.0
  %2500 = vmatpush1.xpose.msra.mxu0 %v2439
  %2501 = vmatprep.subr.mxu0 0.0
  %2502 = vmatpush1.xpose.msra.mxu0 %v2440
  %2503 = vmatprep.subr.mxu0 0.0
  %2504 = vmatpush1.xpose.msra.mxu0 %v2441
  %2505 = vmatprep.subr.mxu0 0.0
  %2506 = vmatpush1.xpose.msra.mxu0 %v2442
  %2507 = vmatprep.subr.mxu0 0.0
  %2508 = vmatpush1.xpose.msra.mxu0 %v2443
  %2509 = vmatprep.subr.mxu0 0.0
  %2510 = vmatpush1.xpose.msra.mxu0 %v2444
  %2511 = vmatprep.subr.mxu0 0.0
  %2512 = vmatpush1.xpose.msra.mxu0 %v2445
  %2513 = vmatprep.subr.mxu0 0.0
  %2514 = vmatpush1.xpose.msra.mxu0 %v2446
  %2515 = vmatprep.subr.mxu0 0.0
  %2516 = vmatpush1.xpose.msra.mxu0 %v2447
  %2517 = vmatprep.mubr.f32.mxu0 0.0
  %2518 = vmatmul.mubr.f32.gmra.mrb[0].mxu0 %v2449
  %v2519 = vpop.f32.mrb[0].mxu0
  %v2520 = vadd.f32 0.0, %v2519
  %v2521 = vpop.f32.mrb[0].mxu0
  %v2522 = vadd.f32 0.0, %v2521
  %2523 = vmatprep.mubr.f32.mxu0 0.0
  %2524 = vmatmul.mubr.f32.gmra.mrb[0].mxu0 %v2450
  %v2525 = vpop.f32.mrb[0].mxu0
  %v2526 = vadd.f32 0.0, %v2525
  %v2527 = vpop.f32.mrb[0].mxu0
  %v2528 = vadd.f32 0.0, %v2527
  %2529 = vmatprep.mubr.f32.mxu0 0.0
  %2530 = vmatmul.mubr.f32.gmra.mrb[0].mxu0 %v2451
  %v2531 = vpop.f32.mrb[0].mxu0
  %v2532 = vadd.f32 0.0, %v2531
  %v2533 = vpop.f32.mrb[0].mxu0
  %v2534 = vadd.f32 0.0, %v2533
  %2535 = vmatprep.mubr.f32.mxu0 0.0
  %2536 = vmatmul.mubr.f32.gmra.mrb[0].mxu0 %v2452
  %v2537 = vpop.f32.mrb[0].mxu0
  %v2538 = vadd.f32 0.0, %v2537
  %v2539 = vpop.f32.mrb[0].mxu0
  %v2540 = vadd.f32 0.0, %v2539
  %2541 = vdwg.mxu0
  %v2542 = vadd.f32 %v2408, %v2520
  %v2543 = vadd.f32 %v2409, %v2522
  %v2544 = vadd.f32 %v2410, %v2526
  %v2545 = vadd.f32 %v2411, %v2528
  %v2546 = vadd.f32 %v2412, %v2532
  %v2547 = vadd.f32 %v2413, %v2534
  %v2548 = vadd.f32 %v2414, %v2538
  %v2549 = vadd.f32 %v2415, %v2540
  %v2550 = vld [vmem:[%s2012 + $0x2] sm:$0xff]
  %v2551 = vld [vmem:[%s2012 + $0xa] sm:$0xff]
  %v2552 = vld [vmem:[%s2012 + $0x1a] sm:$0xff]
  %v2553 = vld [vmem:[%s2012 + $0x22] sm:$0xff]
  %v2554 = vld [vmem:[%s2012 + $0x32] sm:$0xff]
  %v2555 = vld [vmem:[%s2012 + $0x3a] sm:$0xff]
  %v2556 = vld [vmem:[%s2012 + $0x4a] sm:$0xff]
  %v2557 = vld [vmem:[%s2012 + $0x52] sm:$0xff]
  %v2558 = vld [vmem:[%s2012 + $0x62] sm:$0xff]
  %v2559 = vld [vmem:[%s2012 + $0x6a] sm:$0xff]
  %v2560 = vld [vmem:[%s2012 + $0x7a] sm:$0xff]
  %v2561 = vld [vmem:[%s2012 + $0x82] sm:$0xff]
  %v2562 = vld [vmem:[%s2012 + $0x92] sm:$0xff]
  %v2563 = vld [vmem:[%s2012 + $0x9a] sm:$0xff]
  %v2564 = vld [vmem:[%s2012 + $0xaa] sm:$0xff]
  %v2565 = vld [vmem:[%s2012 + $0xb2] sm:$0xff]
  %v2566 = vld [vmem:[%s2012 + $0xc2] sm:$0xff]
  %v2567 = vld [vmem:[%s2012 + $0xca] sm:$0xff]
  %v2568 = vld [vmem:[%s2012 + $0xda] sm:$0xff]
  %v2569 = vld [vmem:[%s2012 + $0xe2] sm:$0xff]
  %v2570 = vld [vmem:[%s2012 + $0xf2] sm:$0xff]
  %v2571 = vld [vmem:[%s2012 + $0xfa] sm:$0xff]
  %v2572 = vld [vmem:[%s2012 + $0x10a] sm:$0xff]
  %v2573 = vld [vmem:[%s2012 + $0x112] sm:$0xff]
  %v2574 = vld [vmem:[%s2012 + $0x122] sm:$0xff]
  %v2575 = vld [vmem:[%s2012 + $0x12a] sm:$0xff]
  %v2576 = vld [vmem:[%s2012 + $0x13a] sm:$0xff]
  %v2577 = vld [vmem:[%s2012 + $0x142] sm:$0xff]
  %v2578 = vld [vmem:[%s2012 + $0x152] sm:$0xff]
  %v2579 = vld [vmem:[%s2012 + $0x15a] sm:$0xff]
  %v2580 = vld [vmem:[%s2012 + $0x16a] sm:$0xff]
  %v2581 = vld [vmem:[%s2012 + $0x172] sm:$0xff]
  %s2582 = scalar_lea.vmem %s1, 608
  %v2583 = vld [vmem:[%s2582] sm:$0xff]
  %v2584 = vld [vmem:[%s2582 + $0x8] sm:$0xff]
  %v2585 = vld [vmem:[%s2582 + $0x10] sm:$0xff]
  %v2586 = vld [vmem:[%s2582 + $0x18] sm:$0xff]
  %2587 = vmatprep.subr.mxu0 0.0
  %2588 = vmatpush1.xpose.msra.mxu0 %v2550
  %2589 = vmatprep.subr.mxu0 0.0
  %2590 = vmatpush1.xpose.msra.mxu0 %v2551
  %2591 = vmatprep.subr.mxu0 0.0
  %2592 = vmatpush1.xpose.msra.mxu0 %v2552
  %2593 = vmatprep.subr.mxu0 0.0
  %2594 = vmatpush1.xpose.msra.mxu0 %v2553
  %2595 = vmatprep.subr.mxu0 0.0
  %2596 = vmatpush1.xpose.msra.mxu0 %v2554
  %2597 = vmatprep.subr.mxu0 0.0
  %2598 = vmatpush1.xpose.msra.mxu0 %v2555
  %2599 = vmatprep.subr.mxu0 0.0
  %2600 = vmatpush1.xpose.msra.mxu0 %v2556
  %2601 = vmatprep.subr.mxu0 0.0
  %2602 = vmatpush1.xpose.msra.mxu0 %v2557
  %2603 = vmatprep.subr.mxu0 0.0
  %2604 = vmatpush1.xpose.msra.mxu0 %v2558
  %2605 = vmatprep.subr.mxu0 0.0
  %2606 = vmatpush1.xpose.msra.mxu0 %v2559
  %2607 = vmatprep.subr.mxu0 0.0
  %2608 = vmatpush1.xpose.msra.mxu0 %v2560
  %2609 = vmatprep.subr.mxu0 0.0
  %2610 = vmatpush1.xpose.msra.mxu0 %v2561
  %2611 = vmatprep.subr.mxu0 0.0
  %2612 = vmatpush1.xpose.msra.mxu0 %v2562
  %2613 = vmatprep.subr.mxu0 0.0
  %2614 = vmatpush1.xpose.msra.mxu0 %v2563
  %2615 = vmatprep.subr.mxu0 0.0
  %2616 = vmatpush1.xpose.msra.mxu0 %v2564
  %2617 = vmatprep.subr.mxu0 0.0
  %2618 = vmatpush1.xpose.msra.mxu0 %v2565
  %2619 = vmatprep.subr.mxu0 0.0
  %2620 = vmatpush1.xpose.msra.mxu0 %v2566
  %2621 = vmatprep.subr.mxu0 0.0
  %2622 = vmatpush1.xpose.msra.mxu0 %v2567
  %2623 = vmatprep.subr.mxu0 0.0
  %2624 = vmatpush1.xpose.msra.mxu0 %v2568
  %2625 = vmatprep.subr.mxu0 0.0
  %2626 = vmatpush1.xpose.msra.mxu0 %v2569
  %2627 = vmatprep.subr.mxu0 0.0
  %2628 = vmatpush1.xpose.msra.mxu0 %v2570
  %2629 = vmatprep.subr.mxu0 0.0
  %2630 = vmatpush1.xpose.msra.mxu0 %v2571
  %2631 = vmatprep.subr.mxu0 0.0
  %2632 = vmatpush1.xpose.msra.mxu0 %v2572
  %2633 = vmatprep.subr.mxu0 0.0
  %2634 = vmatpush1.xpose.msra.mxu0 %v2573
  %2635 = vmatprep.subr.mxu0 0.0
  %2636 = vmatpush1.xpose.msra.mxu0 %v2574
  %2637 = vmatprep.subr.mxu0 0.0
  %2638 = vmatpush1.xpose.msra.mxu0 %v2575
  %2639 = vmatprep.subr.mxu0 0.0
  %2640 = vmatpush1.xpose.msra.mxu0 %v2576
  %2641 = vmatprep.subr.mxu0 0.0
  %2642 = vmatpush1.xpose.msra.mxu0 %v2577
  %2643 = vmatprep.subr.mxu0 0.0
  %2644 = vmatpush1.xpose.msra.mxu0 %v2578
  %2645 = vmatprep.subr.mxu0 0.0
  %2646 = vmatpush1.xpose.msra.mxu0 %v2579
  %2647 = vmatprep.subr.mxu0 0.0
  %2648 = vmatpush1.xpose.msra.mxu0 %v2580
  %2649 = vmatprep.subr.mxu0 0.0
  %2650 = vmatpush1.xpose.msra.mxu0 %v2581
  %2651 = vmatprep.mubr.f32.mxu0 0.0
  %2652 = vmatmul.mubr.f32.gmra.mrb[0].mxu0 %v2583
  %v2653 = vpop.f32.mrb[0].mxu0
  %v2654 = vadd.f32 0.0, %v2653
  %v2655 = vpop.f32.mrb[0].mxu0
  %v2656 = vadd.f32 0.0, %v2655
  %2657 = vmatprep.mubr.f32.mxu0 0.0
  %2658 = vmatmul.mubr.f32.gmra.mrb[0].mxu0 %v2584
  %v2659 = vpop.f32.mrb[0].mxu0
  %v2660 = vadd.f32 0.0, %v2659
  %v2661 = vpop.f32.mrb[0].mxu0
  %v2662 = vadd.f32 0.0, %v2661
  %2663 = vmatprep.mubr.f32.mxu0 0.0
  %2664 = vmatmul.mubr.f32.gmra.mrb[0].mxu0 %v2585
  %v2665 = vpop.f32.mrb[0].mxu0
  %v2666 = vadd.f32 0.0, %v2665
  %v2667 = vpop.f32.mrb[0].mxu0
  %v2668 = vadd.f32 0.0, %v2667
  %2669 = vmatprep.mubr.f32.mxu0 0.0
  %2670 = vmatmul.mubr.f32.gmra.mrb[0].mxu0 %v2586
  %v2671 = vpop.f32.mrb[0].mxu0
  %v2672 = vadd.f32 0.0, %v2671
  %v2673 = vpop.f32.mrb[0].mxu0
  %v2674 = vadd.f32 0.0, %v2673
  %2675 = vdwg.mxu0
  %v2676 = vadd.f32 %v2542, %v2654
  %v2677 = vadd.f32 %v2543, %v2656
  %v2678 = vadd.f32 %v2544, %v2660
  %v2679 = vadd.f32 %v2545, %v2662
  %v2680 = vadd.f32 %v2546, %v2666
  %v2681 = vadd.f32 %v2547, %v2668
  %v2682 = vadd.f32 %v2548, %v2672
  %v2683 = vadd.f32 %v2549, %v2674
  %s2684 = scalar_lea.vmem %s0, 48
  %v2685 = vld [vmem:[%s2684] sm:$0xff]
  %v2686 = vld [vmem:[%s2684 + $0x8] sm:$0xff]
  %v2687 = vld [vmem:[%s2684 + $0x18] sm:$0xff]
  %v2688 = vld [vmem:[%s2684 + $0x20] sm:$0xff]
  %v2689 = vld [vmem:[%s2684 + $0x30] sm:$0xff]
  %v2690 = vld [vmem:[%s2684 + $0x38] sm:$0xff]
  %v2691 = vld [vmem:[%s2684 + $0x48] sm:$0xff]
  %v2692 = vld [vmem:[%s2684 + $0x50] sm:$0xff]
  %v2693 = vld [vmem:[%s2684 + $0x60] sm:$0xff]
  %v2694 = vld [vmem:[%s2684 + $0x68] sm:$0xff]
  %v2695 = vld [vmem:[%s2684 + $0x78] sm:$0xff]
  %v2696 = vld [vmem:[%s2684 + $0x80] sm:$0xff]
  %v2697 = vld [vmem:[%s2684 + $0x90] sm:$0xff]
  %v2698 = vld [vmem:[%s2684 + $0x98] sm:$0xff]
  %v2699 = vld [vmem:[%s2684 + $0xa8] sm:$0xff]
  %v2700 = vld [vmem:[%s2684 + $0xb0] sm:$0xff]
  %v2701 = vld [vmem:[%s2684 + $0xc0] sm:$0xff]
  %v2702 = vld [vmem:[%s2684 + $0xc8] sm:$0xff]
  %v2703 = vld [vmem:[%s2684 + $0xd8] sm:$0xff]
  %v2704 = vld [vmem:[%s2684 + $0xe0] sm:$0xff]
  %v2705 = vld [vmem:[%s2684 + $0xf0] sm:$0xff]
  %v2706 = vld [vmem:[%s2684 + $0xf8] sm:$0xff]
  %v2707 = vld [vmem:[%s2684 + $0x108] sm:$0xff]
  %v2708 = vld [vmem:[%s2684 + $0x110] sm:$0xff]
  %v2709 = vld [vmem:[%s2684 + $0x120] sm:$0xff]
  %v2710 = vld [vmem:[%s2684 + $0x128] sm:$0xff]
  %v2711 = vld [vmem:[%s2684 + $0x138] sm:$0xff]
  %v2712 = vld [vmem:[%s2684 + $0x140] sm:$0xff]
  %v2713 = vld [vmem:[%s2684 + $0x150] sm:$0xff]
  %v2714 = vld [vmem:[%s2684 + $0x158] sm:$0xff]
  %v2715 = vld [vmem:[%s2684 + $0x168] sm:$0xff]
  %v2716 = vld [vmem:[%s2684 + $0x170] sm:$0xff]
  %s2717 = scalar_lea.vmem %s1, 640
  %v2718 = vld [vmem:[%s2717] sm:$0xff]
  %v2719 = vld [vmem:[%s2717 + $0x8] sm:$0xff]
  %v2720 = vld [vmem:[%s2717 + $0x10] sm:$0xff]
  %v2721 = vld [vmem:[%s2717 + $0x18] sm:$0xff]
  %2722 = vmatprep.subr.mxu0 0.0
  %2723 = vmatpush1.xpose.msra.mxu0 %v2685
  %2724 = vmatprep.subr.mxu0 0.0
  %2725 = vmatpush1.xpose.msra.mxu0 %v2686
  %2726 = vmatprep.subr.mxu0 0.0
  %2727 = vmatpush1.xpose.msra.mxu0 %v2687
  %2728 = vmatprep.subr.mxu0 0.0
  %2729 = vmatpush1.xpose.msra.mxu0 %v2688
  %2730 = vmatprep.subr.mxu0 0.0
  %2731 = vmatpush1.xpose.msra.mxu0 %v2689
  %2732 = vmatprep.subr.mxu0 0.0
  %2733 = vmatpush1.xpose.msra.mxu0 %v2690
  %2734 = vmatprep.subr.mxu0 0.0
  %2735 = vmatpush1.xpose.msra.mxu0 %v2691
  %2736 = vmatprep.subr.mxu0 0.0
  %2737 = vmatpush1.xpose.msra.mxu0 %v2692
  %2738 = vmatprep.subr.mxu0 0.0
  %2739 = vmatpush1.xpose.msra.mxu0 %v2693
  %2740 = vmatprep.subr.mxu0 0.0
  %2741 = vmatpush1.xpose.msra.mxu0 %v2694
  %2742 = vmatprep.subr.mxu0 0.0
  %2743 = vmatpush1.xpose.msra.mxu0 %v2695
  %2744 = vmatprep.subr.mxu0 0.0
  %2745 = vmatpush1.xpose.msra.mxu0 %v2696
  %2746 = vmatprep.subr.mxu0 0.0
  %2747 = vmatpush1.xpose.msra.mxu0 %v2697
  %2748 = vmatprep.subr.mxu0 0.0
  %2749 = vmatpush1.xpose.msra.mxu0 %v2698
  %2750 = vmatprep.subr.mxu0 0.0
  %2751 = vmatpush1.xpose.msra.mxu0 %v2699
  %2752 = vmatprep.subr.mxu0 0.0
  %2753 = vmatpush1.xpose.msra.mxu0 %v2700
  %2754 = vmatprep.subr.mxu0 0.0
  %2755 = vmatpush1.xpose.msra.mxu0 %v2701
  %2756 = vmatprep.subr.mxu0 0.0
  %2757 = vmatpush1.xpose.msra.mxu0 %v2702
  %2758 = vmatprep.subr.mxu0 0.0
  %2759 = vmatpush1.xpose.msra.mxu0 %v2703
  %2760 = vmatprep.subr.mxu0 0.0
  %2761 = vmatpush1.xpose.msra.mxu0 %v2704
  %2762 = vmatprep.subr.mxu0 0.0
  %2763 = vmatpush1.xpose.msra.mxu0 %v2705
  %2764 = vmatprep.subr.mxu0 0.0
  %2765 = vmatpush1.xpose.msra.mxu0 %v2706
  %2766 = vmatprep.subr.mxu0 0.0
  %2767 = vmatpush1.xpose.msra.mxu0 %v2707
  %2768 = vmatprep.subr.mxu0 0.0
  %2769 = vmatpush1.xpose.msra.mxu0 %v2708
  %2770 = vmatprep.subr.mxu0 0.0
  %2771 = vmatpush1.xpose.msra.mxu0 %v2709
  %2772 = vmatprep.subr.mxu0 0.0
  %2773 = vmatpush1.xpose.msra.mxu0 %v2710
  %2774 = vmatprep.subr.mxu0 0.0
  %2775 = vmatpush1.xpose.msra.mxu0 %v2711
  %2776 = vmatprep.subr.mxu0 0.0
  %2777 = vmatpush1.xpose.msra.mxu0 %v2712
  %2778 = vmatprep.subr.mxu0 0.0
  %2779 = vmatpush1.xpose.msra.mxu0 %v2713
  %2780 = vmatprep.subr.mxu0 0.0
  %2781 = vmatpush1.xpose.msra.mxu0 %v2714
  %2782 = vmatprep.subr.mxu0 0.0
  %2783 = vmatpush1.xpose.msra.mxu0 %v2715
  %2784 = vmatprep.subr.mxu0 0.0
  %2785 = vmatpush1.xpose.msra.mxu0 %v2716
  %2786 = vmatprep.mubr.f32.mxu0 0.0
  %2787 = vmatmul.mubr.f32.gmra.mrb[0].mxu0 %v2718
  %v2788 = vpop.f32.mrb[0].mxu0
  %v2789 = vadd.f32 0.0, %v2788
  %v2790 = vpop.f32.mrb[0].mxu0
  %v2791 = vadd.f32 0.0, %v2790
  %2792 = vmatprep.mubr.f32.mxu0 0.0
  %2793 = vmatmul.mubr.f32.gmra.mrb[0].mxu0 %v2719
  %v2794 = vpop.f32.mrb[0].mxu0
  %v2795 = vadd.f32 0.0, %v2794
  %v2796 = vpop.f32.mrb[0].mxu0
  %v2797 = vadd.f32 0.0, %v2796
  %2798 = vmatprep.mubr.f32.mxu0 0.0
  %2799 = vmatmul.mubr.f32.gmra.mrb[0].mxu0 %v2720
  %v2800 = vpop.f32.mrb[0].mxu0
  %v2801 = vadd.f32 0.0, %v2800
  %v2802 = vpop.f32.mrb[0].mxu0
  %v2803 = vadd.f32 0.0, %v2802
  %2804 = vmatprep.mubr.f32.mxu0 0.0
  %2805 = vmatmul.mubr.f32.gmra.mrb[0].mxu0 %v2721
  %v2806 = vpop.f32.mrb[0].mxu0
  %v2807 = vadd.f32 0.0, %v2806
  %v2808 = vpop.f32.mrb[0].mxu0
  %v2809 = vadd.f32 0.0, %v2808
  %2810 = vdwg.mxu0
  %v2811 = vadd.f32 %v2676, %v2789
  %v2812 = vadd.f32 %v2677, %v2791
  %v2813 = vadd.f32 %v2678, %v2795
  %v2814 = vadd.f32 %v2679, %v2797
  %v2815 = vadd.f32 %v2680, %v2801
  %v2816 = vadd.f32 %v2681, %v2803
  %v2817 = vadd.f32 %v2682, %v2807
  %v2818 = vadd.f32 %v2683, %v2809
  %s2819 = scalar_lea.vmem %s0, 480
  %v2820 = vld [vmem:[%s2819] sm:$0xff]
  %v2821 = vld [vmem:[%s2819 + $0x8] sm:$0xff]
  %v2822 = vld [vmem:[%s2819 + $0x18] sm:$0xff]
  %v2823 = vld [vmem:[%s2819 + $0x20] sm:$0xff]
  %v2824 = vld [vmem:[%s2819 + $0x30] sm:$0xff]
  %v2825 = vld [vmem:[%s2819 + $0x38] sm:$0xff]
  %v2826 = vld [vmem:[%s2819 + $0x48] sm:$0xff]
  %v2827 = vld [vmem:[%s2819 + $0x50] sm:$0xff]
  %v2828 = vld [vmem:[%s2819 + $0x60] sm:$0xff]
  %v2829 = vld [vmem:[%s2819 + $0x68] sm:$0xff]
  %v2830 = vld [vmem:[%s2819 + $0x78] sm:$0xff]
  %v2831 = vld [vmem:[%s2819 + $0x80] sm:$0xff]
  %v2832 = vld [vmem:[%s2819 + $0x90] sm:$0xff]
  %v2833 = vld [vmem:[%s2819 + $0x98] sm:$0xff]
  %v2834 = vld [vmem:[%s2819 + $0xa8] sm:$0xff]
  %v2835 = vld [vmem:[%s2819 + $0xb0] sm:$0xff]
  %v2836 = vld [vmem:[%s2819 + $0xc0] sm:$0xff]
  %v2837 = vld [vmem:[%s2819 + $0xc8] sm:$0xff]
  %v2838 = vld [vmem:[%s2819 + $0xd8] sm:$0xff]
  %v2839 = vld [vmem:[%s2819 + $0xe0] sm:$0xff]
  %v2840 = vld [vmem:[%s2819 + $0xf0] sm:$0xff]
  %v2841 = vld [vmem:[%s2819 + $0xf8] sm:$0xff]
  %v2842 = vld [vmem:[%s2819 + $0x108] sm:$0xff]
  %v2843 = vld [vmem:[%s2819 + $0x110] sm:$0xff]
  %v2844 = vld [vmem:[%s2819 + $0x120] sm:$0xff]
  %v2845 = vld [vmem:[%s2819 + $0x128] sm:$0xff]
  %v2846 = vld [vmem:[%s2819 + $0x138] sm:$0xff]
  %v2847 = vld [vmem:[%s2819 + $0x140] sm:$0xff]
  %v2848 = vld [vmem:[%s2819 + $0x150] sm:$0xff]
  %v2849 = vld [vmem:[%s2819 + $0x158] sm:$0xff]
  %v2850 = vld [vmem:[%s2819 + $0x168] sm:$0xff]
  %v2851 = vld [vmem:[%s2819 + $0x170] sm:$0xff]
  %s2852 = scalar_lea.vmem %s1, 672
  %v2853 = vld [vmem:[%s2852] sm:$0xff]
  %v2854 = vld [vmem:[%s2852 + $0x8] sm:$0xff]
  %v2855 = vld [vmem:[%s2852 + $0x10] sm:$0xff]
  %v2856 = vld [vmem:[%s2852 + $0x18] sm:$0xff]
  %2857 = vmatprep.subr.mxu0 0.0
  %2858 = vmatpush1.xpose.msra.mxu0 %v2820
  %2859 = vmatprep.subr.mxu0 0.0
  %2860 = vmatpush1.xpose.msra.mxu0 %v2821
  %2861 = vmatprep.subr.mxu0 0.0
  %2862 = vmatpush1.xpose.msra.mxu0 %v2822
  %2863 = vmatprep.subr.mxu0 0.0
  %2864 = vmatpush1.xpose.msra.mxu0 %v2823
  %2865 = vmatprep.subr.mxu0 0.0
  %2866 = vmatpush1.xpose.msra.mxu0 %v2824
  %2867 = vmatprep.subr.mxu0 0.0
  %2868 = vmatpush1.xpose.msra.mxu0 %v2825
  %2869 = vmatprep.subr.mxu0 0.0
  %2870 = vmatpush1.xpose.msra.mxu0 %v2826
  %2871 = vmatprep.subr.mxu0 0.0
  %2872 = vmatpush1.xpose.msra.mxu0 %v2827
  %2873 = vmatprep.subr.mxu0 0.0
  %2874 = vmatpush1.xpose.msra.mxu0 %v2828
  %2875 = vmatprep.subr.mxu0 0.0
  %2876 = vmatpush1.xpose.msra.mxu0 %v2829
  %2877 = vmatprep.subr.mxu0 0.0
  %2878 = vmatpush1.xpose.msra.mxu0 %v2830
  %2879 = vmatprep.subr.mxu0 0.0
  %2880 = vmatpush1.xpose.msra.mxu0 %v2831
  %2881 = vmatprep.subr.mxu0 0.0
  %2882 = vmatpush1.xpose.msra.mxu0 %v2832
  %2883 = vmatprep.subr.mxu0 0.0
  %2884 = vmatpush1.xpose.msra.mxu0 %v2833
  %2885 = vmatprep.subr.mxu0 0.0
  %2886 = vmatpush1.xpose.msra.mxu0 %v2834
  %2887 = vmatprep.subr.mxu0 0.0
  %2888 = vmatpush1.xpose.msra.mxu0 %v2835
  %2889 = vmatprep.subr.mxu0 0.0
  %2890 = vmatpush1.xpose.msra.mxu0 %v2836
  %2891 = vmatprep.subr.mxu0 0.0
  %2892 = vmatpush1.xpose.msra.mxu0 %v2837
  %2893 = vmatprep.subr.mxu0 0.0
  %2894 = vmatpush1.xpose.msra.mxu0 %v2838
  %2895 = vmatprep.subr.mxu0 0.0
  %2896 = vmatpush1.xpose.msra.mxu0 %v2839
  %2897 = vmatprep.subr.mxu0 0.0
  %2898 = vmatpush1.xpose.msra.mxu0 %v2840
  %2899 = vmatprep.subr.mxu0 0.0
  %2900 = vmatpush1.xpose.msra.mxu0 %v2841
  %2901 = vmatprep.subr.mxu0 0.0
  %2902 = vmatpush1.xpose.msra.mxu0 %v2842
  %2903 = vmatprep.subr.mxu0 0.0
  %2904 = vmatpush1.xpose.msra.mxu0 %v2843
  %2905 = vmatprep.subr.mxu0 0.0
  %2906 = vmatpush1.xpose.msra.mxu0 %v2844
  %2907 = vmatprep.subr.mxu0 0.0
  %2908 = vmatpush1.xpose.msra.mxu0 %v2845
  %2909 = vmatprep.subr.mxu0 0.0
  %2910 = vmatpush1.xpose.msra.mxu0 %v2846
  %2911 = vmatprep.subr.mxu0 0.0
  %2912 = vmatpush1.xpose.msra.mxu0 %v2847
  %2913 = vmatprep.subr.mxu0 0.0
  %2914 = vmatpush1.xpose.msra.mxu0 %v2848
  %2915 = vmatprep.subr.mxu0 0.0
  %2916 = vmatpush1.xpose.msra.mxu0 %v2849
  %2917 = vmatprep.subr.mxu0 0.0
  %2918 = vmatpush1.xpose.msra.mxu0 %v2850
  %2919 = vmatprep.subr.mxu0 0.0
  %2920 = vmatpush1.xpose.msra.mxu0 %v2851
  %2921 = vmatprep.mubr.f32.mxu0 0.0
  %2922 = vmatmul.mubr.f32.gmra.mrb[0].mxu0 %v2853
  %v2923 = vpop.f32.mrb[0].mxu0
  %v2924 = vadd.f32 0.0, %v2923
  %v2925 = vpop.f32.mrb[0].mxu0
  %v2926 = vadd.f32 0.0, %v2925
  %2927 = vmatprep.mubr.f32.mxu0 0.0
  %2928 = vmatmul.mubr.f32.gmra.mrb[0].mxu0 %v2854
  %v2929 = vpop.f32.mrb[0].mxu0
  %v2930 = vadd.f32 0.0, %v2929
  %v2931 = vpop.f32.mrb[0].mxu0
  %v2932 = vadd.f32 0.0, %v2931
  %2933 = vmatprep.mubr.f32.mxu0 0.0
  %2934 = vmatmul.mubr.f32.gmra.mrb[0].mxu0 %v2855
  %v2935 = vpop.f32.mrb[0].mxu0
  %v2936 = vadd.f32 0.0, %v2935
  %v2937 = vpop.f32.mrb[0].mxu0
  %v2938 = vadd.f32 0.0, %v2937
  %2939 = vmatprep.mubr.f32.mxu0 0.0
  %2940 = vmatmul.mubr.f32.gmra.mrb[0].mxu0 %v2856
  %v2941 = vpop.f32.mrb[0].mxu0
  %v2942 = vadd.f32 0.0, %v2941
  %v2943 = vpop.f32.mrb[0].mxu0
  %v2944 = vadd.f32 0.0, %v2943
  %2945 = vdwg.mxu0
  %v2946 = vadd.f32 %v2811, %v2924
  %v2947 = vadd.f32 %v2812, %v2926
  %v2948 = vadd.f32 %v2813, %v2930
  %v2949 = vadd.f32 %v2814, %v2932
  %v2950 = vadd.f32 %v2815, %v2936
  %v2951 = vadd.f32 %v2816, %v2938
  %v2952 = vadd.f32 %v2817, %v2942
  %v2953 = vadd.f32 %v2818, %v2944
  %v2954 = vld [vmem:[%s2684 + $0x1] sm:$0xff]
  %v2955 = vld [vmem:[%s2684 + $0x9] sm:$0xff]
  %v2956 = vld [vmem:[%s2684 + $0x19] sm:$0xff]
  %v2957 = vld [vmem:[%s2684 + $0x21] sm:$0xff]
  %v2958 = vld [vmem:[%s2684 + $0x31] sm:$0xff]
  %v2959 = vld [vmem:[%s2684 + $0x39] sm:$0xff]
  %v2960 = vld [vmem:[%s2684 + $0x49] sm:$0xff]
  %v2961 = vld [vmem:[%s2684 + $0x51] sm:$0xff]
  %v2962 = vld [vmem:[%s2684 + $0x61] sm:$0xff]
  %v2963 = vld [vmem:[%s2684 + $0x69] sm:$0xff]
  %v2964 = vld [vmem:[%s2684 + $0x79] sm:$0xff]
  %v2965 = vld [vmem:[%s2684 + $0x81] sm:$0xff]
  %v2966 = vld [vmem:[%s2684 + $0x91] sm:$0xff]
  %v2967 = vld [vmem:[%s2684 + $0x99] sm:$0xff]
  %v2968 = vld [vmem:[%s2684 + $0xa9] sm:$0xff]
  %v2969 = vld [vmem:[%s2684 + $0xb1] sm:$0xff]
  %v2970 = vld [vmem:[%s2684 + $0xc1] sm:$0xff]
  %v2971 = vld [vmem:[%s2684 + $0xc9] sm:$0xff]
  %v2972 = vld [vmem:[%s2684 + $0xd9] sm:$0xff]
  %v2973 = vld [vmem:[%s2684 + $0xe1] sm:$0xff]
  %v2974 = vld [vmem:[%s2684 + $0xf1] sm:$0xff]
  %v2975 = vld [vmem:[%s2684 + $0xf9] sm:$0xff]
  %v2976 = vld [vmem:[%s2684 + $0x109] sm:$0xff]
  %v2977 = vld [vmem:[%s2684 + $0x111] sm:$0xff]
  %v2978 = vld [vmem:[%s2684 + $0x121] sm:$0xff]
  %v2979 = vld [vmem:[%s2684 + $0x129] sm:$0xff]
  %v2980 = vld [vmem:[%s2684 + $0x139] sm:$0xff]
  %v2981 = vld [vmem:[%s2684 + $0x141] sm:$0xff]
  %v2982 = vld [vmem:[%s2684 + $0x151] sm:$0xff]
  %v2983 = vld [vmem:[%s2684 + $0x159] sm:$0xff]
  %v2984 = vld [vmem:[%s2684 + $0x169] sm:$0xff]
  %v2985 = vld [vmem:[%s2684 + $0x171] sm:$0xff]
  %s2986 = scalar_lea.vmem %s1, 704
  %v2987 = vld [vmem:[%s2986] sm:$0xff]
  %v2988 = vld [vmem:[%s2986 + $0x8] sm:$0xff]
  %v2989 = vld [vmem:[%s2986 + $0x10] sm:$0xff]
  %v2990 = vld [vmem:[%s2986 + $0x18] sm:$0xff]
  %2991 = vmatprep.subr.mxu0 0.0
  %2992 = vmatpush1.xpose.msra.mxu0 %v2954
  %2993 = vmatprep.subr.mxu0 0.0
  %2994 = vmatpush1.xpose.msra.mxu0 %v2955
  %2995 = vmatprep.subr.mxu0 0.0
  %2996 = vmatpush1.xpose.msra.mxu0 %v2956
  %2997 = vmatprep.subr.mxu0 0.0
  %2998 = vmatpush1.xpose.msra.mxu0 %v2957
  %2999 = vmatprep.subr.mxu0 0.0
  %3000 = vmatpush1.xpose.msra.mxu0 %v2958
  %3001 = vmatprep.subr.mxu0 0.0
  %3002 = vmatpush1.xpose.msra.mxu0 %v2959
  %3003 = vmatprep.subr.mxu0 0.0
  %3004 = vmatpush1.xpose.msra.mxu0 %v2960
  %3005 = vmatprep.subr.mxu0 0.0
  %3006 = vmatpush1.xpose.msra.mxu0 %v2961
  %3007 = vmatprep.subr.mxu0 0.0
  %3008 = vmatpush1.xpose.msra.mxu0 %v2962
  %3009 = vmatprep.subr.mxu0 0.0
  %3010 = vmatpush1.xpose.msra.mxu0 %v2963
  %3011 = vmatprep.subr.mxu0 0.0
  %3012 = vmatpush1.xpose.msra.mxu0 %v2964
  %3013 = vmatprep.subr.mxu0 0.0
  %3014 = vmatpush1.xpose.msra.mxu0 %v2965
  %3015 = vmatprep.subr.mxu0 0.0
  %3016 = vmatpush1.xpose.msra.mxu0 %v2966
  %3017 = vmatprep.subr.mxu0 0.0
  %3018 = vmatpush1.xpose.msra.mxu0 %v2967
  %3019 = vmatprep.subr.mxu0 0.0
  %3020 = vmatpush1.xpose.msra.mxu0 %v2968
  %3021 = vmatprep.subr.mxu0 0.0
  %3022 = vmatpush1.xpose.msra.mxu0 %v2969
  %3023 = vmatprep.subr.mxu0 0.0
  %3024 = vmatpush1.xpose.msra.mxu0 %v2970
  %3025 = vmatprep.subr.mxu0 0.0
  %3026 = vmatpush1.xpose.msra.mxu0 %v2971
  %3027 = vmatprep.subr.mxu0 0.0
  %3028 = vmatpush1.xpose.msra.mxu0 %v2972
  %3029 = vmatprep.subr.mxu0 0.0
  %3030 = vmatpush1.xpose.msra.mxu0 %v2973
  %3031 = vmatprep.subr.mxu0 0.0
  %3032 = vmatpush1.xpose.msra.mxu0 %v2974
  %3033 = vmatprep.subr.mxu0 0.0
  %3034 = vmatpush1.xpose.msra.mxu0 %v2975
  %3035 = vmatprep.subr.mxu0 0.0
  %3036 = vmatpush1.xpose.msra.mxu0 %v2976
  %3037 = vmatprep.subr.mxu0 0.0
  %3038 = vmatpush1.xpose.msra.mxu0 %v2977
  %3039 = vmatprep.subr.mxu0 0.0
  %3040 = vmatpush1.xpose.msra.mxu0 %v2978
  %3041 = vmatprep.subr.mxu0 0.0
  %3042 = vmatpush1.xpose.msra.mxu0 %v2979
  %3043 = vmatprep.subr.mxu0 0.0
  %3044 = vmatpush1.xpose.msra.mxu0 %v2980
  %3045 = vmatprep.subr.mxu0 0.0
  %3046 = vmatpush1.xpose.msra.mxu0 %v2981
  %3047 = vmatprep.subr.mxu0 0.0
  %3048 = vmatpush1.xpose.msra.mxu0 %v2982
  %3049 = vmatprep.subr.mxu0 0.0
  %3050 = vmatpush1.xpose.msra.mxu0 %v2983
  %3051 = vmatprep.subr.mxu0 0.0
  %3052 = vmatpush1.xpose.msra.mxu0 %v2984
  %3053 = vmatprep.subr.mxu0 0.0
  %3054 = vmatpush1.xpose.msra.mxu0 %v2985
  %3055 = vmatprep.mubr.f32.mxu0 0.0
  %3056 = vmatmul.mubr.f32.gmra.mrb[0].mxu0 %v2987
  %v3057 = vpop.f32.mrb[0].mxu0
  %v3058 = vadd.f32 0.0, %v3057
  %v3059 = vpop.f32.mrb[0].mxu0
  %v3060 = vadd.f32 0.0, %v3059
  %3061 = vmatprep.mubr.f32.mxu0 0.0
  %3062 = vmatmul.mubr.f32.gmra.mrb[0].mxu0 %v2988
  %v3063 = vpop.f32.mrb[0].mxu0
  %v3064 = vadd.f32 0.0, %v3063
  %v3065 = vpop.f32.mrb[0].mxu0
  %v3066 = vadd.f32 0.0, %v3065
  %3067 = vmatprep.mubr.f32.mxu0 0.0
  %3068 = vmatmul.mubr.f32.gmra.mrb[0].mxu0 %v2989
  %v3069 = vpop.f32.mrb[0].mxu0
  %v3070 = vadd.f32 0.0, %v3069
  %v3071 = vpop.f32.mrb[0].mxu0
  %v3072 = vadd.f32 0.0, %v3071
  %3073 = vmatprep.mubr.f32.mxu0 0.0
  %3074 = vmatmul.mubr.f32.gmra.mrb[0].mxu0 %v2990
  %v3075 = vpop.f32.mrb[0].mxu0
  %v3076 = vadd.f32 0.0, %v3075
  %v3077 = vpop.f32.mrb[0].mxu0
  %v3078 = vadd.f32 0.0, %v3077
  %3079 = vdwg.mxu0
  %v3080 = vadd.f32 %v2946, %v3058
  %v3081 = vadd.f32 %v2947, %v3060
  %v3082 = vadd.f32 %v2948, %v3064
  %v3083 = vadd.f32 %v2949, %v3066
  %v3084 = vadd.f32 %v2950, %v3070
  %v3085 = vadd.f32 %v2951, %v3072
  %v3086 = vadd.f32 %v2952, %v3076
  %v3087 = vadd.f32 %v2953, %v3078
  %v3088 = vld [vmem:[%s2819 + $0x1] sm:$0xff]
  %v3089 = vld [vmem:[%s2819 + $0x9] sm:$0xff]
  %v3090 = vld [vmem:[%s2819 + $0x19] sm:$0xff]
  %v3091 = vld [vmem:[%s2819 + $0x21] sm:$0xff]
  %v3092 = vld [vmem:[%s2819 + $0x31] sm:$0xff]
  %v3093 = vld [vmem:[%s2819 + $0x39] sm:$0xff]
  %v3094 = vld [vmem:[%s2819 + $0x49] sm:$0xff]
  %v3095 = vld [vmem:[%s2819 + $0x51] sm:$0xff]
  %v3096 = vld [vmem:[%s2819 + $0x61] sm:$0xff]
  %v3097 = vld [vmem:[%s2819 + $0x69] sm:$0xff]
  %v3098 = vld [vmem:[%s2819 + $0x79] sm:$0xff]
  %v3099 = vld [vmem:[%s2819 + $0x81] sm:$0xff]
  %v3100 = vld [vmem:[%s2819 + $0x91] sm:$0xff]
  %v3101 = vld [vmem:[%s2819 + $0x99] sm:$0xff]
  %v3102 = vld [vmem:[%s2819 + $0xa9] sm:$0xff]
  %v3103 = vld [vmem:[%s2819 + $0xb1] sm:$0xff]
  %v3104 = vld [vmem:[%s2819 + $0xc1] sm:$0xff]
  %v3105 = vld [vmem:[%s2819 + $0xc9] sm:$0xff]
  %v3106 = vld [vmem:[%s2819 + $0xd9] sm:$0xff]
  %v3107 = vld [vmem:[%s2819 + $0xe1] sm:$0xff]
  %v3108 = vld [vmem:[%s2819 + $0xf1] sm:$0xff]
  %v3109 = vld [vmem:[%s2819 + $0xf9] sm:$0xff]
  %v3110 = vld [vmem:[%s2819 + $0x109] sm:$0xff]
  %v3111 = vld [vmem:[%s2819 + $0x111] sm:$0xff]
  %v3112 = vld [vmem:[%s2819 + $0x121] sm:$0xff]
  %v3113 = vld [vmem:[%s2819 + $0x129] sm:$0xff]
  %v3114 = vld [vmem:[%s2819 + $0x139] sm:$0xff]
  %v3115 = vld [vmem:[%s2819 + $0x141] sm:$0xff]
  %v3116 = vld [vmem:[%s2819 + $0x151] sm:$0xff]
  %v3117 = vld [vmem:[%s2819 + $0x159] sm:$0xff]
  %v3118 = vld [vmem:[%s2819 + $0x169] sm:$0xff]
  %v3119 = vld [vmem:[%s2819 + $0x171] sm:$0xff]
  %s3120 = scalar_lea.vmem %s1, 736
  %v3121 = vld [vmem:[%s3120] sm:$0xff]
  %v3122 = vld [vmem:[%s3120 + $0x8] sm:$0xff]
  %v3123 = vld [vmem:[%s3120 + $0x10] sm:$0xff]
  %v3124 = vld [vmem:[%s3120 + $0x18] sm:$0xff]
  %3125 = vmatprep.subr.mxu0 0.0
  %3126 = vmatpush1.xpose.msra.mxu0 %v3088
  %3127 = vmatprep.subr.mxu0 0.0
  %3128 = vmatpush1.xpose.msra.mxu0 %v3089
  %3129 = vmatprep.subr.mxu0 0.0
  %3130 = vmatpush1.xpose.msra.mxu0 %v3090
  %3131 = vmatprep.subr.mxu0 0.0
  %3132 = vmatpush1.xpose.msra.mxu0 %v3091
  %3133 = vmatprep.subr.mxu0 0.0
  %3134 = vmatpush1.xpose.msra.mxu0 %v3092
  %3135 = vmatprep.subr.mxu0 0.0
  %3136 = vmatpush1.xpose.msra.mxu0 %v3093
  %3137 = vmatprep.subr.mxu0 0.0
  %3138 = vmatpush1.xpose.msra.mxu0 %v3094
  %3139 = vmatprep.subr.mxu0 0.0
  %3140 = vmatpush1.xpose.msra.mxu0 %v3095
  %3141 = vmatprep.subr.mxu0 0.0
  %3142 = vmatpush1.xpose.msra.mxu0 %v3096
  %3143 = vmatprep.subr.mxu0 0.0
  %3144 = vmatpush1.xpose.msra.mxu0 %v3097
  %3145 = vmatprep.subr.mxu0 0.0
  %3146 = vmatpush1.xpose.msra.mxu0 %v3098
  %3147 = vmatprep.subr.mxu0 0.0
  %3148 = vmatpush1.xpose.msra.mxu0 %v3099
  %3149 = vmatprep.subr.mxu0 0.0
  %3150 = vmatpush1.xpose.msra.mxu0 %v3100
  %3151 = vmatprep.subr.mxu0 0.0
  %3152 = vmatpush1.xpose.msra.mxu0 %v3101
  %3153 = vmatprep.subr.mxu0 0.0
  %3154 = vmatpush1.xpose.msra.mxu0 %v3102
  %3155 = vmatprep.subr.mxu0 0.0
  %3156 = vmatpush1.xpose.msra.mxu0 %v3103
  %3157 = vmatprep.subr.mxu0 0.0
  %3158 = vmatpush1.xpose.msra.mxu0 %v3104
  %3159 = vmatprep.subr.mxu0 0.0
  %3160 = vmatpush1.xpose.msra.mxu0 %v3105
  %3161 = vmatprep.subr.mxu0 0.0
  %3162 = vmatpush1.xpose.msra.mxu0 %v3106
  %3163 = vmatprep.subr.mxu0 0.0
  %3164 = vmatpush1.xpose.msra.mxu0 %v3107
  %3165 = vmatprep.subr.mxu0 0.0
  %3166 = vmatpush1.xpose.msra.mxu0 %v3108
  %3167 = vmatprep.subr.mxu0 0.0
  %3168 = vmatpush1.xpose.msra.mxu0 %v3109
  %3169 = vmatprep.subr.mxu0 0.0
  %3170 = vmatpush1.xpose.msra.mxu0 %v3110
  %3171 = vmatprep.subr.mxu0 0.0
  %3172 = vmatpush1.xpose.msra.mxu0 %v3111
  %3173 = vmatprep.subr.mxu0 0.0
  %3174 = vmatpush1.xpose.msra.mxu0 %v3112
  %3175 = vmatprep.subr.mxu0 0.0
  %3176 = vmatpush1.xpose.msra.mxu0 %v3113
  %3177 = vmatprep.subr.mxu0 0.0
  %3178 = vmatpush1.xpose.msra.mxu0 %v3114
  %3179 = vmatprep.subr.mxu0 0.0
  %3180 = vmatpush1.xpose.msra.mxu0 %v3115
  %3181 = vmatprep.subr.mxu0 0.0
  %3182 = vmatpush1.xpose.msra.mxu0 %v3116
  %3183 = vmatprep.subr.mxu0 0.0
  %3184 = vmatpush1.xpose.msra.mxu0 %v3117
  %3185 = vmatprep.subr.mxu0 0.0
  %3186 = vmatpush1.xpose.msra.mxu0 %v3118
  %3187 = vmatprep.subr.mxu0 0.0
  %3188 = vmatpush1.xpose.msra.mxu0 %v3119
  %3189 = vmatprep.mubr.f32.mxu0 0.0
  %3190 = vmatmul.mubr.f32.gmra.mrb[0].mxu0 %v3121
  %v3191 = vpop.f32.mrb[0].mxu0
  %v3192 = vadd.f32 0.0, %v3191
  %v3193 = vpop.f32.mrb[0].mxu0
  %v3194 = vadd.f32 0.0, %v3193
  %3195 = vmatprep.mubr.f32.mxu0 0.0
  %3196 = vmatmul.mubr.f32.gmra.mrb[0].mxu0 %v3122
  %v3197 = vpop.f32.mrb[0].mxu0
  %v3198 = vadd.f32 0.0, %v3197
  %v3199 = vpop.f32.mrb[0].mxu0
  %v3200 = vadd.f32 0.0, %v3199
  %3201 = vmatprep.mubr.f32.mxu0 0.0
  %3202 = vmatmul.mubr.f32.gmra.mrb[0].mxu0 %v3123
  %v3203 = vpop.f32.mrb[0].mxu0
  %v3204 = vadd.f32 0.0, %v3203
  %v3205 = vpop.f32.mrb[0].mxu0
  %v3206 = vadd.f32 0.0, %v3205
  %3207 = vmatprep.mubr.f32.mxu0 0.0
  %3208 = vmatmul.mubr.f32.gmra.mrb[0].mxu0 %v3124
  %v3209 = vpop.f32.mrb[0].mxu0
  %v3210 = vadd.f32 0.0, %v3209
  %v3211 = vpop.f32.mrb[0].mxu0
  %v3212 = vadd.f32 0.0, %v3211
  %3213 = vdwg.mxu0
  %v3214 = vadd.f32 %v3080, %v3192
  %v3215 = vadd.f32 %v3081, %v3194
  %v3216 = vadd.f32 %v3082, %v3198
  %v3217 = vadd.f32 %v3083, %v3200
  %v3218 = vadd.f32 %v3084, %v3204
  %v3219 = vadd.f32 %v3085, %v3206
  %v3220 = vadd.f32 %v3086, %v3210
  %v3221 = vadd.f32 %v3087, %v3212
  %v3222 = vld [vmem:[%s2684 + $0x2] sm:$0xff]
  %v3223 = vld [vmem:[%s2684 + $0xa] sm:$0xff]
  %v3224 = vld [vmem:[%s2684 + $0x1a] sm:$0xff]
  %v3225 = vld [vmem:[%s2684 + $0x22] sm:$0xff]
  %v3226 = vld [vmem:[%s2684 + $0x32] sm:$0xff]
  %v3227 = vld [vmem:[%s2684 + $0x3a] sm:$0xff]
  %v3228 = vld [vmem:[%s2684 + $0x4a] sm:$0xff]
  %v3229 = vld [vmem:[%s2684 + $0x52] sm:$0xff]
  %v3230 = vld [vmem:[%s2684 + $0x62] sm:$0xff]
  %v3231 = vld [vmem:[%s2684 + $0x6a] sm:$0xff]
  %v3232 = vld [vmem:[%s2684 + $0x7a] sm:$0xff]
  %v3233 = vld [vmem:[%s2684 + $0x82] sm:$0xff]
  %v3234 = vld [vmem:[%s2684 + $0x92] sm:$0xff]
  %v3235 = vld [vmem:[%s2684 + $0x9a] sm:$0xff]
  %v3236 = vld [vmem:[%s2684 + $0xaa] sm:$0xff]
  %v3237 = vld [vmem:[%s2684 + $0xb2] sm:$0xff]
  %v3238 = vld [vmem:[%s2684 + $0xc2] sm:$0xff]
  %v3239 = vld [vmem:[%s2684 + $0xca] sm:$0xff]
  %v3240 = vld [vmem:[%s2684 + $0xda] sm:$0xff]
  %v3241 = vld [vmem:[%s2684 + $0xe2] sm:$0xff]
  %v3242 = vld [vmem:[%s2684 + $0xf2] sm:$0xff]
  %v3243 = vld [vmem:[%s2684 + $0xfa] sm:$0xff]
  %v3244 = vld [vmem:[%s2684 + $0x10a] sm:$0xff]
  %v3245 = vld [vmem:[%s2684 + $0x112] sm:$0xff]
  %v3246 = vld [vmem:[%s2684 + $0x122] sm:$0xff]
  %v3247 = vld [vmem:[%s2684 + $0x12a] sm:$0xff]
  %v3248 = vld [vmem:[%s2684 + $0x13a] sm:$0xff]
  %v3249 = vld [vmem:[%s2684 + $0x142] sm:$0xff]
  %v3250 = vld [vmem:[%s2684 + $0x152] sm:$0xff]
  %v3251 = vld [vmem:[%s2684 + $0x15a] sm:$0xff]
  %v3252 = vld [vmem:[%s2684 + $0x16a] sm:$0xff]
  %v3253 = vld [vmem:[%s2684 + $0x172] sm:$0xff]
  %s3254 = scalar_lea.vmem %s1, 768
  %v3255 = vld [vmem:[%s3254] sm:$0xff]
  %v3256 = vld [vmem:[%s3254 + $0x8] sm:$0xff]
  %v3257 = vld [vmem:[%s3254 + $0x10] sm:$0xff]
  %v3258 = vld [vmem:[%s3254 + $0x18] sm:$0xff]
  %3259 = vmatprep.subr.mxu0 0.0
  %3260 = vmatpush1.xpose.msra.mxu0 %v3222
  %3261 = vmatprep.subr.mxu0 0.0
  %3262 = vmatpush1.xpose.msra.mxu0 %v3223
  %3263 = vmatprep.subr.mxu0 0.0
  %3264 = vmatpush1.xpose.msra.mxu0 %v3224
  %3265 = vmatprep.subr.mxu0 0.0
  %3266 = vmatpush1.xpose.msra.mxu0 %v3225
  %3267 = vmatprep.subr.mxu0 0.0
  %3268 = vmatpush1.xpose.msra.mxu0 %v3226
  %3269 = vmatprep.subr.mxu0 0.0
  %3270 = vmatpush1.xpose.msra.mxu0 %v3227
  %3271 = vmatprep.subr.mxu0 0.0
  %3272 = vmatpush1.xpose.msra.mxu0 %v3228
  %3273 = vmatprep.subr.mxu0 0.0
  %3274 = vmatpush1.xpose.msra.mxu0 %v3229
  %3275 = vmatprep.subr.mxu0 0.0
  %3276 = vmatpush1.xpose.msra.mxu0 %v3230
  %3277 = vmatprep.subr.mxu0 0.0
  %3278 = vmatpush1.xpose.msra.mxu0 %v3231
  %3279 = vmatprep.subr.mxu0 0.0
  %3280 = vmatpush1.xpose.msra.mxu0 %v3232
  %3281 = vmatprep.subr.mxu0 0.0
  %3282 = vmatpush1.xpose.msra.mxu0 %v3233
  %3283 = vmatprep.subr.mxu0 0.0
  %3284 = vmatpush1.xpose.msra.mxu0 %v3234
  %3285 = vmatprep.subr.mxu0 0.0
  %3286 = vmatpush1.xpose.msra.mxu0 %v3235
  %3287 = vmatprep.subr.mxu0 0.0
  %3288 = vmatpush1.xpose.msra.mxu0 %v3236
  %3289 = vmatprep.subr.mxu0 0.0
  %3290 = vmatpush1.xpose.msra.mxu0 %v3237
  %3291 = vmatprep.subr.mxu0 0.0
  %3292 = vmatpush1.xpose.msra.mxu0 %v3238
  %3293 = vmatprep.subr.mxu0 0.0
  %3294 = vmatpush1.xpose.msra.mxu0 %v3239
  %3295 = vmatprep.subr.mxu0 0.0
  %3296 = vmatpush1.xpose.msra.mxu0 %v3240
  %3297 = vmatprep.subr.mxu0 0.0
  %3298 = vmatpush1.xpose.msra.mxu0 %v3241
  %3299 = vmatprep.subr.mxu0 0.0
  %3300 = vmatpush1.xpose.msra.mxu0 %v3242
  %3301 = vmatprep.subr.mxu0 0.0
  %3302 = vmatpush1.xpose.msra.mxu0 %v3243
  %3303 = vmatprep.subr.mxu0 0.0
  %3304 = vmatpush1.xpose.msra.mxu0 %v3244
  %3305 = vmatprep.subr.mxu0 0.0
  %3306 = vmatpush1.xpose.msra.mxu0 %v3245
  %3307 = vmatprep.subr.mxu0 0.0
  %3308 = vmatpush1.xpose.msra.mxu0 %v3246
  %3309 = vmatprep.subr.mxu0 0.0
  %3310 = vmatpush1.xpose.msra.mxu0 %v3247
  %3311 = vmatprep.subr.mxu0 0.0
  %3312 = vmatpush1.xpose.msra.mxu0 %v3248
  %3313 = vmatprep.subr.mxu0 0.0
  %3314 = vmatpush1.xpose.msra.mxu0 %v3249
  %3315 = vmatprep.subr.mxu0 0.0
  %3316 = vmatpush1.xpose.msra.mxu0 %v3250
  %3317 = vmatprep.subr.mxu0 0.0
  %3318 = vmatpush1.xpose.msra.mxu0 %v3251
  %3319 = vmatprep.subr.mxu0 0.0
  %3320 = vmatpush1.xpose.msra.mxu0 %v3252
  %3321 = vmatprep.subr.mxu0 0.0
  %3322 = vmatpush1.xpose.msra.mxu0 %v3253
  %3323 = vmatprep.mubr.f32.mxu0 0.0
  %3324 = vmatmul.mubr.f32.gmra.mrb[0].mxu0 %v3255
  %v3325 = vpop.f32.mrb[0].mxu0
  %v3326 = vadd.f32 0.0, %v3325
  %v3327 = vpop.f32.mrb[0].mxu0
  %v3328 = vadd.f32 0.0, %v3327
  %3329 = vmatprep.mubr.f32.mxu0 0.0
  %3330 = vmatmul.mubr.f32.gmra.mrb[0].mxu0 %v3256
  %v3331 = vpop.f32.mrb[0].mxu0
  %v3332 = vadd.f32 0.0, %v3331
  %v3333 = vpop.f32.mrb[0].mxu0
  %v3334 = vadd.f32 0.0, %v3333
  %3335 = vmatprep.mubr.f32.mxu0 0.0
  %3336 = vmatmul.mubr.f32.gmra.mrb[0].mxu0 %v3257
  %v3337 = vpop.f32.mrb[0].mxu0
  %v3338 = vadd.f32 0.0, %v3337
  %v3339 = vpop.f32.mrb[0].mxu0
  %v3340 = vadd.f32 0.0, %v3339
  %3341 = vmatprep.mubr.f32.mxu0 0.0
  %3342 = vmatmul.mubr.f32.gmra.mrb[0].mxu0 %v3258
  %v3343 = vpop.f32.mrb[0].mxu0
  %v3344 = vadd.f32 0.0, %v3343
  %v3345 = vpop.f32.mrb[0].mxu0
  %v3346 = vadd.f32 0.0, %v3345
  %3347 = vdwg.mxu0
  %v3348 = vadd.f32 %v3214, %v3326
  %v3349 = vadd.f32 %v3215, %v3328
  %v3350 = vadd.f32 %v3216, %v3332
  %v3351 = vadd.f32 %v3217, %v3334
  %v3352 = vadd.f32 %v3218, %v3338
  %v3353 = vadd.f32 %v3219, %v3340
  %v3354 = vadd.f32 %v3220, %v3344
  %v3355 = vadd.f32 %v3221, %v3346
  %v3356 = vld [vmem:[%s2] sm:$0xff]
  %v3357 = vld [vmem:[%s2 + $0x8] sm:$0xff]
  %v3358 = vld [vmem:[%s2 + $0x10] sm:$0xff]
  %v3359 = vld [vmem:[%s2 + $0x18] sm:$0xff]
  %3361 = vset.pattern.permute.xlu0 0
  %3362 = vperm.xlu0 %3361, %v3356
  %v3363 = vpop.permute.xlu0 %3362
  %3366 = vset.pattern.permute.xlu0 0
  %3367 = vperm.xlu0 %3366, %v3357
  %v3368 = vpop.permute.xlu0 %3367
  %3371 = vset.pattern.permute.xlu0 0
  %3372 = vperm.xlu0 %3371, %v3358
  %v3373 = vpop.permute.xlu0 %3372
  %3376 = vset.pattern.permute.xlu0 0
  %3377 = vperm.xlu0 %3376, %v3359
  %v3378 = vpop.permute.xlu0 %3377
  %v3380 = vadd.f32 %v3348, %v3363
  %v3381 = vadd.f32 %v3349, %v3363
  %v3382 = vadd.f32 %v3350, %v3368
  %v3383 = vadd.f32 %v3351, %v3368
  %v3384 = vadd.f32 %v3352, %v3373
  %v3385 = vadd.f32 %v3353, %v3373
  %v3386 = vadd.f32 %v3354, %v3378
  %v3387 = vadd.f32 %v3355, %v3378
  %v3388 = vadd.f32 %v3380, 3.0
  %v3389 = vadd.f32 %v3381, 3.0
  %v3390 = vadd.f32 %v3382, 3.0
  %v3391 = vadd.f32 %v3383, 3.0
  %v3392 = vadd.f32 %v3384, 3.0
  %v3393 = vadd.f32 %v3385, 3.0
  %v3394 = vadd.f32 %v3386, 3.0
  %v3395 = vadd.f32 %v3387, 3.0
  %3396 = vst [vmem:[%s3] sm:$0xff] %v3388
  %3397 = vst [vmem:[%s3 + $0x8] sm:$0xff] %v3389
  %3398 = vst [vmem:[%s3 + $0x10] sm:$0xff] %v3390
  %3399 = vst [vmem:[%s3 + $0x18] sm:$0xff] %v3391
  %3400 = vst [vmem:[%s3 + $0x20] sm:$0xff] %v3392
  %3401 = vst [vmem:[%s3 + $0x28] sm:$0xff] %v3393
  %3402 = vst [vmem:[%s3 + $0x30] sm:$0xff] %v3394
  %3403 = vst [vmem:[%s3 + $0x38] sm:$0xff] %v3395
  // Predicated region
  $region14: #{conv2d_plus.1} parent=0 // pred_check
    _
  $region15: #{conv2d_plus.1} parent=0 // pred_check_branch
    %3405 = sbr.rel (0) target = $region17
  $region16: #{conv2d_plus.1} parent=0 // pred_region
    _
  $region17: #{conv2d_plus.1} parent=0 // pred_fallthru
    _
  // Predicated region
  $region18: #{conv2d_plus.1} parent=0 // pred_check
    _
  $region19: #{conv2d_plus.1} parent=0 // pred_check_branch
    %3407 = sbr.rel (0) target = $region21
  $region20: #{conv2d_plus.1} parent=0 // pred_region
    _
  $region21: #{conv2d_plus.1} parent=0 // pred_fallthru
    _

</llo_original>
